<compile_context>
chip_gen: v6e
topology: v6e:2x2x1
jax: 0.10.0
libtpu: 0.0.40
codegen_flags: <defaults>
</compile_context>

<pallas_src>
import functools

import jax
import jax.numpy as jnp
from jax.experimental import pallas as pl
from jax.experimental.pallas import tpu as pltpu

EPS = 1e-5
LEAKY_SLOPE = 0.01  # InPlaceABN default activation: leaky_relu(0.01)


def _conv_tile(x_ref, w_ref, *, tile_h, width):
    """3x3 / stride-1 / pad-1 conv for one (image, H-tile): one MXU dot, K=9*Cin.

    x_ref : (1, H+2, W+2, Cin) bf16  whole padded image for this n (VMEM resident)
    w_ref : (CoutP, 9*Cin)     bf16  tap-major / channel-minor, Cout zero-padded
    returns f32 [CoutP, tile_h*width]
    """
    cin = x_ref.shape[3]
    m = tile_h * width
    row0 = pl.multiple_of(pl.program_id(1) * tile_h, tile_h)

    cols = []
    for kh in range(3):
        # Halo-inclusive row slab for this tap row; H is a major (untiled) dim so
        # the dynamic offset is pure address math.  Stays bf16 end-to-end.
        slab = x_ref[0, pl.ds(row0 + kh, tile_h), :, :]          # [th, W+2, Cin]
        for kw in range(3):
            # Static 2-column window + flatten; the lane (Cin) dim is untouched,
            # so the reshape is a cheap regrouping rather than a full relayout.
            cols.append(slab[:, kw:kw + width, :].reshape(m, cin))
    xcol = jnp.concatenate(cols, axis=-1)                        # [m, 9*Cin] bf16

    # Single big-K dot contracting the last dim of both operands -> [CoutP, m].
    return jax.lax.dot_general(
        w_ref[...], xcol, (((1,), (1,)), ((), ())),
        preferred_element_type=jnp.float32)


def _conv_stats_kernel(x_ref, w_ref, stats_ref, *, tile_h, width):
    # Pass 1: conv + mean-shifted per-tile partial statistics:
    #   s = sum_m(y),  q = sum_m((y - s/m)^2)   (combined with Chan's formula).
    y = _conv_tile(x_ref, w_ref, tile_h=tile_h, width=width)     # [CoutP, m] f32
    m = tile_h * width
    s = jnp.sum(y, axis=1, keepdims=True)                        # [CoutP, 1]
    d = y - s * (1.0 / m)
    q = jnp.sum(d * d, axis=1, keepdims=True)                    # [CoutP, 1]
    stats_ref[...] = jnp.concatenate([s, q], axis=1)[None, None]  # (1,1,CoutP,2)


def _conv_norm_kernel(x_ref, w_ref, scale_ref, shift_ref, out_ref, *,
                      tile_h, width, cout):
    # Pass 2: conv recomputed + folded BN (y*scale + shift) + leaky_relu(0.01);
    # accumulator is already [CoutP, m] -> lane-dense NCHW store, no transpose.
    y = _conv_tile(x_ref, w_ref, tile_h=tile_h, width=width)     # [CoutP, m] f32
    yn = y * scale_ref[...] + shift_ref[...]                     # (CoutP,1) bcast
    yn = jnp.where(yn >= 0, yn, LEAKY_SLOPE * yn)
    out_ref[...] = yn[:cout, :].astype(out_ref.dtype)[None]


def _pick_tile_h(H, W, cap=2048):
    """Largest H-tile whose flattened size tile_h*W is a lane-dense multiple of
    128 and <= cap elements; prefer a tile that actually splits H.  Fallback is
    the whole image (block == full extent -> always a legal BlockSpec)."""
    cands = [th for th in range(1, H + 1)
             if H % th == 0 and (th * W) % 128 == 0 and th * W <= cap]
    multi = [th for th in cands if th < H]
    if multi:
        return max(multi)
    if cands:
        return max(cands)
    # TODO(synk): add a W-tiling path for very large W (this whole-image
    # fallback costs O(H*W) VMEM per step).
    return H


def _vmem_limit_bytes():
    # v5e/v6e: 128 MiB physical VMEM -> raise scoped limit to 64 MiB (bigger
    # tiles / deeper buffering); v7x: 64 MiB physical -> stay around 38 MiB.
    try:
        cap = int(pltpu.get_tpu_info().vmem_capacity_bytes)
    except Exception:
        return 48 * 1024 * 1024
    return int(min(64 * 1024 * 1024, max(32 * 1024 * 1024, cap * 6 // 10)))


@jax.jit
def conv_bn_relu(x_nchw, weight, gamma, beta):
    """x: [N,Cin,H,W] f32; weight: [Cout,Cin,3,3]; gamma/beta: [Cout] -> [N,Cout,H,W]."""
    N, Cin, H, W = x_nchw.shape
    Cout, Cin_w, KH, KW = weight.shape
    assert (KH, KW) == (3, 3) and Cin_w == Cin

    coutp = ((Cout + 127) // 128) * 128
    tile_h = _pick_tile_h(H, W)
    n_h = H // tile_h
    m_tile = tile_h * W
    m_total = N * H * W

    # Channels-last + spatial zero pad (stride 1, pad 1); bf16 halves input DMA.
    xp = jnp.transpose(x_nchw, (0, 2, 3, 1))
    xp = jnp.pad(xp, ((0, 0), (1, 1), (1, 1), (0, 0))).astype(jnp.bfloat16)

    # weight [Cout,Cin,3,3] -> [CoutP, 9*Cin], tap-major / channel-minor K so a
    # single dot contracts all 9 taps at once.
    w_r = jnp.transpose(weight, (0, 2, 3, 1)).reshape(Cout, 9 * Cin)
    w_r = jnp.pad(w_r, ((0, coutp - Cout), (0, 0))).astype(jnp.bfloat16)

    grid = (N, n_h)
    # Whole padded image per n; its block index is constant across the h axis so
    # it is fetched once per image.
    # TODO(synk): for large feature maps (esp. v7x's 64 MiB VMEM) switch to
    # halo-overlapped (tile_h+2)-row blocks and mark the constant-index inputs
    # (weights / scale / shift) single-buffered via pipeline_mode=pl.Buffered(1).
    x_spec = pl.BlockSpec((1, H + 2, W + 2, Cin), lambda n, h: (n, 0, 0, 0))
    w_spec = pl.BlockSpec((coutp, 9 * Cin), lambda n, h: (0, 0))
    cparams = pltpu.CompilerParams(
        dimension_semantics=("parallel", "parallel"),  # independent tiles
        vmem_limit_bytes=_vmem_limit_bytes(),
    )

    # ---- pass 1: conv + mean-shifted per-tile channel statistics ----
    stats = pl.pallas_call(
        functools.partial(_conv_stats_kernel, tile_h=tile_h, width=W),
        out_shape=jax.ShapeDtypeStruct((N, n_h, coutp, 2), jnp.float32),
        grid=grid,
        in_specs=[x_spec, w_spec],
        out_specs=pl.BlockSpec((1, 1, coutp, 2), lambda n, h: (n, h, 0, 0)),
        compiler_params=cparams,
    )(xp, w_r)

    # ---- tiny [Cout]-sized combine (Chan) + BN fold into (scale, shift) ----
    s = stats[..., 0]                                     # (N, n_h, CoutP)
    q = stats[..., 1]
    mean = jnp.sum(s, axis=(0, 1)) / m_total
    mu_t = s / m_tile
    var = (jnp.sum(q, axis=(0, 1))
           + m_tile * jnp.sum((mu_t - mean) ** 2, axis=(0, 1))) / m_total
    var = jnp.maximum(var, 0.0)                           # biased batch variance
    inv = jax.lax.rsqrt(var + EPS)
    gamma_p = jnp.pad(gamma.astype(jnp.float32), (0, coutp - Cout))
    beta_p = jnp.pad(beta.astype(jnp.float32), (0, coutp - Cout))
    scale = (gamma_p * inv).reshape(coutp, 1)
    shift = (beta_p - mean * gamma_p * inv).reshape(coutp, 1)

    # ---- pass 2: conv recomputed + normalize + leaky_relu, lane-dense NCHW ----
    # TODO(synk): on v7x (3.2 TB/s HBM) writing y in bf16 from pass 1 and making
    # pass 2 a pure elementwise kernel may beat recomputing the conv.
    out = pl.pallas_call(
        functools.partial(_conv_norm_kernel, tile_h=tile_h, width=W, cout=Cout),
        out_shape=jax.ShapeDtypeStruct((N, Cout, H * W), jnp.float32),
        grid=grid,
        in_specs=[
            x_spec,
            w_spec,
            pl.BlockSpec((coutp, 1), lambda n, h: (0, 0)),
            pl.BlockSpec((coutp, 1), lambda n, h: (0, 0)),
        ],
        out_specs=pl.BlockSpec((1, Cout, m_tile), lambda n, h: (n, 0, h)),
        compiler_params=cparams,
    )(xp, w_r, scale, shift)

    # TODO(synk): InPlaceABN running_mean/running_var buffer updates are not
    # materialized (forward uses batch statistics, i.e. training-mode behaviour).
    return out.reshape(N, Cout, H, W)


def _reference(x_nchw, weight, gamma, beta):
    # Pure-JAX reference: conv2d + batch-stat BN + leaky_relu(0.01), all f32.
    y = jax.lax.conv_general_dilated(
        x_nchw, weight, window_strides=(1, 1), padding=((1, 1), (1, 1)),
        dimension_numbers=("NCHW", "OIHW", "NCHW"))
    mean = jnp.mean(y, axis=(0, 2, 3), keepdims=True)
    var = jnp.mean((y - mean) ** 2, axis=(0, 2, 3), keepdims=True)
    yn = (y - mean) * jax.lax.rsqrt(var + EPS)
    yn = yn * gamma.reshape(1, -1, 1, 1) + beta.reshape(1, -1, 1, 1)
    return jnp.where(yn >= 0, yn, LEAKY_SLOPE * yn)


if __name__ == "__main__":
    # Small shapes consistent with ConvBnReLU(in_channels=4, out_channels=8).
    N, Cin, Cout, H, W = 2, 4, 8, 16, 16

    key = jax.random.PRNGKey(0)
    kx, kw_, kg, kb = jax.random.split(key, 4)
    x = jax.random.normal(kx, (N, Cin, H, W), dtype=jnp.float32)
    weight = jax.random.normal(kw_, (Cout, Cin, 3, 3), dtype=jnp.float32) * 0.1
    gamma = 1.0 + 0.1 * jax.random.normal(kg, (Cout,), dtype=jnp.float32)
    beta = 0.1 * jax.random.normal(kb, (Cout,), dtype=jnp.float32)

    out = conv_bn_relu(x, weight, gamma, beta)
    out = jax.block_until_ready(out)

    ref = _reference(x, weight, gamma, beta)
    assert out.shape == (N, Cout, H, W)
    max_err = jnp.max(jnp.abs(out - ref))
    # bf16 MXU operands (f32 accumulate) -> relaxed tolerance vs the f32 reference.
    assert jnp.allclose(out, ref, rtol=5e-2, atol=5e-2), (
        f"mismatch vs reference (max abs err = {max_err})")

    print("KERNEL_OK")
</pallas_src>

<mosaic_0001>
module attributes {stable_mosaic.version = 11 : i64} {
  func.func @_conv_stats_kernel(%arg0: i32, %arg1: i32, %arg2: memref<1x18x18x4xbf16, #tpu.memory_space<vmem>>, %arg3: memref<128x36xbf16, #tpu.memory_space<vmem>>, %arg4: memref<1x1x128x2xf32, #tpu.memory_space<vmem>>) attributes {dimension_semantics = [#tpu.dimension_semantics<parallel>, #tpu.dimension_semantics<parallel>], iteration_bounds = array<i64: 2, 2>, scalar_prefetch = 0 : i64, scratch_operands = 0 : i64, tpu.core_type = #tpu.core_type<tc>, window_params = [{transform_indices = @transform_0, window_bounds = array<i64: 1, 18, 18, 4>}, {pipeline_mode = #tpu.pipeline_mode<synchronous>, transform_indices = @transform_1, window_bounds = array<i64: 128, 36>}, {transform_indices = @transform_2, window_bounds = array<i64: 1, 1, 128, 2>}]} {
    %c8_i32 = arith.constant 8 : i32
    %0 = arith.muli %arg1, %c8_i32 : i32
    %1 = tpu.assume_multiple %0, 8 : i32
    %c0_i32 = arith.constant 0 : i32
    %2 = arith.addi %1, %c0_i32 : i32
    %c0 = arith.constant 0 : index
    %3 = arith.index_cast %2 : i32 to index
    %c0_0 = arith.constant 0 : index
    %c0_1 = arith.constant 0 : index
    %4 = vector.load %arg2[%c0, %3, %c0_0, %c0_1] : memref<1x18x18x4xbf16, #tpu.memory_space<vmem>>, vector<1x8x18x4xbf16>
    %5 = vector.shape_cast %4 : vector<1x8x18x4xbf16> to vector<8x18x4xbf16>
    %6 = vector.extract_strided_slice %5 {offsets = [0, 0, 0], sizes = [8, 16, 4], strides = [1, 1, 1]} : vector<8x18x4xbf16> to vector<8x16x4xbf16>
    %7 = vector.shape_cast %6 : vector<8x16x4xbf16> to vector<128x4xbf16>
    %8 = vector.extract_strided_slice %5 {offsets = [0, 1, 0], sizes = [8, 16, 4], strides = [1, 1, 1]} : vector<8x18x4xbf16> to vector<8x16x4xbf16>
    %9 = vector.shape_cast %8 : vector<8x16x4xbf16> to vector<128x4xbf16>
    %10 = vector.extract_strided_slice %5 {offsets = [0, 2, 0], sizes = [8, 16, 4], strides = [1, 1, 1]} : vector<8x18x4xbf16> to vector<8x16x4xbf16>
    %11 = vector.shape_cast %10 : vector<8x16x4xbf16> to vector<128x4xbf16>
    %c1_i32 = arith.constant 1 : i32
    %12 = arith.addi %1, %c1_i32 : i32
    %c0_2 = arith.constant 0 : index
    %13 = arith.index_cast %12 : i32 to index
    %c0_3 = arith.constant 0 : index
    %c0_4 = arith.constant 0 : index
    %14 = vector.load %arg2[%c0_2, %13, %c0_3, %c0_4] : memref<1x18x18x4xbf16, #tpu.memory_space<vmem>>, vector<1x8x18x4xbf16>
    %15 = vector.shape_cast %14 : vector<1x8x18x4xbf16> to vector<8x18x4xbf16>
    %16 = vector.extract_strided_slice %15 {offsets = [0, 0, 0], sizes = [8, 16, 4], strides = [1, 1, 1]} : vector<8x18x4xbf16> to vector<8x16x4xbf16>
    %17 = vector.shape_cast %16 : vector<8x16x4xbf16> to vector<128x4xbf16>
    %18 = vector.extract_strided_slice %15 {offsets = [0, 1, 0], sizes = [8, 16, 4], strides = [1, 1, 1]} : vector<8x18x4xbf16> to vector<8x16x4xbf16>
    %19 = vector.shape_cast %18 : vector<8x16x4xbf16> to vector<128x4xbf16>
    %20 = vector.extract_strided_slice %15 {offsets = [0, 2, 0], sizes = [8, 16, 4], strides = [1, 1, 1]} : vector<8x18x4xbf16> to vector<8x16x4xbf16>
    %21 = vector.shape_cast %20 : vector<8x16x4xbf16> to vector<128x4xbf16>
    %c2_i32 = arith.constant 2 : i32
    %22 = arith.addi %1, %c2_i32 : i32
    %c0_5 = arith.constant 0 : index
    %23 = arith.index_cast %22 : i32 to index
    %c0_6 = arith.constant 0 : index
    %c0_7 = arith.constant 0 : index
    %24 = vector.load %arg2[%c0_5, %23, %c0_6, %c0_7] : memref<1x18x18x4xbf16, #tpu.memory_space<vmem>>, vector<1x8x18x4xbf16>
    %25 = vector.shape_cast %24 : vector<1x8x18x4xbf16> to vector<8x18x4xbf16>
    %26 = vector.extract_strided_slice %25 {offsets = [0, 0, 0], sizes = [8, 16, 4], strides = [1, 1, 1]} : vector<8x18x4xbf16> to vector<8x16x4xbf16>
    %27 = vector.shape_cast %26 : vector<8x16x4xbf16> to vector<128x4xbf16>
    %28 = vector.extract_strided_slice %25 {offsets = [0, 1, 0], sizes = [8, 16, 4], strides = [1, 1, 1]} : vector<8x18x4xbf16> to vector<8x16x4xbf16>
    %29 = vector.shape_cast %28 : vector<8x16x4xbf16> to vector<128x4xbf16>
    %30 = vector.extract_strided_slice %25 {offsets = [0, 2, 0], sizes = [8, 16, 4], strides = [1, 1, 1]} : vector<8x18x4xbf16> to vector<8x16x4xbf16>
    %31 = vector.shape_cast %30 : vector<8x16x4xbf16> to vector<128x4xbf16>
    %32 = tpu.concatenate %7, %9, %11, %17, %19, %21, %27, %29, %31 in 1 : vector<128x4xbf16>, vector<128x4xbf16>, vector<128x4xbf16>, vector<128x4xbf16>, vector<128x4xbf16>, vector<128x4xbf16>, vector<128x4xbf16>, vector<128x4xbf16>, vector<128x4xbf16> -> vector<128x36xbf16>
    %c0_8 = arith.constant 0 : index
    %c0_9 = arith.constant 0 : index
    %33 = vector.load %arg3[%c0_8, %c0_9] : memref<128x36xbf16, #tpu.memory_space<vmem>>, vector<128x36xbf16>
    %cst = arith.constant dense<0.000000e+00> : vector<128x128xf32>
    %34 = tpu.matmul %33, %32, %cst {dimension_numbers = #tpu.dot_dimension_numbers<[1], [1], [0], [0], [0, 0, 1, 0], [], []>} : vector<128x36xbf16>, vector<128x36xbf16>, vector<128x128xf32> -> vector<128x128xf32>
    %cst_10 = arith.constant dense<0.000000e+00> : vector<128xf32>
    %35 = vector.multi_reduction <add>, %34, %cst_10 [1] : vector<128x128xf32> to vector<128xf32>
    %36 = vector.shape_cast %35 : vector<128xf32> to vector<128x1xf32>
    %cst_11 = arith.constant 7.812500e-03 : f32
    %37 = vector.broadcast %cst_11 : f32 to vector<128x1xf32>
    %38 = arith.mulf %36, %37 : vector<128x1xf32>
    %39 = vector.broadcast %38 : vector<128x1xf32> to vector<128x128xf32>
    %40 = arith.subf %34, %39 : vector<128x128xf32>
    %41 = arith.mulf %40, %40 : vector<128x128xf32>
    %cst_12 = arith.constant dense<0.000000e+00> : vector<128xf32>
    %42 = vector.multi_reduction <add>, %41, %cst_12 [1] : vector<128x128xf32> to vector<128xf32>
    %43 = vector.shape_cast %42 : vector<128xf32> to vector<128x1xf32>
    %44 = tpu.concatenate %36, %43 in 1 : vector<128x1xf32>, vector<128x1xf32> -> vector<128x2xf32>
    %45 = vector.shape_cast %44 : vector<128x2xf32> to vector<1x1x128x2xf32>
    %c0_13 = arith.constant 0 : index
    %c0_14 = arith.constant 0 : index
    %c0_15 = arith.constant 0 : index
    %c0_16 = arith.constant 0 : index
    %46 = vector.load %arg4[%c0_13, %c0_14, %c0_15, %c0_16] : memref<1x1x128x2xf32, #tpu.memory_space<vmem>>, vector<1x1x128x2xf32>
    tpu.vector_store %arg4[%c0_13, %c0_14, %c0_15, %c0_16], %45 {strides = array<i32>} : memref<1x1x128x2xf32, #tpu.memory_space<vmem>>, vector<1x1x128x2xf32>,
    return
  }
  func.func @transform_0(%arg0: i32, %arg1: i32) -> (i32, i32, i32, i32) {
    %c0_i32 = arith.constant 0 : i32
    %c0_i32_0 = arith.constant 0 : i32
    %c0_i32_1 = arith.constant 0 : i32
    %c0_i32_2 = arith.constant 0 : i32
    return %arg0, %c0_i32, %c0_i32_0, %c0_i32_1 : i32, i32, i32, i32
  }
  func.func @transform_1(%arg0: i32, %arg1: i32) -> (i32, i32) {
    %c0_i32 = arith.constant 0 : i32
    %c0_i32_0 = arith.constant 0 : i32
    %c0_i32_1 = arith.constant 0 : i32
    return %c0_i32, %c0_i32_0 : i32, i32
  }
  func.func @transform_2(%arg0: i32, %arg1: i32) -> (i32, i32, i32, i32) {
    %c0_i32 = arith.constant 0 : i32
    %c0_i32_0 = arith.constant 0 : i32
    %c0_i32_1 = arith.constant 0 : i32
    return %arg0, %arg1, %c0_i32, %c0_i32_0 : i32, i32, i32, i32
  }
}

module attributes {stable_mosaic.version = 11 : i64} {
  func.func @_conv_norm_kernel(%arg0: i32, %arg1: i32, %arg2: memref<1x18x18x4xbf16, #tpu.memory_space<vmem>>, %arg3: memref<128x36xbf16, #tpu.memory_space<vmem>>, %arg4: memref<128x1xf32, #tpu.memory_space<vmem>>, %arg5: memref<128x1xf32, #tpu.memory_space<vmem>>, %arg6: memref<1x8x128xf32, #tpu.memory_space<vmem>>) attributes {dimension_semantics = [#tpu.dimension_semantics<parallel>, #tpu.dimension_semantics<parallel>], iteration_bounds = array<i64: 2, 2>, scalar_prefetch = 0 : i64, scratch_operands = 0 : i64, tpu.core_type = #tpu.core_type<tc>, window_params = [{transform_indices = @transform_0, window_bounds = array<i64: 1, 18, 18, 4>}, {pipeline_mode = #tpu.pipeline_mode<synchronous>, transform_indices = @transform_1, window_bounds = array<i64: 128, 36>}, {pipeline_mode = #tpu.pipeline_mode<synchronous>, transform_indices = @transform_2, window_bounds = array<i64: 128, 1>}, {pipeline_mode = #tpu.pipeline_mode<synchronous>, transform_indices = @transform_3, window_bounds = array<i64: 128, 1>}, {transform_indices = @transform_4, window_bounds = array<i64: 1, 8, 128>}]} {
    %c8_i32 = arith.constant 8 : i32
    %0 = arith.muli %arg1, %c8_i32 : i32
    %1 = tpu.assume_multiple %0, 8 : i32
    %c0_i32 = arith.constant 0 : i32
    %2 = arith.addi %1, %c0_i32 : i32
    %c0 = arith.constant 0 : index
    %3 = arith.index_cast %2 : i32 to index
    %c0_0 = arith.constant 0 : index
    %c0_1 = arith.constant 0 : index
    %4 = vector.load %arg2[%c0, %3, %c0_0, %c0_1] : memref<1x18x18x4xbf16, #tpu.memory_space<vmem>>, vector<1x8x18x4xbf16>
    %5 = vector.shape_cast %4 : vector<1x8x18x4xbf16> to vector<8x18x4xbf16>
    %6 = vector.extract_strided_slice %5 {offsets = [0, 0, 0], sizes = [8, 16, 4], strides = [1, 1, 1]} : vector<8x18x4xbf16> to vector<8x16x4xbf16>
    %7 = vector.shape_cast %6 : vector<8x16x4xbf16> to vector<128x4xbf16>
    %8 = vector.extract_strided_slice %5 {offsets = [0, 1, 0], sizes = [8, 16, 4], strides = [1, 1, 1]} : vector<8x18x4xbf16> to vector<8x16x4xbf16>
    %9 = vector.shape_cast %8 : vector<8x16x4xbf16> to vector<128x4xbf16>
    %10 = vector.extract_strided_slice %5 {offsets = [0, 2, 0], sizes = [8, 16, 4], strides = [1, 1, 1]} : vector<8x18x4xbf16> to vector<8x16x4xbf16>
    %11 = vector.shape_cast %10 : vector<8x16x4xbf16> to vector<128x4xbf16>
    %c1_i32 = arith.constant 1 : i32
    %12 = arith.addi %1, %c1_i32 : i32
    %c0_2 = arith.constant 0 : index
    %13 = arith.index_cast %12 : i32 to index
    %c0_3 = arith.constant 0 : index
    %c0_4 = arith.constant 0 : index
    %14 = vector.load %arg2[%c0_2, %13, %c0_3, %c0_4] : memref<1x18x18x4xbf16, #tpu.memory_space<vmem>>, vector<1x8x18x4xbf16>
    %15 = vector.shape_cast %14 : vector<1x8x18x4xbf16> to vector<8x18x4xbf16>
    %16 = vector.extract_strided_slice %15 {offsets = [0, 0, 0], sizes = [8, 16, 4], strides = [1, 1, 1]} : vector<8x18x4xbf16> to vector<8x16x4xbf16>
    %17 = vector.shape_cast %16 : vector<8x16x4xbf16> to vector<128x4xbf16>
    %18 = vector.extract_strided_slice %15 {offsets = [0, 1, 0], sizes = [8, 16, 4], strides = [1, 1, 1]} : vector<8x18x4xbf16> to vector<8x16x4xbf16>
    %19 = vector.shape_cast %18 : vector<8x16x4xbf16> to vector<128x4xbf16>
    %20 = vector.extract_strided_slice %15 {offsets = [0, 2, 0], sizes = [8, 16, 4], strides = [1, 1, 1]} : vector<8x18x4xbf16> to vector<8x16x4xbf16>
    %21 = vector.shape_cast %20 : vector<8x16x4xbf16> to vector<128x4xbf16>
    %c2_i32 = arith.constant 2 : i32
    %22 = arith.addi %1, %c2_i32 : i32
    %c0_5 = arith.constant 0 : index
    %23 = arith.index_cast %22 : i32 to index
    %c0_6 = arith.constant 0 : index
    %c0_7 = arith.constant 0 : index
    %24 = vector.load %arg2[%c0_5, %23, %c0_6, %c0_7] : memref<1x18x18x4xbf16, #tpu.memory_space<vmem>>, vector<1x8x18x4xbf16>
    %25 = vector.shape_cast %24 : vector<1x8x18x4xbf16> to vector<8x18x4xbf16>
    %26 = vector.extract_strided_slice %25 {offsets = [0, 0, 0], sizes = [8, 16, 4], strides = [1, 1, 1]} : vector<8x18x4xbf16> to vector<8x16x4xbf16>
    %27 = vector.shape_cast %26 : vector<8x16x4xbf16> to vector<128x4xbf16>
    %28 = vector.extract_strided_slice %25 {offsets = [0, 1, 0], sizes = [8, 16, 4], strides = [1, 1, 1]} : vector<8x18x4xbf16> to vector<8x16x4xbf16>
    %29 = vector.shape_cast %28 : vector<8x16x4xbf16> to vector<128x4xbf16>
    %30 = vector.extract_strided_slice %25 {offsets = [0, 2, 0], sizes = [8, 16, 4], strides = [1, 1, 1]} : vector<8x18x4xbf16> to vector<8x16x4xbf16>
    %31 = vector.shape_cast %30 : vector<8x16x4xbf16> to vector<128x4xbf16>
    %32 = tpu.concatenate %7, %9, %11, %17, %19, %21, %27, %29, %31 in 1 : vector<128x4xbf16>, vector<128x4xbf16>, vector<128x4xbf16>, vector<128x4xbf16>, vector<128x4xbf16>, vector<128x4xbf16>, vector<128x4xbf16>, vector<128x4xbf16>, vector<128x4xbf16> -> vector<128x36xbf16>
    %c0_8 = arith.constant 0 : index
    %c0_9 = arith.constant 0 : index
    %33 = vector.load %arg3[%c0_8, %c0_9] : memref<128x36xbf16, #tpu.memory_space<vmem>>, vector<128x36xbf16>
    %cst = arith.constant dense<0.000000e+00> : vector<128x128xf32>
    %34 = tpu.matmul %33, %32, %cst {dimension_numbers = #tpu.dot_dimension_numbers<[1], [1], [0], [0], [0, 0, 1, 0], [], []>} : vector<128x36xbf16>, vector<128x36xbf16>, vector<128x128xf32> -> vector<128x128xf32>
    %c0_10 = arith.constant 0 : index
    %c0_11 = arith.constant 0 : index
    %35 = vector.load %arg4[%c0_10, %c0_11] : memref<128x1xf32, #tpu.memory_space<vmem>>, vector<128x1xf32>
    %36 = vector.broadcast %35 : vector<128x1xf32> to vector<128x128xf32>
    %37 = arith.mulf %34, %36 : vector<128x128xf32>
    %c0_12 = arith.constant 0 : index
    %c0_13 = arith.constant 0 : index
    %38 = vector.load %arg5[%c0_12, %c0_13] : memref<128x1xf32, #tpu.memory_space<vmem>>, vector<128x1xf32>
    %39 = vector.broadcast %38 : vector<128x1xf32> to vector<128x128xf32>
    %40 = arith.addf %37, %39 : vector<128x128xf32>
    %cst_14 = arith.constant 0.000000e+00 : f32
    %41 = vector.broadcast %cst_14 : f32 to vector<128x128xf32>
    %42 = arith.cmpf oge, %40, %41 : vector<128x128xf32>
    %cst_15 = arith.constant 0.00999999977 : f32
    %43 = vector.broadcast %cst_15 : f32 to vector<128x128xf32>
    %44 = arith.mulf %43, %40 : vector<128x128xf32>
    %45 = arith.select %42, %40, %44 : vector<128x128xi1>, vector<128x128xf32>
    %46 = vector.extract_strided_slice %45 {offsets = [0, 0], sizes = [8, 128], strides = [1, 1]} : vector<128x128xf32> to vector<8x128xf32>
    %47 = vector.shape_cast %46 : vector<8x128xf32> to vector<1x8x128xf32>
    %c0_16 = arith.constant 0 : index
    %c0_17 = arith.constant 0 : index
    %c0_18 = arith.constant 0 : index
    %48 = vector.load %arg6[%c0_16, %c0_17, %c0_18] : memref<1x8x128xf32, #tpu.memory_space<vmem>>, vector<1x8x128xf32>
    tpu.vector_store %arg6[%c0_16, %c0_17, %c0_18], %47 {strides = array<i32>} : memref<1x8x128xf32, #tpu.memory_space<vmem>>, vector<1x8x128xf32>,
    return
  }
  func.func @transform_0(%arg0: i32, %arg1: i32) -> (i32, i32, i32, i32) {
    %c0_i32 = arith.constant 0 : i32
    %c0_i32_0 = arith.constant 0 : i32
    %c0_i32_1 = arith.constant 0 : i32
    %c0_i32_2 = arith.constant 0 : i32
    return %arg0, %c0_i32, %c0_i32_0, %c0_i32_1 : i32, i32, i32, i32
  }
  func.func @transform_1(%arg0: i32, %arg1: i32) -> (i32, i32) {
    %c0_i32 = arith.constant 0 : i32
    %c0_i32_0 = arith.constant 0 : i32
    %c0_i32_1 = arith.constant 0 : i32
    return %c0_i32, %c0_i32_0 : i32, i32
  }
  func.func @transform_2(%arg0: i32, %arg1: i32) -> (i32, i32) {
    %c0_i32 = arith.constant 0 : i32
    %c0_i32_0 = arith.constant 0 : i32
    %c0_i32_1 = arith.constant 0 : i32
    return %c0_i32, %c0_i32_0 : i32, i32
  }
  func.func @transform_3(%arg0: i32, %arg1: i32) -> (i32, i32) {
    %c0_i32 = arith.constant 0 : i32
    %c0_i32_0 = arith.constant 0 : i32
    %c0_i32_1 = arith.constant 0 : i32
    return %c0_i32, %c0_i32_0 : i32, i32
  }
  func.func @transform_4(%arg0: i32, %arg1: i32) -> (i32, i32, i32) {
    %c0_i32 = arith.constant 0 : i32
    %c0_i32_0 = arith.constant 0 : i32
    return %arg0, %c0_i32, %arg1 : i32, i32, i32
  }
}

</mosaic_0001>

<llo_original>
// kernel: conv_bn_relu.2
$region0: #{conv_bn_relu.2}
  #allocation0 [shape = 'u32[]', space=smem, size = 0x4, offset = 0x4, fixed_abs, tag = 'smem constant byte address 0x4 - core index']
  #allocation1 [shape = 'u32[144,128]{1,0:T(1,128)}', space=vmem, size = 0x12000, scoped, tag = 'internal scratch']
  %s0 = inlined_call_operand.vmem [shape: bf16[2,18,18,4], index: 0, kind: input, shape index: {}]
  %s1 = inlined_call_operand.vmem [shape: bf16[128,36], index: 1, kind: input, shape index: {}]
  %s2 = inlined_call_operand.vmem [shape: f32[2,2,128,2], index: 2, kind: output, shape index: {}]
  %s3 = sld [smem:[#allocation0]]
  $region41: #{conv_bn_relu.2} parent=0
    _
  %s5 = ssub.s32 1, %s3
  %s6 = scalar_select 0, %s5, %s3
  loop: start=0, step=1, limit=6
  $region2: #{conv_bn_relu.2} parent=0 // loop_pre_header
    _
  $region3: #{conv_bn_relu.2} parent=0 // loop_header
    %s8 = sphi 0, %s12
    %p9 = scmp.ge.s32.totalorder %s8, 6
    %s15 = sphi 0, %s27
    %s16 = sphi 0, %s23
    %s17 = sphi 0, %s15
    %s18 = sphi 0, %s16
    %s19 = sphi 0, %s17
    %s20 = sphi 0, %s18
    %s30 = sphi 0, %s32
    %s33 = sphi 0, %s30
    %s34 = sphi 0, %s33
    %s50 = sphi 0, %s34
    %s54 = sphi 0, %s54
    %s56 = sphi 0, %s54
    %s57 = sphi 0, %s56
    %s71 = sphi 0, %s57
    %s79 = sphi 0, %s81
    %s82 = sphi 0, %s79
    %s83 = sphi 0, %s82
    %s99 = sphi 0, %s83
  $region4: #{conv_bn_relu.2} parent=0 // loop_header_branch
    %11 = sbr.rel (%p9) target = $region8
  $region5: #{conv_bn_relu.2} parent=0 // loop_body
    %s13 = ssub.s32 %s8, 1
    %s14 = ssub.s32 %s8, 2
    %s21 = sadd.s32 1, %s16
    %p22 = scmp.ge.s32.totalorder %s21, 2
    %s23 = scalar_select %p22, 0, %s21
    %s24 = sadd.s32 1, %s15
    %s25 = scalar_select %p22, %s24, %s15
    %p26 = scmp.ge.s32.totalorder %s25, 2
    %s27 = scalar_select %p26, 0, %s25
    %s28 = ssub.s32 %s15, %s27
    %p29 = scmp.eq.s32.totalorder %s28, 0
    %s31 = sadd.s32 %s30, 1
    %s32 = scalar_select %p29, %s30, %s31
    %p35 = pneg %p29
    %p36 = scmp.eq.s32.totalorder %s8, 3
    %p37 = por %p35, %p36
    %p38 = scmp.ne.s32.totalorder %s30, %s33
    %p39 = scmp.eq.s32.totalorder %s8, 0
    %p40 = por %p38, %p39
    %p41 = scmp.ne.s32.totalorder %s30, %s33
    %p42 = scmp.eq.s32.totalorder %s13, 3
    %p43 = por %p41, %p42
    %p44 = scmp.ne.s32.totalorder %s33, %s34
    %p45 = scmp.eq.s32.totalorder %s13, 0
    %p46 = por %p44, %p45
    %p47 = scmp.ne.s32.totalorder %s33, %s34
    %p48 = scmp.eq.s32.totalorder %s14, 3
    %p49 = por %p47, %p48
    %p51 = scmp.ne.s32.totalorder %s34, %s50
    %p52 = scmp.eq.s32.totalorder %s14, 0
    %p53 = por %p51, %p52
    %s55 = sadd.s32 %s54, 1
    %p58 = scmp.eq.s32.totalorder %s8, 3
    %p59 = scmp.ne.s32.totalorder %s54, %s56
    %p60 = scmp.eq.s32.totalorder %s8, 0
    %p61 = por %p59, %p60
    %p62 = scmp.ne.s32.totalorder %s54, %s56
    %p63 = scmp.eq.s32.totalorder %s13, 3
    %p64 = por %p62, %p63
    %p65 = scmp.ne.s32.totalorder %s56, %s57
    %p66 = scmp.eq.s32.totalorder %s13, 0
    %p67 = por %p65, %p66
    %p68 = scmp.ne.s32.totalorder %s56, %s57
    %p69 = scmp.eq.s32.totalorder %s14, 3
    %p70 = por %p68, %p69
    %p72 = scmp.ne.s32.totalorder %s57, %s71
    %p73 = scmp.eq.s32.totalorder %s14, 0
    %p74 = por %p72, %p73
    %s75 = ssub.s32 %s15, %s27
    %s76 = ssub.s32 %s16, %s23
    %s77 = sor.u32 %s75, %s76
    %p78 = scmp.eq.s32.totalorder %s77, 0
    %s80 = sadd.s32 %s79, 1
    %s81 = scalar_select %p78, %s79, %s80
    %p84 = pneg %p78
    %p85 = scmp.eq.s32.totalorder %s8, 3
    %p86 = por %p84, %p85
    %p87 = scmp.ne.s32.totalorder %s79, %s82
    %p88 = scmp.eq.s32.totalorder %s8, 0
    %p89 = por %p87, %p88
    %p90 = scmp.ne.s32.totalorder %s79, %s82
    %p91 = scmp.eq.s32.totalorder %s13, 3
    %p92 = por %p90, %p91
    %p93 = scmp.ne.s32.totalorder %s82, %s83
    %p94 = scmp.eq.s32.totalorder %s13, 0
    %p95 = por %p93, %p94
    %p96 = scmp.ne.s32.totalorder %s82, %s83
    %p97 = scmp.eq.s32.totalorder %s14, 3
    %p98 = por %p96, %p97
    %p100 = scmp.ne.s32.totalorder %s83, %s99
    %p101 = scmp.eq.s32.totalorder %s14, 0
    %p102 = por %p100, %p101
    %p103 = scmp.le.s32.totalorder 1, %s8
    %p104 = scmp.lt.s32.totalorder %s8, 5
    %p105 = pnand %p103, %p104
    %p106 = pneg %p105
    // Predicated region
    $region9: #{conv_bn_relu.2} parent=5 // pred_check
      _
    $region10: #{conv_bn_relu.2} parent=5 // pred_check_branch
      %108 = sbr.rel (%p105) target = $region12
    $region11: #{conv_bn_relu.2} parent=5 // pred_region
      %s109 = ssub.s32 %s8, 1
      // Predicated region
      $region13: #{conv_bn_relu.2} parent=11 // pred_check
        %p110 = pneg %p67
      $region14: #{conv_bn_relu.2} parent=11 // pred_check_branch
        %112 = sbr.rel (%p110) target = $region16
      $region15: #{conv_bn_relu.2} parent=11 // pred_region
        _
      $region16: #{conv_bn_relu.2} parent=11 // pred_fallthru
        _
    $region12: #{conv_bn_relu.2} parent=5 // pred_fallthru
      _
    %p113 = scmp.lt.s32.totalorder %s8, 4
    // Predicated region
    $region17: #{conv_bn_relu.2} parent=5 // pred_check
      %p114 = pneg %p113
    $region18: #{conv_bn_relu.2} parent=5 // pred_check_branch
      %116 = sbr.rel (%p114) target = $region20
    $region19: #{conv_bn_relu.2} parent=5 // pred_region
      // Predicated region
      $region21: #{conv_bn_relu.2} parent=19 // pred_check
        %p117 = pneg %p40
      $region22: #{conv_bn_relu.2} parent=19 // pred_check_branch
        %119 = sbr.rel (%p117) target = $region24
      $region23: #{conv_bn_relu.2} parent=19 // pred_region
        %p120 = scmp.lt.s32.totalorder %s15, 1
        %s121 = scalar_select %p120, %s15, 1
        %s122 = smul.addr %s121, 54
        %s123 = smul.addr %s122, 4
        %s124 = scalar_lea.vmem %s0, %s123
      $region24: #{conv_bn_relu.2} parent=19 // pred_fallthru
        _
    $region20: #{conv_bn_relu.2} parent=5 // pred_fallthru
      _
    %p125 = scmp.le.s32.totalorder 1, %s8
    %p126 = scmp.lt.s32.totalorder %s8, 5
    %p127 = pnand %p125, %p126
    %p128 = pneg %p127
    // Predicated region
    $region25: #{conv_bn_relu.2} parent=5 // pred_check
      _
    $region26: #{conv_bn_relu.2} parent=5 // pred_check_branch
      %130 = sbr.rel (%p127) target = $region28
    $region27: #{conv_bn_relu.2} parent=5 // pred_region
      %s131 = ssub.s32 %s8, 1
      %p132 = scmp.lt.s32.totalorder %s17, 1
      %s133 = scalar_select %p132, %s17, 1
      %s134 = smul.addr %s133, 54
      %s135 = smul.addr %s134, 4
      %s136 = scalar_lea.vmem %s0, %s135
      %p137 = pneg %p46
      %p138 = pneg %p43
      %p139 = pneg %p67
      %p140 = pneg %p64
      %p141 = pneg %p95
      %p142 = pneg %p92
      %p143 = scmp.lt.s32.totalorder %s17, 1
      %s144 = scalar_select %p143, %s17, 1
      %p145 = scmp.lt.s32.totalorder %s18, 1
      %s146 = scalar_select %p145, %s18, 1
      %s147 = smul.addr %s146, 16
      %s148 = smul.addr %s144, 32
      %s149 = sadd.s32 %s147, %s148
      %s150 = smul.addr %s149, 8
      %s151 = scalar_lea.vmem %s2, %s150
      %p152 = scmp.lt.s32.totalorder %s17, 1
      %s153 = scalar_select %p152, %s17, 1
      %s154 = smul.addr %s153, 54
      %s155 = smul.addr %s154, 4
      %s156 = scalar_lea.vmem %s0, %s155
      %p157 = scmp.lt.s32.totalorder %s17, 1
      %s158 = scalar_select %p157, %s17, 1
      %p159 = scmp.lt.s32.totalorder %s18, 1
      %s160 = scalar_select %p159, %s18, 1
      %s161 = smul.addr %s160, 16
      %s162 = smul.addr %s158, 32
      %s163 = sadd.s32 %s161, %s162
      %s164 = smul.addr %s163, 8
      %s165 = scalar_lea.vmem %s2, %s164
      %s167 = smul.u32 %s18, 8
      %s168 = smul.u32 %s167, 3
      %s169 = smul.addr %s168, 4
      %s170 = scalar_lea.vmem %s156, %s169
      %v171 = vld [vmem:[%s170] sm:$0xf]
      %v172 = vld [vmem:[%s170 + $0x4] sm:$0xf]
      %v173 = vld [vmem:[%s170 + $0x8] sm:$0x1]
      %v174 = vld [vmem:[%s170 + $0xc] sm:$0xf]
      %v175 = vld [vmem:[%s170 + $0x10] sm:$0xf]
      %v176 = vld [vmem:[%s170 + $0x14] sm:$0x1]
      %v177 = vld [vmem:[%s170 + $0x18] sm:$0xf]
      %v178 = vld [vmem:[%s170 + $0x1c] sm:$0xf]
      %v179 = vld [vmem:[%s170 + $0x20] sm:$0x1]
      %v180 = vld [vmem:[%s170 + $0x24] sm:$0xf]
      %v181 = vld [vmem:[%s170 + $0x28] sm:$0xf]
      %v182 = vld [vmem:[%s170 + $0x2c] sm:$0x1]
      %v183 = vld [vmem:[%s170 + $0x30] sm:$0xf]
      %v184 = vld [vmem:[%s170 + $0x34] sm:$0xf]
      %v185 = vld [vmem:[%s170 + $0x38] sm:$0x1]
      %v186 = vld [vmem:[%s170 + $0x3c] sm:$0xf]
      %v187 = vld [vmem:[%s170 + $0x40] sm:$0xf]
      %v188 = vld [vmem:[%s170 + $0x44] sm:$0x1]
      %v189 = vld [vmem:[%s170 + $0x48] sm:$0xf]
      %v190 = vld [vmem:[%s170 + $0x4c] sm:$0xf]
      %v191 = vld [vmem:[%s170 + $0x50] sm:$0x1]
      %v192 = vld [vmem:[%s170 + $0x54] sm:$0xf]
      %v193 = vld [vmem:[%s170 + $0x58] sm:$0xf]
      %v194 = vld [vmem:[%s170 + $0x5c] sm:$0x1]
      %vm195 = vsmask.f32 3328
      %vm196 = vsmask.f32 7440
      %vm197 = vmor %vm195, %vm196
      %v199 = vshrl.u32 %v171, 16
      %v201 = vrot.slane %v199, 4
      %v202 = vshll.u32 %v171, 16
      %v204 = vrot.slane %v202, 5
      %v205 = vor.u32 %v201, %v204
      %v206 = vrot.slane %v205, 4
      %v208 = vshll.u32 %v172, 16
      %v210 = vrot.slane %v208, 5
      %v211 = vsel %vm197, %v206, %v210
      %v212 = vshrl.u32 %v172, 16
      %v214 = vrot.slane %v212, 4
      %v215 = vor.u32 %v214, %v210
      %v216 = vrot.slane %v215, 4
      %v218 = vshll.u32 %v173, 16
      %v220 = vrot.slane %v218, 5
      %v221 = vsel %vm197, %v216, %v220
      %v223 = vshrl.u32 %v174, 16
      %v225 = vrot.slane %v223, 4
      %v226 = vshll.u32 %v174, 16
      %v228 = vrot.slane %v226, 5
      %v229 = vor.u32 %v225, %v228
      %v230 = vrot.slane %v229, 4
      %v232 = vshll.u32 %v175, 16
      %v234 = vrot.slane %v232, 5
      %v235 = vsel %vm197, %v230, %v234
      %v236 = vshrl.u32 %v175, 16
      %v238 = vrot.slane %v236, 4
      %v239 = vor.u32 %v238, %v234
      %v240 = vrot.slane %v239, 4
      %v242 = vshll.u32 %v176, 16
      %v244 = vrot.slane %v242, 5
      %v245 = vsel %vm197, %v240, %v244
      %v247 = vshrl.u32 %v177, 16
      %v249 = vrot.slane %v247, 4
      %v250 = vshll.u32 %v177, 16
      %v252 = vrot.slane %v250, 5
      %v253 = vor.u32 %v249, %v252
      %v254 = vrot.slane %v253, 4
      %v256 = vshll.u32 %v178, 16
      %v258 = vrot.slane %v256, 5
      %v259 = vsel %vm197, %v254, %v258
      %v260 = vshrl.u32 %v178, 16
      %v262 = vrot.slane %v260, 4
      %v263 = vor.u32 %v262, %v258
      %v264 = vrot.slane %v263, 4
      %v266 = vshll.u32 %v179, 16
      %v268 = vrot.slane %v266, 5
      %v269 = vsel %vm197, %v264, %v268
      %v271 = vshrl.u32 %v180, 16
      %v273 = vrot.slane %v271, 4
      %v274 = vshll.u32 %v180, 16
      %v276 = vrot.slane %v274, 5
      %v277 = vor.u32 %v273, %v276
      %v278 = vrot.slane %v277, 4
      %v280 = vshll.u32 %v181, 16
      %v282 = vrot.slane %v280, 5
      %v283 = vsel %vm197, %v278, %v282
      %v284 = vshrl.u32 %v181, 16
      %v286 = vrot.slane %v284, 4
      %v287 = vor.u32 %v286, %v282
      %v288 = vrot.slane %v287, 4
      %v290 = vshll.u32 %v182, 16
      %v292 = vrot.slane %v290, 5
      %v293 = vsel %vm197, %v288, %v292
      %v295 = vshrl.u32 %v183, 16
      %v297 = vrot.slane %v295, 4
      %v298 = vshll.u32 %v183, 16
      %v300 = vrot.slane %v298, 5
      %v301 = vor.u32 %v297, %v300
      %v302 = vrot.slane %v301, 4
      %v304 = vshll.u32 %v184, 16
      %v306 = vrot.slane %v304, 5
      %v307 = vsel %vm197, %v302, %v306
      %v308 = vshrl.u32 %v184, 16
      %v310 = vrot.slane %v308, 4
      %v311 = vor.u32 %v310, %v306
      %v312 = vrot.slane %v311, 4
      %v314 = vshll.u32 %v185, 16
      %v316 = vrot.slane %v314, 5
      %v317 = vsel %vm197, %v312, %v316
      %v319 = vshrl.u32 %v186, 16
      %v321 = vrot.slane %v319, 4
      %v322 = vshll.u32 %v186, 16
      %v324 = vrot.slane %v322, 5
      %v325 = vor.u32 %v321, %v324
      %v326 = vrot.slane %v325, 4
      %v328 = vshll.u32 %v187, 16
      %v330 = vrot.slane %v328, 5
      %v331 = vsel %vm197, %v326, %v330
      %v332 = vshrl.u32 %v187, 16
      %v334 = vrot.slane %v332, 4
      %v335 = vor.u32 %v334, %v330
      %v336 = vrot.slane %v335, 4
      %v338 = vshll.u32 %v188, 16
      %v340 = vrot.slane %v338, 5
      %v341 = vsel %vm197, %v336, %v340
      %v343 = vshrl.u32 %v189, 16
      %v345 = vrot.slane %v343, 4
      %v346 = vshll.u32 %v189, 16
      %v348 = vrot.slane %v346, 5
      %v349 = vor.u32 %v345, %v348
      %v350 = vrot.slane %v349, 4
      %v352 = vshll.u32 %v190, 16
      %v354 = vrot.slane %v352, 5
      %v355 = vsel %vm197, %v350, %v354
      %v356 = vshrl.u32 %v190, 16
      %v358 = vrot.slane %v356, 4
      %v359 = vor.u32 %v358, %v354
      %v360 = vrot.slane %v359, 4
      %v362 = vshll.u32 %v191, 16
      %v364 = vrot.slane %v362, 5
      %v365 = vsel %vm197, %v360, %v364
      %v367 = vshrl.u32 %v192, 16
      %v369 = vrot.slane %v367, 4
      %v370 = vshll.u32 %v192, 16
      %v372 = vrot.slane %v370, 5
      %v373 = vor.u32 %v369, %v372
      %v374 = vrot.slane %v373, 4
      %v376 = vshll.u32 %v193, 16
      %v378 = vrot.slane %v376, 5
      %v379 = vsel %vm197, %v374, %v378
      %v380 = vshrl.u32 %v193, 16
      %v382 = vrot.slane %v380, 4
      %v383 = vor.u32 %v382, %v378
      %v384 = vrot.slane %v383, 4
      %v386 = vshll.u32 %v194, 16
      %v388 = vrot.slane %v386, 5
      %v389 = vsel %vm197, %v384, %v388
      %vm414 = vcmask 1042432
      %vm415 = vcmask 1046532
      %vm416 = vmor %vm414, %vm415
      %v417 = vrot.slane %v171, 5
      %v418 = vrot.slane %v417, 4
      %v419 = vrot.slane %v172, 5
      %v420 = vsel %vm416, %v418, %v419
      %v421 = vrot.slane %v419, 4
      %v422 = vrot.slane %v173, 5
      %v423 = vsel %vm416, %v421, %v422
      %v424 = vrot.slane %v174, 5
      %v425 = vrot.slane %v424, 4
      %v426 = vrot.slane %v175, 5
      %v427 = vsel %vm416, %v425, %v426
      %v428 = vrot.slane %v426, 4
      %v429 = vrot.slane %v176, 5
      %v430 = vsel %vm416, %v428, %v429
      %v431 = vrot.slane %v177, 5
      %v432 = vrot.slane %v431, 4
      %v433 = vrot.slane %v178, 5
      %v434 = vsel %vm416, %v432, %v433
      %v435 = vrot.slane %v433, 4
      %v436 = vrot.slane %v179, 5
      %v437 = vsel %vm416, %v435, %v436
      %v438 = vrot.slane %v180, 5
      %v439 = vrot.slane %v438, 4
      %v440 = vrot.slane %v181, 5
      %v441 = vsel %vm416, %v439, %v440
      %v442 = vrot.slane %v440, 4
      %v443 = vrot.slane %v182, 5
      %v444 = vsel %vm416, %v442, %v443
      %v445 = vrot.slane %v183, 5
      %v446 = vrot.slane %v445, 4
      %v447 = vrot.slane %v184, 5
      %v448 = vsel %vm416, %v446, %v447
      %v449 = vrot.slane %v447, 4
      %v450 = vrot.slane %v185, 5
      %v451 = vsel %vm416, %v449, %v450
      %v452 = vrot.slane %v186, 5
      %v453 = vrot.slane %v452, 4
      %v454 = vrot.slane %v187, 5
      %v455 = vsel %vm416, %v453, %v454
      %v456 = vrot.slane %v454, 4
      %v457 = vrot.slane %v188, 5
      %v458 = vsel %vm416, %v456, %v457
      %v459 = vrot.slane %v189, 5
      %v460 = vrot.slane %v459, 4
      %v461 = vrot.slane %v190, 5
      %v462 = vsel %vm416, %v460, %v461
      %v463 = vrot.slane %v461, 4
      %v464 = vrot.slane %v191, 5
      %v465 = vsel %vm416, %v463, %v464
      %v466 = vrot.slane %v192, 5
      %v467 = vrot.slane %v466, 4
      %v468 = vrot.slane %v193, 5
      %v469 = vsel %vm416, %v467, %v468
      %v470 = vrot.slane %v468, 4
      %v471 = vrot.slane %v194, 5
      %v472 = vsel %vm416, %v470, %v471
      %s473 = sadd.s32 %s167, 1
      %s474 = smul.u32 %s473, 3
      %s475 = smul.addr %s474, 4
      %s476 = scalar_lea.vmem %s156, %s475
      %v477 = vld [vmem:[%s476] sm:$0xf]
      %v478 = vld [vmem:[%s476 + $0x4] sm:$0xf]
      %v479 = vld [vmem:[%s476 + $0x8] sm:$0x1]
      %v480 = vld [vmem:[%s476 + $0xc] sm:$0xf]
      %v481 = vld [vmem:[%s476 + $0x10] sm:$0xf]
      %v482 = vld [vmem:[%s476 + $0x14] sm:$0x1]
      %v483 = vld [vmem:[%s476 + $0x18] sm:$0xf]
      %v484 = vld [vmem:[%s476 + $0x1c] sm:$0xf]
      %v485 = vld [vmem:[%s476 + $0x20] sm:$0x1]
      %v486 = vld [vmem:[%s476 + $0x24] sm:$0xf]
      %v487 = vld [vmem:[%s476 + $0x28] sm:$0xf]
      %v488 = vld [vmem:[%s476 + $0x2c] sm:$0x1]
      %v489 = vld [vmem:[%s476 + $0x30] sm:$0xf]
      %v490 = vld [vmem:[%s476 + $0x34] sm:$0xf]
      %v491 = vld [vmem:[%s476 + $0x38] sm:$0x1]
      %v492 = vld [vmem:[%s476 + $0x3c] sm:$0xf]
      %v493 = vld [vmem:[%s476 + $0x40] sm:$0xf]
      %v494 = vld [vmem:[%s476 + $0x44] sm:$0x1]
      %v495 = vld [vmem:[%s476 + $0x48] sm:$0xf]
      %v496 = vld [vmem:[%s476 + $0x4c] sm:$0xf]
      %v497 = vld [vmem:[%s476 + $0x50] sm:$0x1]
      %v498 = vld [vmem:[%s476 + $0x54] sm:$0xf]
      %v499 = vld [vmem:[%s476 + $0x58] sm:$0xf]
      %v500 = vld [vmem:[%s476 + $0x5c] sm:$0x1]
      %v502 = vshrl.u32 %v477, 16
      %v504 = vrot.slane %v502, 4
      %v505 = vshll.u32 %v477, 16
      %v507 = vrot.slane %v505, 5
      %v508 = vor.u32 %v504, %v507
      %v509 = vrot.slane %v508, 4
      %v511 = vshll.u32 %v478, 16
      %v513 = vrot.slane %v511, 5
      %v514 = vsel %vm197, %v509, %v513
      %v515 = vshrl.u32 %v478, 16
      %v517 = vrot.slane %v515, 4
      %v518 = vor.u32 %v517, %v513
      %v519 = vrot.slane %v518, 4
      %v521 = vshll.u32 %v479, 16
      %v523 = vrot.slane %v521, 5
      %v524 = vsel %vm197, %v519, %v523
      %v526 = vshrl.u32 %v480, 16
      %v528 = vrot.slane %v526, 4
      %v529 = vshll.u32 %v480, 16
      %v531 = vrot.slane %v529, 5
      %v532 = vor.u32 %v528, %v531
      %v533 = vrot.slane %v532, 4
      %v535 = vshll.u32 %v481, 16
      %v537 = vrot.slane %v535, 5
      %v538 = vsel %vm197, %v533, %v537
      %v539 = vshrl.u32 %v481, 16
      %v541 = vrot.slane %v539, 4
      %v542 = vor.u32 %v541, %v537
      %v543 = vrot.slane %v542, 4
      %v545 = vshll.u32 %v482, 16
      %v547 = vrot.slane %v545, 5
      %v548 = vsel %vm197, %v543, %v547
      %v550 = vshrl.u32 %v483, 16
      %v552 = vrot.slane %v550, 4
      %v553 = vshll.u32 %v483, 16
      %v555 = vrot.slane %v553, 5
      %v556 = vor.u32 %v552, %v555
      %v557 = vrot.slane %v556, 4
      %v559 = vshll.u32 %v484, 16
      %v561 = vrot.slane %v559, 5
      %v562 = vsel %vm197, %v557, %v561
      %v563 = vshrl.u32 %v484, 16
      %v565 = vrot.slane %v563, 4
      %v566 = vor.u32 %v565, %v561
      %v567 = vrot.slane %v566, 4
      %v569 = vshll.u32 %v485, 16
      %v571 = vrot.slane %v569, 5
      %v572 = vsel %vm197, %v567, %v571
      %v574 = vshrl.u32 %v486, 16
      %v576 = vrot.slane %v574, 4
      %v577 = vshll.u32 %v486, 16
      %v579 = vrot.slane %v577, 5
      %v580 = vor.u32 %v576, %v579
      %v581 = vrot.slane %v580, 4
      %v583 = vshll.u32 %v487, 16
      %v585 = vrot.slane %v583, 5
      %v586 = vsel %vm197, %v581, %v585
      %v587 = vshrl.u32 %v487, 16
      %v589 = vrot.slane %v587, 4
      %v590 = vor.u32 %v589, %v585
      %v591 = vrot.slane %v590, 4
      %v593 = vshll.u32 %v488, 16
      %v595 = vrot.slane %v593, 5
      %v596 = vsel %vm197, %v591, %v595
      %v598 = vshrl.u32 %v489, 16
      %v600 = vrot.slane %v598, 4
      %v601 = vshll.u32 %v489, 16
      %v603 = vrot.slane %v601, 5
      %v604 = vor.u32 %v600, %v603
      %v605 = vrot.slane %v604, 4
      %v607 = vshll.u32 %v490, 16
      %v609 = vrot.slane %v607, 5
      %v610 = vsel %vm197, %v605, %v609
      %v611 = vshrl.u32 %v490, 16
      %v613 = vrot.slane %v611, 4
      %v614 = vor.u32 %v613, %v609
      %v615 = vrot.slane %v614, 4
      %v617 = vshll.u32 %v491, 16
      %v619 = vrot.slane %v617, 5
      %v620 = vsel %vm197, %v615, %v619
      %v622 = vshrl.u32 %v492, 16
      %v624 = vrot.slane %v622, 4
      %v625 = vshll.u32 %v492, 16
      %v627 = vrot.slane %v625, 5
      %v628 = vor.u32 %v624, %v627
      %v629 = vrot.slane %v628, 4
      %v631 = vshll.u32 %v493, 16
      %v633 = vrot.slane %v631, 5
      %v634 = vsel %vm197, %v629, %v633
      %v635 = vshrl.u32 %v493, 16
      %v637 = vrot.slane %v635, 4
      %v638 = vor.u32 %v637, %v633
      %v639 = vrot.slane %v638, 4
      %v641 = vshll.u32 %v494, 16
      %v643 = vrot.slane %v641, 5
      %v644 = vsel %vm197, %v639, %v643
      %v646 = vshrl.u32 %v495, 16
      %v648 = vrot.slane %v646, 4
      %v649 = vshll.u32 %v495, 16
      %v651 = vrot.slane %v649, 5
      %v652 = vor.u32 %v648, %v651
      %v653 = vrot.slane %v652, 4
      %v655 = vshll.u32 %v496, 16
      %v657 = vrot.slane %v655, 5
      %v658 = vsel %vm197, %v653, %v657
      %v659 = vshrl.u32 %v496, 16
      %v661 = vrot.slane %v659, 4
      %v662 = vor.u32 %v661, %v657
      %v663 = vrot.slane %v662, 4
      %v665 = vshll.u32 %v497, 16
      %v667 = vrot.slane %v665, 5
      %v668 = vsel %vm197, %v663, %v667
      %v670 = vshrl.u32 %v498, 16
      %v672 = vrot.slane %v670, 4
      %v673 = vshll.u32 %v498, 16
      %v675 = vrot.slane %v673, 5
      %v676 = vor.u32 %v672, %v675
      %v677 = vrot.slane %v676, 4
      %v679 = vshll.u32 %v499, 16
      %v681 = vrot.slane %v679, 5
      %v682 = vsel %vm197, %v677, %v681
      %v683 = vshrl.u32 %v499, 16
      %v685 = vrot.slane %v683, 4
      %v686 = vor.u32 %v685, %v681
      %v687 = vrot.slane %v686, 4
      %v689 = vshll.u32 %v500, 16
      %v691 = vrot.slane %v689, 5
      %v692 = vsel %vm197, %v687, %v691
      %v717 = vrot.slane %v477, 5
      %v718 = vrot.slane %v717, 4
      %v719 = vrot.slane %v478, 5
      %v720 = vsel %vm416, %v718, %v719
      %v721 = vrot.slane %v719, 4
      %v722 = vrot.slane %v479, 5
      %v723 = vsel %vm416, %v721, %v722
      %v724 = vrot.slane %v480, 5
      %v725 = vrot.slane %v724, 4
      %v726 = vrot.slane %v481, 5
      %v727 = vsel %vm416, %v725, %v726
      %v728 = vrot.slane %v726, 4
      %v729 = vrot.slane %v482, 5
      %v730 = vsel %vm416, %v728, %v729
      %v731 = vrot.slane %v483, 5
      %v732 = vrot.slane %v731, 4
      %v733 = vrot.slane %v484, 5
      %v734 = vsel %vm416, %v732, %v733
      %v735 = vrot.slane %v733, 4
      %v736 = vrot.slane %v485, 5
      %v737 = vsel %vm416, %v735, %v736
      %v738 = vrot.slane %v486, 5
      %v739 = vrot.slane %v738, 4
      %v740 = vrot.slane %v487, 5
      %v741 = vsel %vm416, %v739, %v740
      %v742 = vrot.slane %v740, 4
      %v743 = vrot.slane %v488, 5
      %v744 = vsel %vm416, %v742, %v743
      %v745 = vrot.slane %v489, 5
      %v746 = vrot.slane %v745, 4
      %v747 = vrot.slane %v490, 5
      %v748 = vsel %vm416, %v746, %v747
      %v749 = vrot.slane %v747, 4
      %v750 = vrot.slane %v491, 5
      %v751 = vsel %vm416, %v749, %v750
      %v752 = vrot.slane %v492, 5
      %v753 = vrot.slane %v752, 4
      %v754 = vrot.slane %v493, 5
      %v755 = vsel %vm416, %v753, %v754
      %v756 = vrot.slane %v754, 4
      %v757 = vrot.slane %v494, 5
      %v758 = vsel %vm416, %v756, %v757
      %v759 = vrot.slane %v495, 5
      %v760 = vrot.slane %v759, 4
      %v761 = vrot.slane %v496, 5
      %v762 = vsel %vm416, %v760, %v761
      %v763 = vrot.slane %v761, 4
      %v764 = vrot.slane %v497, 5
      %v765 = vsel %vm416, %v763, %v764
      %v766 = vrot.slane %v498, 5
      %v767 = vrot.slane %v766, 4
      %v768 = vrot.slane %v499, 5
      %v769 = vsel %vm416, %v767, %v768
      %v770 = vrot.slane %v768, 4
      %v771 = vrot.slane %v500, 5
      %v772 = vsel %vm416, %v770, %v771
      %s773 = sadd.s32 %s167, 2
      %s774 = smul.u32 %s773, 3
      %s775 = smul.addr %s774, 4
      %s776 = scalar_lea.vmem %s156, %s775
      %v777 = vld [vmem:[%s776] sm:$0xf]
      %v778 = vld [vmem:[%s776 + $0x4] sm:$0xf]
      %v779 = vld [vmem:[%s776 + $0x8] sm:$0x1]
      %v780 = vld [vmem:[%s776 + $0xc] sm:$0xf]
      %v781 = vld [vmem:[%s776 + $0x10] sm:$0xf]
      %v782 = vld [vmem:[%s776 + $0x14] sm:$0x1]
      %v783 = vld [vmem:[%s776 + $0x18] sm:$0xf]
      %v784 = vld [vmem:[%s776 + $0x1c] sm:$0xf]
      %v785 = vld [vmem:[%s776 + $0x20] sm:$0x1]
      %v786 = vld [vmem:[%s776 + $0x24] sm:$0xf]
      %v787 = vld [vmem:[%s776 + $0x28] sm:$0xf]
      %v788 = vld [vmem:[%s776 + $0x2c] sm:$0x1]
      %v789 = vld [vmem:[%s776 + $0x30] sm:$0xf]
      %v790 = vld [vmem:[%s776 + $0x34] sm:$0xf]
      %v791 = vld [vmem:[%s776 + $0x38] sm:$0x1]
      %v792 = vld [vmem:[%s776 + $0x3c] sm:$0xf]
      %v793 = vld [vmem:[%s776 + $0x40] sm:$0xf]
      %v794 = vld [vmem:[%s776 + $0x44] sm:$0x1]
      %v795 = vld [vmem:[%s776 + $0x48] sm:$0xf]
      %v796 = vld [vmem:[%s776 + $0x4c] sm:$0xf]
      %v797 = vld [vmem:[%s776 + $0x50] sm:$0x1]
      %v798 = vld [vmem:[%s776 + $0x54] sm:$0xf]
      %v799 = vld [vmem:[%s776 + $0x58] sm:$0xf]
      %v800 = vld [vmem:[%s776 + $0x5c] sm:$0x1]
      %v802 = vshrl.u32 %v777, 16
      %v804 = vrot.slane %v802, 4
      %v805 = vshll.u32 %v777, 16
      %v807 = vrot.slane %v805, 5
      %v808 = vor.u32 %v804, %v807
      %v809 = vrot.slane %v808, 4
      %v811 = vshll.u32 %v778, 16
      %v813 = vrot.slane %v811, 5
      %v814 = vsel %vm197, %v809, %v813
      %v815 = vshrl.u32 %v778, 16
      %v817 = vrot.slane %v815, 4
      %v818 = vor.u32 %v817, %v813
      %v819 = vrot.slane %v818, 4
      %v821 = vshll.u32 %v779, 16
      %v823 = vrot.slane %v821, 5
      %v824 = vsel %vm197, %v819, %v823
      %v826 = vshrl.u32 %v780, 16
      %v828 = vrot.slane %v826, 4
      %v829 = vshll.u32 %v780, 16
      %v831 = vrot.slane %v829, 5
      %v832 = vor.u32 %v828, %v831
      %v833 = vrot.slane %v832, 4
      %v835 = vshll.u32 %v781, 16
      %v837 = vrot.slane %v835, 5
      %v838 = vsel %vm197, %v833, %v837
      %v839 = vshrl.u32 %v781, 16
      %v841 = vrot.slane %v839, 4
      %v842 = vor.u32 %v841, %v837
      %v843 = vrot.slane %v842, 4
      %v845 = vshll.u32 %v782, 16
      %v847 = vrot.slane %v845, 5
      %v848 = vsel %vm197, %v843, %v847
      %v850 = vshrl.u32 %v783, 16
      %v852 = vrot.slane %v850, 4
      %v853 = vshll.u32 %v783, 16
      %v855 = vrot.slane %v853, 5
      %v856 = vor.u32 %v852, %v855
      %v857 = vrot.slane %v856, 4
      %v859 = vshll.u32 %v784, 16
      %v861 = vrot.slane %v859, 5
      %v862 = vsel %vm197, %v857, %v861
      %v863 = vshrl.u32 %v784, 16
      %v865 = vrot.slane %v863, 4
      %v866 = vor.u32 %v865, %v861
      %v867 = vrot.slane %v866, 4
      %v869 = vshll.u32 %v785, 16
      %v871 = vrot.slane %v869, 5
      %v872 = vsel %vm197, %v867, %v871
      %v874 = vshrl.u32 %v786, 16
      %v876 = vrot.slane %v874, 4
      %v877 = vshll.u32 %v786, 16
      %v879 = vrot.slane %v877, 5
      %v880 = vor.u32 %v876, %v879
      %v881 = vrot.slane %v880, 4
      %v883 = vshll.u32 %v787, 16
      %v885 = vrot.slane %v883, 5
      %v886 = vsel %vm197, %v881, %v885
      %v887 = vshrl.u32 %v787, 16
      %v889 = vrot.slane %v887, 4
      %v890 = vor.u32 %v889, %v885
      %v891 = vrot.slane %v890, 4
      %v893 = vshll.u32 %v788, 16
      %v895 = vrot.slane %v893, 5
      %v896 = vsel %vm197, %v891, %v895
      %v898 = vshrl.u32 %v789, 16
      %v900 = vrot.slane %v898, 4
      %v901 = vshll.u32 %v789, 16
      %v903 = vrot.slane %v901, 5
      %v904 = vor.u32 %v900, %v903
      %v905 = vrot.slane %v904, 4
      %v907 = vshll.u32 %v790, 16
      %v909 = vrot.slane %v907, 5
      %v910 = vsel %vm197, %v905, %v909
      %v911 = vshrl.u32 %v790, 16
      %v913 = vrot.slane %v911, 4
      %v914 = vor.u32 %v913, %v909
      %v915 = vrot.slane %v914, 4
      %v917 = vshll.u32 %v791, 16
      %v919 = vrot.slane %v917, 5
      %v920 = vsel %vm197, %v915, %v919
      %v922 = vshrl.u32 %v792, 16
      %v924 = vrot.slane %v922, 4
      %v925 = vshll.u32 %v792, 16
      %v927 = vrot.slane %v925, 5
      %v928 = vor.u32 %v924, %v927
      %v929 = vrot.slane %v928, 4
      %v931 = vshll.u32 %v793, 16
      %v933 = vrot.slane %v931, 5
      %v934 = vsel %vm197, %v929, %v933
      %v935 = vshrl.u32 %v793, 16
      %v937 = vrot.slane %v935, 4
      %v938 = vor.u32 %v937, %v933
      %v939 = vrot.slane %v938, 4
      %v941 = vshll.u32 %v794, 16
      %v943 = vrot.slane %v941, 5
      %v944 = vsel %vm197, %v939, %v943
      %v946 = vshrl.u32 %v795, 16
      %v948 = vrot.slane %v946, 4
      %v949 = vshll.u32 %v795, 16
      %v951 = vrot.slane %v949, 5
      %v952 = vor.u32 %v948, %v951
      %v953 = vrot.slane %v952, 4
      %v955 = vshll.u32 %v796, 16
      %v957 = vrot.slane %v955, 5
      %v958 = vsel %vm197, %v953, %v957
      %v959 = vshrl.u32 %v796, 16
      %v961 = vrot.slane %v959, 4
      %v962 = vor.u32 %v961, %v957
      %v963 = vrot.slane %v962, 4
      %v965 = vshll.u32 %v797, 16
      %v967 = vrot.slane %v965, 5
      %v968 = vsel %vm197, %v963, %v967
      %v970 = vshrl.u32 %v798, 16
      %v972 = vrot.slane %v970, 4
      %v973 = vshll.u32 %v798, 16
      %v975 = vrot.slane %v973, 5
      %v976 = vor.u32 %v972, %v975
      %v977 = vrot.slane %v976, 4
      %v979 = vshll.u32 %v799, 16
      %v981 = vrot.slane %v979, 5
      %v982 = vsel %vm197, %v977, %v981
      %v983 = vshrl.u32 %v799, 16
      %v985 = vrot.slane %v983, 4
      %v986 = vor.u32 %v985, %v981
      %v987 = vrot.slane %v986, 4
      %v989 = vshll.u32 %v800, 16
      %v991 = vrot.slane %v989, 5
      %v992 = vsel %vm197, %v987, %v991
      %v1017 = vrot.slane %v777, 5
      %v1018 = vrot.slane %v1017, 4
      %v1019 = vrot.slane %v778, 5
      %v1020 = vsel %vm416, %v1018, %v1019
      %v1021 = vrot.slane %v1019, 4
      %v1022 = vrot.slane %v779, 5
      %v1023 = vsel %vm416, %v1021, %v1022
      %v1024 = vrot.slane %v780, 5
      %v1025 = vrot.slane %v1024, 4
      %v1026 = vrot.slane %v781, 5
      %v1027 = vsel %vm416, %v1025, %v1026
      %v1028 = vrot.slane %v1026, 4
      %v1029 = vrot.slane %v782, 5
      %v1030 = vsel %vm416, %v1028, %v1029
      %v1031 = vrot.slane %v783, 5
      %v1032 = vrot.slane %v1031, 4
      %v1033 = vrot.slane %v784, 5
      %v1034 = vsel %vm416, %v1032, %v1033
      %v1035 = vrot.slane %v1033, 4
      %v1036 = vrot.slane %v785, 5
      %v1037 = vsel %vm416, %v1035, %v1036
      %v1038 = vrot.slane %v786, 5
      %v1039 = vrot.slane %v1038, 4
      %v1040 = vrot.slane %v787, 5
      %v1041 = vsel %vm416, %v1039, %v1040
      %v1042 = vrot.slane %v1040, 4
      %v1043 = vrot.slane %v788, 5
      %v1044 = vsel %vm416, %v1042, %v1043
      %v1045 = vrot.slane %v789, 5
      %v1046 = vrot.slane %v1045, 4
      %v1047 = vrot.slane %v790, 5
      %v1048 = vsel %vm416, %v1046, %v1047
      %v1049 = vrot.slane %v1047, 4
      %v1050 = vrot.slane %v791, 5
      %v1051 = vsel %vm416, %v1049, %v1050
      %v1052 = vrot.slane %v792, 5
      %v1053 = vrot.slane %v1052, 4
      %v1054 = vrot.slane %v793, 5
      %v1055 = vsel %vm416, %v1053, %v1054
      %v1056 = vrot.slane %v1054, 4
      %v1057 = vrot.slane %v794, 5
      %v1058 = vsel %vm416, %v1056, %v1057
      %v1059 = vrot.slane %v795, 5
      %v1060 = vrot.slane %v1059, 4
      %v1061 = vrot.slane %v796, 5
      %v1062 = vsel %vm416, %v1060, %v1061
      %v1063 = vrot.slane %v1061, 4
      %v1064 = vrot.slane %v797, 5
      %v1065 = vsel %vm416, %v1063, %v1064
      %v1066 = vrot.slane %v798, 5
      %v1067 = vrot.slane %v1066, 4
      %v1068 = vrot.slane %v799, 5
      %v1069 = vsel %vm416, %v1067, %v1068
      %v1070 = vrot.slane %v1068, 4
      %v1071 = vrot.slane %v800, 5
      %v1072 = vsel %vm416, %v1070, %v1071
      %v1073 = vunpack.c.l.b16 %v171
      %v1074 = vunpack.c.l.b16 %v172
      %v1075 = vunpack.c.l.b16 %v174
      %v1076 = vunpack.c.l.b16 %v175
      %v1077 = vunpack.c.l.b16 %v177
      %v1078 = vunpack.c.l.b16 %v178
      %v1079 = vunpack.c.l.b16 %v180
      %v1080 = vunpack.c.l.b16 %v181
      %v1081 = vunpack.c.l.b16 %v183
      %v1082 = vunpack.c.l.b16 %v184
      %v1083 = vunpack.c.l.b16 %v186
      %v1084 = vunpack.c.l.b16 %v187
      %v1085 = vunpack.c.l.b16 %v189
      %v1086 = vunpack.c.l.b16 %v190
      %v1087 = vunpack.c.l.b16 %v192
      %v1088 = vunpack.c.l.b16 %v193
      %v1089 = vpack.c.b16 %v1074, %v1073
      %v1090 = vpack.c.b16 %v1076, %v1075
      %v1091 = vpack.c.b16 %v1078, %v1077
      %v1092 = vpack.c.b16 %v1080, %v1079
      %v1093 = vpack.c.b16 %v1082, %v1081
      %v1094 = vpack.c.b16 %v1084, %v1083
      %v1095 = vpack.c.b16 %v1086, %v1085
      %v1096 = vpack.c.b16 %v1088, %v1087
      %v1097 = vunpack.c.l.b16 %v211
      %v1098 = vunpack.c.l.b16 %v221
      %v1099 = vunpack.c.l.b16 %v235
      %v1100 = vunpack.c.l.b16 %v245
      %v1101 = vunpack.c.l.b16 %v259
      %v1102 = vunpack.c.l.b16 %v269
      %v1103 = vunpack.c.l.b16 %v283
      %v1104 = vunpack.c.l.b16 %v293
      %v1105 = vunpack.c.l.b16 %v307
      %v1106 = vunpack.c.l.b16 %v317
      %v1107 = vunpack.c.l.b16 %v331
      %v1108 = vunpack.c.l.b16 %v341
      %v1109 = vunpack.c.l.b16 %v355
      %v1110 = vunpack.c.l.b16 %v365
      %v1111 = vunpack.c.l.b16 %v379
      %v1112 = vunpack.c.l.b16 %v389
      %v1113 = vpack.c.b16 %v1098, %v1097
      %v1114 = vpack.c.b16 %v1100, %v1099
      %v1115 = vpack.c.b16 %v1102, %v1101
      %v1116 = vpack.c.b16 %v1104, %v1103
      %v1117 = vpack.c.b16 %v1106, %v1105
      %v1118 = vpack.c.b16 %v1108, %v1107
      %v1119 = vpack.c.b16 %v1110, %v1109
      %v1120 = vpack.c.b16 %v1112, %v1111
      %1121 = vrot.lane.b32.xlu0 %v1113, 4
      %v1122 = vpop.permute.xlu0 %1121
      %1123 = vrot.lane.b32.xlu0 %v1114, 4
      %v1124 = vpop.permute.xlu0 %1123
      %1125 = vrot.lane.b32.xlu0 %v1115, 4
      %v1126 = vpop.permute.xlu0 %1125
      %1127 = vrot.lane.b32.xlu0 %v1116, 4
      %v1128 = vpop.permute.xlu0 %1127
      %1129 = vrot.lane.b32.xlu0 %v1117, 4
      %v1130 = vpop.permute.xlu0 %1129
      %1131 = vrot.lane.b32.xlu0 %v1118, 4
      %v1132 = vpop.permute.xlu0 %1131
      %1133 = vrot.lane.b32.xlu0 %v1119, 4
      %v1134 = vpop.permute.xlu0 %1133
      %1135 = vrot.lane.b32.xlu0 %v1120, 4
      %v1136 = vpop.permute.xlu0 %1135
      %v1137 = vunpack.c.l.b16 %v420
      %v1138 = vunpack.c.l.b16 %v423
      %v1139 = vunpack.c.l.b16 %v427
      %v1140 = vunpack.c.l.b16 %v430
      %v1141 = vunpack.c.l.b16 %v434
      %v1142 = vunpack.c.l.b16 %v437
      %v1143 = vunpack.c.l.b16 %v441
      %v1144 = vunpack.c.l.b16 %v444
      %v1145 = vunpack.c.l.b16 %v448
      %v1146 = vunpack.c.l.b16 %v451
      %v1147 = vunpack.c.l.b16 %v455
      %v1148 = vunpack.c.l.b16 %v458
      %v1149 = vunpack.c.l.b16 %v462
      %v1150 = vunpack.c.l.b16 %v465
      %v1151 = vunpack.c.l.b16 %v469
      %v1152 = vunpack.c.l.b16 %v472
      %v1153 = vpack.c.b16 %v1138, %v1137
      %v1154 = vpack.c.b16 %v1140, %v1139
      %v1155 = vpack.c.b16 %v1142, %v1141
      %v1156 = vpack.c.b16 %v1144, %v1143
      %v1157 = vpack.c.b16 %v1146, %v1145
      %v1158 = vpack.c.b16 %v1148, %v1147
      %v1159 = vpack.c.b16 %v1150, %v1149
      %v1160 = vpack.c.b16 %v1152, %v1151
      %1161 = vrot.lane.b32.xlu0 %v1153, 8
      %v1162 = vpop.permute.xlu0 %1161
      %1163 = vrot.lane.b32.xlu0 %v1154, 8
      %v1164 = vpop.permute.xlu0 %1163
      %1165 = vrot.lane.b32.xlu0 %v1155, 8
      %v1166 = vpop.permute.xlu0 %1165
      %1167 = vrot.lane.b32.xlu0 %v1156, 8
      %v1168 = vpop.permute.xlu0 %1167
      %1169 = vrot.lane.b32.xlu0 %v1157, 8
      %v1170 = vpop.permute.xlu0 %1169
      %1171 = vrot.lane.b32.xlu0 %v1158, 8
      %v1172 = vpop.permute.xlu0 %1171
      %1173 = vrot.lane.b32.xlu0 %v1159, 8
      %v1174 = vpop.permute.xlu0 %1173
      %1175 = vrot.lane.b32.xlu0 %v1160, 8
      %v1176 = vpop.permute.xlu0 %1175
      %v1177 = vunpack.c.l.b16 %v477
      %v1178 = vunpack.c.l.b16 %v478
      %v1179 = vunpack.c.l.b16 %v480
      %v1180 = vunpack.c.l.b16 %v481
      %v1181 = vunpack.c.l.b16 %v483
      %v1182 = vunpack.c.l.b16 %v484
      %v1183 = vunpack.c.l.b16 %v486
      %v1184 = vunpack.c.l.b16 %v487
      %v1185 = vunpack.c.l.b16 %v489
      %v1186 = vunpack.c.l.b16 %v490
      %v1187 = vunpack.c.l.b16 %v492
      %v1188 = vunpack.c.l.b16 %v493
      %v1189 = vunpack.c.l.b16 %v495
      %v1190 = vunpack.c.l.b16 %v496
      %v1191 = vunpack.c.l.b16 %v498
      %v1192 = vunpack.c.l.b16 %v499
      %v1193 = vpack.c.b16 %v1178, %v1177
      %v1194 = vpack.c.b16 %v1180, %v1179
      %v1195 = vpack.c.b16 %v1182, %v1181
      %v1196 = vpack.c.b16 %v1184, %v1183
      %v1197 = vpack.c.b16 %v1186, %v1185
      %v1198 = vpack.c.b16 %v1188, %v1187
      %v1199 = vpack.c.b16 %v1190, %v1189
      %v1200 = vpack.c.b16 %v1192, %v1191
      %1201 = vrot.lane.b32.xlu0 %v1193, 12
      %v1202 = vpop.permute.xlu0 %1201
      %1203 = vrot.lane.b32.xlu0 %v1194, 12
      %v1204 = vpop.permute.xlu0 %1203
      %1205 = vrot.lane.b32.xlu0 %v1195, 12
      %v1206 = vpop.permute.xlu0 %1205
      %1207 = vrot.lane.b32.xlu0 %v1196, 12
      %v1208 = vpop.permute.xlu0 %1207
      %1209 = vrot.lane.b32.xlu0 %v1197, 12
      %v1210 = vpop.permute.xlu0 %1209
      %1211 = vrot.lane.b32.xlu0 %v1198, 12
      %v1212 = vpop.permute.xlu0 %1211
      %1213 = vrot.lane.b32.xlu0 %v1199, 12
      %v1214 = vpop.permute.xlu0 %1213
      %1215 = vrot.lane.b32.xlu0 %v1200, 12
      %v1216 = vpop.permute.xlu0 %1215
      %v1217 = vunpack.c.l.b16 %v514
      %v1218 = vunpack.c.l.b16 %v524
      %v1219 = vunpack.c.l.b16 %v538
      %v1220 = vunpack.c.l.b16 %v548
      %v1221 = vunpack.c.l.b16 %v562
      %v1222 = vunpack.c.l.b16 %v572
      %v1223 = vunpack.c.l.b16 %v586
      %v1224 = vunpack.c.l.b16 %v596
      %v1225 = vunpack.c.l.b16 %v610
      %v1226 = vunpack.c.l.b16 %v620
      %v1227 = vunpack.c.l.b16 %v634
      %v1228 = vunpack.c.l.b16 %v644
      %v1229 = vunpack.c.l.b16 %v658
      %v1230 = vunpack.c.l.b16 %v668
      %v1231 = vunpack.c.l.b16 %v682
      %v1232 = vunpack.c.l.b16 %v692
      %v1233 = vpack.c.b16 %v1218, %v1217
      %v1234 = vpack.c.b16 %v1220, %v1219
      %v1235 = vpack.c.b16 %v1222, %v1221
      %v1236 = vpack.c.b16 %v1224, %v1223
      %v1237 = vpack.c.b16 %v1226, %v1225
      %v1238 = vpack.c.b16 %v1228, %v1227
      %v1239 = vpack.c.b16 %v1230, %v1229
      %v1240 = vpack.c.b16 %v1232, %v1231
      %1241 = vrot.lane.b32.xlu0 %v1233, 16
      %v1242 = vpop.permute.xlu0 %1241
      %1243 = vrot.lane.b32.xlu0 %v1234, 16
      %v1244 = vpop.permute.xlu0 %1243
      %1245 = vrot.lane.b32.xlu0 %v1235, 16
      %v1246 = vpop.permute.xlu0 %1245
      %1247 = vrot.lane.b32.xlu0 %v1236, 16
      %v1248 = vpop.permute.xlu0 %1247
      %1249 = vrot.lane.b32.xlu0 %v1237, 16
      %v1250 = vpop.permute.xlu0 %1249
      %1251 = vrot.lane.b32.xlu0 %v1238, 16
      %v1252 = vpop.permute.xlu0 %1251
      %1253 = vrot.lane.b32.xlu0 %v1239, 16
      %v1254 = vpop.permute.xlu0 %1253
      %1255 = vrot.lane.b32.xlu0 %v1240, 16
      %v1256 = vpop.permute.xlu0 %1255
      %v1257 = vunpack.c.l.b16 %v720
      %v1258 = vunpack.c.l.b16 %v723
      %v1259 = vunpack.c.l.b16 %v727
      %v1260 = vunpack.c.l.b16 %v730
      %v1261 = vunpack.c.l.b16 %v734
      %v1262 = vunpack.c.l.b16 %v737
      %v1263 = vunpack.c.l.b16 %v741
      %v1264 = vunpack.c.l.b16 %v744
      %v1265 = vunpack.c.l.b16 %v748
      %v1266 = vunpack.c.l.b16 %v751
      %v1267 = vunpack.c.l.b16 %v755
      %v1268 = vunpack.c.l.b16 %v758
      %v1269 = vunpack.c.l.b16 %v762
      %v1270 = vunpack.c.l.b16 %v765
      %v1271 = vunpack.c.l.b16 %v769
      %v1272 = vunpack.c.l.b16 %v772
      %v1273 = vpack.c.b16 %v1258, %v1257
      %v1274 = vpack.c.b16 %v1260, %v1259
      %v1275 = vpack.c.b16 %v1262, %v1261
      %v1276 = vpack.c.b16 %v1264, %v1263
      %v1277 = vpack.c.b16 %v1266, %v1265
      %v1278 = vpack.c.b16 %v1268, %v1267
      %v1279 = vpack.c.b16 %v1270, %v1269
      %v1280 = vpack.c.b16 %v1272, %v1271
      %1281 = vrot.lane.b32.xlu0 %v1273, 20
      %v1282 = vpop.permute.xlu0 %1281
      %1283 = vrot.lane.b32.xlu0 %v1274, 20
      %v1284 = vpop.permute.xlu0 %1283
      %1285 = vrot.lane.b32.xlu0 %v1275, 20
      %v1286 = vpop.permute.xlu0 %1285
      %1287 = vrot.lane.b32.xlu0 %v1276, 20
      %v1288 = vpop.permute.xlu0 %1287
      %1289 = vrot.lane.b32.xlu0 %v1277, 20
      %v1290 = vpop.permute.xlu0 %1289
      %1291 = vrot.lane.b32.xlu0 %v1278, 20
      %v1292 = vpop.permute.xlu0 %1291
      %1293 = vrot.lane.b32.xlu0 %v1279, 20
      %v1294 = vpop.permute.xlu0 %1293
      %1295 = vrot.lane.b32.xlu0 %v1280, 20
      %v1296 = vpop.permute.xlu0 %1295
      %v1297 = vunpack.c.l.b16 %v777
      %v1298 = vunpack.c.l.b16 %v778
      %v1299 = vunpack.c.l.b16 %v780
      %v1300 = vunpack.c.l.b16 %v781
      %v1301 = vunpack.c.l.b16 %v783
      %v1302 = vunpack.c.l.b16 %v784
      %v1303 = vunpack.c.l.b16 %v786
      %v1304 = vunpack.c.l.b16 %v787
      %v1305 = vunpack.c.l.b16 %v789
      %v1306 = vunpack.c.l.b16 %v790
      %v1307 = vunpack.c.l.b16 %v792
      %v1308 = vunpack.c.l.b16 %v793
      %v1309 = vunpack.c.l.b16 %v795
      %v1310 = vunpack.c.l.b16 %v796
      %v1311 = vunpack.c.l.b16 %v798
      %v1312 = vunpack.c.l.b16 %v799
      %v1313 = vpack.c.b16 %v1298, %v1297
      %v1314 = vpack.c.b16 %v1300, %v1299
      %v1315 = vpack.c.b16 %v1302, %v1301
      %v1316 = vpack.c.b16 %v1304, %v1303
      %v1317 = vpack.c.b16 %v1306, %v1305
      %v1318 = vpack.c.b16 %v1308, %v1307
      %v1319 = vpack.c.b16 %v1310, %v1309
      %v1320 = vpack.c.b16 %v1312, %v1311
      %1321 = vrot.lane.b32.xlu0 %v1313, 24
      %v1322 = vpop.permute.xlu0 %1321
      %1323 = vrot.lane.b32.xlu0 %v1314, 24
      %v1324 = vpop.permute.xlu0 %1323
      %1325 = vrot.lane.b32.xlu0 %v1315, 24
      %v1326 = vpop.permute.xlu0 %1325
      %1327 = vrot.lane.b32.xlu0 %v1316, 24
      %v1328 = vpop.permute.xlu0 %1327
      %1329 = vrot.lane.b32.xlu0 %v1317, 24
      %v1330 = vpop.permute.xlu0 %1329
      %1331 = vrot.lane.b32.xlu0 %v1318, 24
      %v1332 = vpop.permute.xlu0 %1331
      %1333 = vrot.lane.b32.xlu0 %v1319, 24
      %v1334 = vpop.permute.xlu0 %1333
      %1335 = vrot.lane.b32.xlu0 %v1320, 24
      %v1336 = vpop.permute.xlu0 %1335
      %v1337 = vunpack.c.l.b16 %v814
      %v1338 = vunpack.c.l.b16 %v824
      %v1339 = vunpack.c.l.b16 %v838
      %v1340 = vunpack.c.l.b16 %v848
      %v1341 = vunpack.c.l.b16 %v862
      %v1342 = vunpack.c.l.b16 %v872
      %v1343 = vunpack.c.l.b16 %v886
      %v1344 = vunpack.c.l.b16 %v896
      %v1345 = vunpack.c.l.b16 %v910
      %v1346 = vunpack.c.l.b16 %v920
      %v1347 = vunpack.c.l.b16 %v934
      %v1348 = vunpack.c.l.b16 %v944
      %v1349 = vunpack.c.l.b16 %v958
      %v1350 = vunpack.c.l.b16 %v968
      %v1351 = vunpack.c.l.b16 %v982
      %v1352 = vunpack.c.l.b16 %v992
      %v1353 = vpack.c.b16 %v1338, %v1337
      %v1354 = vpack.c.b16 %v1340, %v1339
      %v1355 = vpack.c.b16 %v1342, %v1341
      %v1356 = vpack.c.b16 %v1344, %v1343
      %v1357 = vpack.c.b16 %v1346, %v1345
      %v1358 = vpack.c.b16 %v1348, %v1347
      %v1359 = vpack.c.b16 %v1350, %v1349
      %v1360 = vpack.c.b16 %v1352, %v1351
      %1361 = vrot.lane.b32.xlu0 %v1353, 28
      %v1362 = vpop.permute.xlu0 %1361
      %1363 = vrot.lane.b32.xlu0 %v1354, 28
      %v1364 = vpop.permute.xlu0 %1363
      %1365 = vrot.lane.b32.xlu0 %v1355, 28
      %v1366 = vpop.permute.xlu0 %1365
      %1367 = vrot.lane.b32.xlu0 %v1356, 28
      %v1368 = vpop.permute.xlu0 %1367
      %1369 = vrot.lane.b32.xlu0 %v1357, 28
      %v1370 = vpop.permute.xlu0 %1369
      %1371 = vrot.lane.b32.xlu0 %v1358, 28
      %v1372 = vpop.permute.xlu0 %1371
      %1373 = vrot.lane.b32.xlu0 %v1359, 28
      %v1374 = vpop.permute.xlu0 %1373
      %1375 = vrot.lane.b32.xlu0 %v1360, 28
      %v1376 = vpop.permute.xlu0 %1375
      %v1377 = vunpack.c.l.b16 %v1020
      %v1378 = vunpack.c.l.b16 %v1023
      %v1379 = vunpack.c.l.b16 %v1027
      %v1380 = vunpack.c.l.b16 %v1030
      %v1381 = vunpack.c.l.b16 %v1034
      %v1382 = vunpack.c.l.b16 %v1037
      %v1383 = vunpack.c.l.b16 %v1041
      %v1384 = vunpack.c.l.b16 %v1044
      %v1385 = vunpack.c.l.b16 %v1048
      %v1386 = vunpack.c.l.b16 %v1051
      %v1387 = vunpack.c.l.b16 %v1055
      %v1388 = vunpack.c.l.b16 %v1058
      %v1389 = vunpack.c.l.b16 %v1062
      %v1390 = vunpack.c.l.b16 %v1065
      %v1391 = vunpack.c.l.b16 %v1069
      %v1392 = vunpack.c.l.b16 %v1072
      %v1393 = vpack.c.b16 %v1378, %v1377
      %v1394 = vpack.c.b16 %v1380, %v1379
      %v1395 = vpack.c.b16 %v1382, %v1381
      %v1396 = vpack.c.b16 %v1384, %v1383
      %v1397 = vpack.c.b16 %v1386, %v1385
      %v1398 = vpack.c.b16 %v1388, %v1387
      %v1399 = vpack.c.b16 %v1390, %v1389
      %v1400 = vpack.c.b16 %v1392, %v1391
      %1401 = vrot.lane.b32.xlu0 %v1393, 32
      %v1402 = vpop.permute.xlu0 %1401
      %1403 = vrot.lane.b32.xlu0 %v1394, 32
      %v1404 = vpop.permute.xlu0 %1403
      %1405 = vrot.lane.b32.xlu0 %v1395, 32
      %v1406 = vpop.permute.xlu0 %1405
      %1407 = vrot.lane.b32.xlu0 %v1396, 32
      %v1408 = vpop.permute.xlu0 %1407
      %1409 = vrot.lane.b32.xlu0 %v1397, 32
      %v1410 = vpop.permute.xlu0 %1409
      %1411 = vrot.lane.b32.xlu0 %v1398, 32
      %v1412 = vpop.permute.xlu0 %1411
      %1413 = vrot.lane.b32.xlu0 %v1399, 32
      %v1414 = vpop.permute.xlu0 %1413
      %1415 = vrot.lane.b32.xlu0 %v1400, 32
      %v1416 = vpop.permute.xlu0 %1415
      %vm1417 = vcmask 31744
      %v1420 = vsel %vm1417, %v1089, %v1122
      %v1423 = vsel %vm1417, %v1090, %v1124
      %v1426 = vsel %vm1417, %v1091, %v1126
      %v1429 = vsel %vm1417, %v1092, %v1128
      %v1432 = vsel %vm1417, %v1093, %v1130
      %v1435 = vsel %vm1417, %v1094, %v1132
      %v1438 = vsel %vm1417, %v1095, %v1134
      %v1441 = vsel %vm1417, %v1096, %v1136
      %vm1442 = vcmask 64512
      %v1444 = vsel %vm1442, %v1420, %v1162
      %v1446 = vsel %vm1442, %v1423, %v1164
      %v1448 = vsel %vm1442, %v1426, %v1166
      %v1450 = vsel %vm1442, %v1429, %v1168
      %v1452 = vsel %vm1442, %v1432, %v1170
      %v1454 = vsel %vm1442, %v1435, %v1172
      %v1456 = vsel %vm1442, %v1438, %v1174
      %v1458 = vsel %vm1442, %v1441, %v1176
      %vm1459 = vcmask 97280
      %v1461 = vsel %vm1459, %v1444, %v1202
      %v1463 = vsel %vm1459, %v1446, %v1204
      %v1465 = vsel %vm1459, %v1448, %v1206
      %v1467 = vsel %vm1459, %v1450, %v1208
      %v1469 = vsel %vm1459, %v1452, %v1210
      %v1471 = vsel %vm1459, %v1454, %v1212
      %v1473 = vsel %vm1459, %v1456, %v1214
      %v1475 = vsel %vm1459, %v1458, %v1216
      %vm1476 = vcmask 130048
      %v1478 = vsel %vm1476, %v1461, %v1242
      %v1480 = vsel %vm1476, %v1463, %v1244
      %v1482 = vsel %vm1476, %v1465, %v1246
      %v1484 = vsel %vm1476, %v1467, %v1248
      %v1486 = vsel %vm1476, %v1469, %v1250
      %v1488 = vsel %vm1476, %v1471, %v1252
      %v1490 = vsel %vm1476, %v1473, %v1254
      %v1492 = vsel %vm1476, %v1475, %v1256
      %vm1493 = vcmask 162816
      %v1495 = vsel %vm1493, %v1478, %v1282
      %v1497 = vsel %vm1493, %v1480, %v1284
      %v1499 = vsel %vm1493, %v1482, %v1286
      %v1501 = vsel %vm1493, %v1484, %v1288
      %v1503 = vsel %vm1493, %v1486, %v1290
      %v1505 = vsel %vm1493, %v1488, %v1292
      %v1507 = vsel %vm1493, %v1490, %v1294
      %v1509 = vsel %vm1493, %v1492, %v1296
      %vm1510 = vcmask 195584
      %v1512 = vsel %vm1510, %v1495, %v1322
      %v1514 = vsel %vm1510, %v1497, %v1324
      %v1516 = vsel %vm1510, %v1499, %v1326
      %v1518 = vsel %vm1510, %v1501, %v1328
      %v1520 = vsel %vm1510, %v1503, %v1330
      %v1522 = vsel %vm1510, %v1505, %v1332
      %v1524 = vsel %vm1510, %v1507, %v1334
      %v1526 = vsel %vm1510, %v1509, %v1336
      %vm1527 = vcmask 228352
      %v1529 = vsel %vm1527, %v1512, %v1362
      %v1531 = vsel %vm1527, %v1514, %v1364
      %v1533 = vsel %vm1527, %v1516, %v1366
      %v1535 = vsel %vm1527, %v1518, %v1368
      %v1537 = vsel %vm1527, %v1520, %v1370
      %v1539 = vsel %vm1527, %v1522, %v1372
      %v1541 = vsel %vm1527, %v1524, %v1374
      %v1543 = vsel %vm1527, %v1526, %v1376
      %vm1544 = vcmask 261120
      %v1546 = vsel %vm1544, %v1529, %v1402
      %v1548 = vsel %vm1544, %v1531, %v1404
      %v1550 = vsel %vm1544, %v1533, %v1406
      %v1552 = vsel %vm1544, %v1535, %v1408
      %v1554 = vsel %vm1544, %v1537, %v1410
      %v1556 = vsel %vm1544, %v1539, %v1412
      %v1558 = vsel %vm1544, %v1541, %v1414
      %v1560 = vsel %vm1544, %v1543, %v1416
      %v1561 = vld [vmem:[%s1] sm:$0xf]
      %v1562 = vld [vmem:[%s1 + $0x4] sm:$0xf]
      %v1563 = vld [vmem:[%s1 + $0x8] sm:$0xf]
      %v1564 = vld [vmem:[%s1 + $0xc] sm:$0xf]
      %v1565 = vld [vmem:[%s1 + $0x10] sm:$0xf]
      %v1566 = vld [vmem:[%s1 + $0x14] sm:$0xf]
      %v1567 = vld [vmem:[%s1 + $0x18] sm:$0xf]
      %v1568 = vld [vmem:[%s1 + $0x1c] sm:$0xf]
      %v1569 = vld [vmem:[%s1 + $0x20] sm:$0xf]
      %v1570 = vld [vmem:[%s1 + $0x24] sm:$0xf]
      %v1571 = vld [vmem:[%s1 + $0x28] sm:$0xf]
      %v1572 = vld [vmem:[%s1 + $0x2c] sm:$0xf]
      %v1573 = vld [vmem:[%s1 + $0x30] sm:$0xf]
      %v1574 = vld [vmem:[%s1 + $0x34] sm:$0xf]
      %v1575 = vld [vmem:[%s1 + $0x38] sm:$0xf]
      %v1576 = vld [vmem:[%s1 + $0x3c] sm:$0xf]
      %v1593 = vunpack.c.l.b16 %v1561
      %v1594 = vunpack.c.l.b16 %v1562
      %v1595 = vunpack.c.l.b16 %v1563
      %v1596 = vunpack.c.l.b16 %v1564
      %v1597 = vunpack.c.l.b16 %v1565
      %v1598 = vunpack.c.l.b16 %v1566
      %v1599 = vunpack.c.l.b16 %v1567
      %v1600 = vunpack.c.l.b16 %v1568
      %v1601 = vunpack.c.l.b16 %v1569
      %v1602 = vunpack.c.l.b16 %v1570
      %v1603 = vunpack.c.l.b16 %v1571
      %v1604 = vunpack.c.l.b16 %v1572
      %v1605 = vunpack.c.l.b16 %v1573
      %v1606 = vunpack.c.l.b16 %v1574
      %v1607 = vunpack.c.l.b16 %v1575
      %v1608 = vunpack.c.l.b16 %v1576
      %v1609 = vpack.c.b16 %v1594, %v1593
      %v1610 = vpack.c.b16 %v1596, %v1595
      %v1611 = vpack.c.b16 %v1598, %v1597
      %v1612 = vpack.c.b16 %v1600, %v1599
      %v1613 = vpack.c.b16 %v1602, %v1601
      %v1614 = vpack.c.b16 %v1604, %v1603
      %v1615 = vpack.c.b16 %v1606, %v1605
      %v1616 = vpack.c.b16 %v1608, %v1607
      %vm1617 = vcmask 293888
      %v1619 = vsel %vm1617, %v1609, 0
      %v1622 = vsel %vm1617, %v1610, 0
      %v1625 = vsel %vm1617, %v1611, 0
      %v1628 = vsel %vm1617, %v1612, 0
      %v1631 = vsel %vm1617, %v1613, 0
      %v1634 = vsel %vm1617, %v1614, 0
      %v1637 = vsel %vm1617, %v1615, 0
      %v1640 = vsel %vm1617, %v1616, 0
      %v1642 = vsel %vm1617, %v1546, 0
      %v1644 = vsel %vm1617, %v1548, 0
      %v1646 = vsel %vm1617, %v1550, 0
      %v1648 = vsel %vm1617, %v1552, 0
      %v1650 = vsel %vm1617, %v1554, 0
      %v1652 = vsel %vm1617, %v1556, 0
      %v1654 = vsel %vm1617, %v1558, 0
      %v1656 = vsel %vm1617, %v1560, 0
      %1658 = vmatprep.subr.bf16.mxu0 0
      %1659 = vmatpush1.bf16.xpose.msra.mxu0 %v1656
      %1660 = vmatprep.subr.bf16.mxu0 0
      %1661 = vmatpush1.bf16.xpose.msra.mxu0 %v1654
      %1662 = vmatprep.subr.bf16.mxu0 0
      %1663 = vmatpush1.bf16.xpose.msra.mxu0 %v1652
      %1664 = vmatprep.subr.bf16.mxu0 0
      %1665 = vmatpush1.bf16.xpose.msra.mxu0 %v1650
      %1666 = vmatprep.subr.bf16.mxu0 0
      %1667 = vmatpush1.bf16.xpose.msra.mxu0 %v1648
      %1668 = vmatprep.subr.bf16.mxu0 0
      %1669 = vmatpush1.bf16.xpose.msra.mxu0 %v1646
      %1670 = vmatprep.subr.bf16.mxu0 0
      %1671 = vmatpush1.bf16.xpose.msra.mxu0 %v1644
      %1672 = vmatprep.subr.bf16.mxu0 0
      %1673 = vmatpush1.bf16.xpose.msra.mxu0 %v1642
      %1674 = vmatprep.subr.bf16.mxu0 0
      %1675 = vmatpush2.bf16.xpose.msra.mxu0 0
      %1676 = vmatprep.subr.bf16.mxu0 0
      %1677 = vmatpush2.bf16.xpose.msra.mxu0 0
      %1678 = vmatprep.subr.bf16.mxu0 0
      %1679 = vmatpush2.bf16.xpose.msra.mxu0 0
      %1680 = vmatprep.subr.bf16.mxu0 0
      %1681 = vmatpush2.bf16.xpose.msra.mxu0 0
      %1682 = vmatprep.subr.bf16.mxu0 0
      %1683 = vmatpush2.bf16.xpose.msra.mxu0 0
      %1684 = vmatprep.subr.bf16.mxu0 0
      %1685 = vmatpush2.bf16.xpose.msra.mxu0 0
      %1686 = vmatprep.subr.bf16.mxu0 0
      %1687 = vmatpush2.bf16.xpose.msra.mxu0 0
      %1688 = vmatprep.subr.bf16.mxu0 0
      %1689 = vmatpush2.bf16.xpose.msra.mxu0 0
      %1690 = vmatprep.mubr.bf16.mxu0 0
      %1691 = vmatmul.mubr.bf16.gmra.mxu0 %v1619
      %v1692 = vpop.f32.mrf.mxu0
      %v1693 = vadd.f32 0.0, %v1692
      %v1694 = vpop.f32.mrf.mxu0
      %v1695 = vpop.f32.mrf.mxu0
      %v1696 = vadd.f32 0.0, %v1695
      %v1697 = vpop.f32.mrf.mxu0
      %1698 = vmatprep.mubr.bf16.mxu0 0
      %1699 = vmatmul.mubr.bf16.gmra.mxu0 %v1622
      %v1700 = vpop.f32.mrf.mxu0
      %v1701 = vadd.f32 0.0, %v1700
      %v1702 = vpop.f32.mrf.mxu0
      %v1703 = vpop.f32.mrf.mxu0
      %v1704 = vadd.f32 0.0, %v1703
      %v1705 = vpop.f32.mrf.mxu0
      %1706 = vmatprep.mubr.bf16.mxu0 0
      %1707 = vmatmul.mubr.bf16.gmra.mxu0 %v1625
      %v1708 = vpop.f32.mrf.mxu0
      %v1709 = vadd.f32 0.0, %v1708
      %v1710 = vpop.f32.mrf.mxu0
      %v1711 = vpop.f32.mrf.mxu0
      %v1712 = vadd.f32 0.0, %v1711
      %v1713 = vpop.f32.mrf.mxu0
      %1714 = vmatprep.mubr.bf16.mxu0 0
      %1715 = vmatmul.mubr.bf16.gmra.mxu0 %v1628
      %v1716 = vpop.f32.mrf.mxu0
      %v1717 = vadd.f32 0.0, %v1716
      %v1718 = vpop.f32.mrf.mxu0
      %v1719 = vpop.f32.mrf.mxu0
      %v1720 = vadd.f32 0.0, %v1719
      %v1721 = vpop.f32.mrf.mxu0
      %1722 = vmatprep.mubr.bf16.mxu0 0
      %1723 = vmatmul.mubr.bf16.gmra.mxu0 %v1631
      %v1724 = vpop.f32.mrf.mxu0
      %v1725 = vadd.f32 0.0, %v1724
      %v1726 = vpop.f32.mrf.mxu0
      %v1727 = vpop.f32.mrf.mxu0
      %v1728 = vadd.f32 0.0, %v1727
      %v1729 = vpop.f32.mrf.mxu0
      %1730 = vmatprep.mubr.bf16.mxu0 0
      %1731 = vmatmul.mubr.bf16.gmra.mxu0 %v1634
      %v1732 = vpop.f32.mrf.mxu0
      %v1733 = vadd.f32 0.0, %v1732
      %v1734 = vpop.f32.mrf.mxu0
      %v1735 = vpop.f32.mrf.mxu0
      %v1736 = vadd.f32 0.0, %v1735
      %v1737 = vpop.f32.mrf.mxu0
      %1738 = vmatprep.mubr.bf16.mxu0 0
      %1739 = vmatmul.mubr.bf16.gmra.mxu0 %v1637
      %v1740 = vpop.f32.mrf.mxu0
      %v1741 = vadd.f32 0.0, %v1740
      %v1742 = vpop.f32.mrf.mxu0
      %v1743 = vpop.f32.mrf.mxu0
      %v1744 = vadd.f32 0.0, %v1743
      %v1745 = vpop.f32.mrf.mxu0
      %1746 = vmatprep.mubr.bf16.mxu0 0
      %1747 = vmatmul.mubr.bf16.gmra.mxu0 %v1640
      %v1748 = vpop.f32.mrf.mxu0
      %v1749 = vadd.f32 0.0, %v1748
      %v1750 = vpop.f32.mrf.mxu0
      %v1751 = vpop.f32.mrf.mxu0
      %v1752 = vadd.f32 0.0, %v1751
      %v1753 = vpop.f32.mrf.mxu0
      %1754 = vdwg.mxu0
      %1755 = vadd.xlane.f32.xlu0 %v1693
      %v1756 = vpop.xlane.xlu0 %1755
      %1757 = vadd.xlane.f32.xlu0 %v1696
      %v1758 = vpop.xlane.xlu0 %1757
      %1759 = vadd.xlane.f32.xlu0 %v1701
      %v1760 = vpop.xlane.xlu0 %1759
      %1761 = vadd.xlane.f32.xlu0 %v1704
      %v1762 = vpop.xlane.xlu0 %1761
      %1763 = vadd.xlane.f32.xlu0 %v1709
      %v1764 = vpop.xlane.xlu0 %1763
      %1765 = vadd.xlane.f32.xlu0 %v1712
      %v1766 = vpop.xlane.xlu0 %1765
      %1767 = vadd.xlane.f32.xlu0 %v1717
      %v1768 = vpop.xlane.xlu0 %1767
      %1769 = vadd.xlane.f32.xlu0 %v1720
      %v1770 = vpop.xlane.xlu0 %1769
      %1771 = vadd.xlane.f32.xlu0 %v1725
      %v1772 = vpop.xlane.xlu0 %1771
      %1773 = vadd.xlane.f32.xlu0 %v1728
      %v1774 = vpop.xlane.xlu0 %1773
      %1775 = vadd.xlane.f32.xlu0 %v1733
      %v1776 = vpop.xlane.xlu0 %1775
      %1777 = vadd.xlane.f32.xlu0 %v1736
      %v1778 = vpop.xlane.xlu0 %1777
      %1779 = vadd.xlane.f32.xlu0 %v1741
      %v1780 = vpop.xlane.xlu0 %1779
      %1781 = vadd.xlane.f32.xlu0 %v1744
      %v1782 = vpop.xlane.xlu0 %1781
      %1783 = vadd.xlane.f32.xlu0 %v1749
      %v1784 = vpop.xlane.xlu0 %1783
      %1785 = vadd.xlane.f32.xlu0 %v1752
      %v1786 = vpop.xlane.xlu0 %1785
      %v1787 = vmul.f32 %v1756, 0.0078125
      %v1788 = vmul.f32 %v1758, 0.0078125
      %v1789 = vmul.f32 %v1760, 0.0078125
      %v1790 = vmul.f32 %v1762, 0.0078125
      %v1791 = vmul.f32 %v1764, 0.0078125
      %v1792 = vmul.f32 %v1766, 0.0078125
      %v1793 = vmul.f32 %v1768, 0.0078125
      %v1794 = vmul.f32 %v1770, 0.0078125
      %v1795 = vmul.f32 %v1772, 0.0078125
      %v1796 = vmul.f32 %v1774, 0.0078125
      %v1797 = vmul.f32 %v1776, 0.0078125
      %v1798 = vmul.f32 %v1778, 0.0078125
      %v1799 = vmul.f32 %v1780, 0.0078125
      %v1800 = vmul.f32 %v1782, 0.0078125
      %v1801 = vmul.f32 %v1784, 0.0078125
      %v1802 = vmul.f32 %v1786, 0.0078125
      %v1803 = vsub.f32 %v1693, %v1787
      %v1804 = vsub.f32 %v1696, %v1788
      %v1805 = vsub.f32 %v1701, %v1789
      %v1806 = vsub.f32 %v1704, %v1790
      %v1807 = vsub.f32 %v1709, %v1791
      %v1808 = vsub.f32 %v1712, %v1792
      %v1809 = vsub.f32 %v1717, %v1793
      %v1810 = vsub.f32 %v1720, %v1794
      %v1811 = vsub.f32 %v1725, %v1795
      %v1812 = vsub.f32 %v1728, %v1796
      %v1813 = vsub.f32 %v1733, %v1797
      %v1814 = vsub.f32 %v1736, %v1798
      %v1815 = vsub.f32 %v1741, %v1799
      %v1816 = vsub.f32 %v1744, %v1800
      %v1817 = vsub.f32 %v1749, %v1801
      %v1818 = vsub.f32 %v1752, %v1802
      %v1819 = vmul.f32 %v1803, %v1803
      %v1820 = vmul.f32 %v1804, %v1804
      %v1821 = vmul.f32 %v1805, %v1805
      %v1822 = vmul.f32 %v1806, %v1806
      %v1823 = vmul.f32 %v1807, %v1807
      %v1824 = vmul.f32 %v1808, %v1808
      %v1825 = vmul.f32 %v1809, %v1809
      %v1826 = vmul.f32 %v1810, %v1810
      %v1827 = vmul.f32 %v1811, %v1811
      %v1828 = vmul.f32 %v1812, %v1812
      %v1829 = vmul.f32 %v1813, %v1813
      %v1830 = vmul.f32 %v1814, %v1814
      %v1831 = vmul.f32 %v1815, %v1815
      %v1832 = vmul.f32 %v1816, %v1816
      %v1833 = vmul.f32 %v1817, %v1817
      %v1834 = vmul.f32 %v1818, %v1818
      %1835 = vadd.xlane.f32.xlu0 %v1819
      %v1836 = vpop.xlane.xlu0 %1835
      %1837 = vadd.xlane.f32.xlu0 %v1820
      %v1838 = vpop.xlane.xlu0 %1837
      %1839 = vadd.xlane.f32.xlu0 %v1821
      %v1840 = vpop.xlane.xlu0 %1839
      %1841 = vadd.xlane.f32.xlu0 %v1822
      %v1842 = vpop.xlane.xlu0 %1841
      %1843 = vadd.xlane.f32.xlu0 %v1823
      %v1844 = vpop.xlane.xlu0 %1843
      %1845 = vadd.xlane.f32.xlu0 %v1824
      %v1846 = vpop.xlane.xlu0 %1845
      %1847 = vadd.xlane.f32.xlu0 %v1825
      %v1848 = vpop.xlane.xlu0 %1847
      %1849 = vadd.xlane.f32.xlu0 %v1826
      %v1850 = vpop.xlane.xlu0 %1849
      %1851 = vadd.xlane.f32.xlu0 %v1827
      %v1852 = vpop.xlane.xlu0 %1851
      %1853 = vadd.xlane.f32.xlu0 %v1828
      %v1854 = vpop.xlane.xlu0 %1853
      %1855 = vadd.xlane.f32.xlu0 %v1829
      %v1856 = vpop.xlane.xlu0 %1855
      %1857 = vadd.xlane.f32.xlu0 %v1830
      %v1858 = vpop.xlane.xlu0 %1857
      %1859 = vadd.xlane.f32.xlu0 %v1831
      %v1860 = vpop.xlane.xlu0 %1859
      %1861 = vadd.xlane.f32.xlu0 %v1832
      %v1862 = vpop.xlane.xlu0 %1861
      %1863 = vadd.xlane.f32.xlu0 %v1833
      %v1864 = vpop.xlane.xlu0 %1863
      %1865 = vadd.xlane.f32.xlu0 %v1834
      %v1866 = vpop.xlane.xlu0 %1865
      %vm1867 = vcmask 7168
      %v1868 = vsel %vm1867, %v1756, %v1836
      %v1869 = vsel %vm1867, %v1758, %v1838
      %v1870 = vsel %vm1867, %v1760, %v1840
      %v1871 = vsel %vm1867, %v1762, %v1842
      %v1872 = vsel %vm1867, %v1764, %v1844
      %v1873 = vsel %vm1867, %v1766, %v1846
      %v1874 = vsel %vm1867, %v1768, %v1848
      %v1875 = vsel %vm1867, %v1770, %v1850
      %v1876 = vsel %vm1867, %v1772, %v1852
      %v1877 = vsel %vm1867, %v1774, %v1854
      %v1878 = vsel %vm1867, %v1776, %v1856
      %v1879 = vsel %vm1867, %v1778, %v1858
      %v1880 = vsel %vm1867, %v1780, %v1860
      %v1881 = vsel %vm1867, %v1782, %v1862
      %v1882 = vsel %vm1867, %v1784, %v1864
      %v1883 = vsel %vm1867, %v1786, %v1866
      %vm1884 = vcmask 15360
      %1885 = vst.msk [vmem:[%s165] sm:$0xff] %vm1884, %v1868
      %1886 = vst.msk [vmem:[%s165 + $0x8] sm:$0xff] %vm1884, %v1869
      %1887 = vst.msk [vmem:[%s165 + $0x10] sm:$0xff] %vm1884, %v1870
      %1888 = vst.msk [vmem:[%s165 + $0x18] sm:$0xff] %vm1884, %v1871
      %1889 = vst.msk [vmem:[%s165 + $0x20] sm:$0xff] %vm1884, %v1872
      %1890 = vst.msk [vmem:[%s165 + $0x28] sm:$0xff] %vm1884, %v1873
      %1891 = vst.msk [vmem:[%s165 + $0x30] sm:$0xff] %vm1884, %v1874
      %1892 = vst.msk [vmem:[%s165 + $0x38] sm:$0xff] %vm1884, %v1875
      %1893 = vst.msk [vmem:[%s165 + $0x40] sm:$0xff] %vm1884, %v1876
      %1894 = vst.msk [vmem:[%s165 + $0x48] sm:$0xff] %vm1884, %v1877
      %1895 = vst.msk [vmem:[%s165 + $0x50] sm:$0xff] %vm1884, %v1878
      %1896 = vst.msk [vmem:[%s165 + $0x58] sm:$0xff] %vm1884, %v1879
      %1897 = vst.msk [vmem:[%s165 + $0x60] sm:$0xff] %vm1884, %v1880
      %1898 = vst.msk [vmem:[%s165 + $0x68] sm:$0xff] %vm1884, %v1881
      %1899 = vst.msk [vmem:[%s165 + $0x70] sm:$0xff] %vm1884, %v1882
      %1900 = vst.msk [vmem:[%s165 + $0x78] sm:$0xff] %vm1884, %v1883
      %p1901 = scmp.lt.s32.totalorder %s17, 1
      %s1902 = scalar_select %p1901, %s17, 1
      %p1903 = scmp.lt.s32.totalorder %s18, 1
      %s1904 = scalar_select %p1903, %s18, 1
      %s1905 = smul.addr %s1904, 16
      %s1906 = smul.addr %s1902, 32
      %s1907 = sadd.s32 %s1905, %s1906
      %s1908 = smul.addr %s1907, 8
      %s1909 = scalar_lea.vmem %s2, %s1908
      // Predicated region
      $region29: #{conv_bn_relu.2} parent=27 // pred_check
        %p1910 = pneg %p92
      $region30: #{conv_bn_relu.2} parent=27 // pred_check_branch
        %1912 = sbr.rel (%p1910) target = $region32
      $region31: #{conv_bn_relu.2} parent=27 // pred_region
        _
      $region32: #{conv_bn_relu.2} parent=27 // pred_fallthru
        _
    $region28: #{conv_bn_relu.2} parent=5 // pred_fallthru
      _
    %p1913 = scmp.le.s32.totalorder 2, %s8
    // Predicated region
    $region33: #{conv_bn_relu.2} parent=5 // pred_check
      %p1914 = pneg %p1913
    $region34: #{conv_bn_relu.2} parent=5 // pred_check_branch
      %1916 = sbr.rel (%p1914) target = $region36
    $region35: #{conv_bn_relu.2} parent=5 // pred_region
      %s1917 = ssub.s32 %s8, 2
      // Predicated region
      $region37: #{conv_bn_relu.2} parent=35 // pred_check
        %p1918 = pneg %p98
      $region38: #{conv_bn_relu.2} parent=35 // pred_check_branch
        %1920 = sbr.rel (%p1918) target = $region40
      $region39: #{conv_bn_relu.2} parent=35 // pred_region
        %p1921 = scmp.lt.s32.totalorder %s19, 1
        %s1922 = scalar_select %p1921, %s19, 1
        %p1923 = scmp.lt.s32.totalorder %s20, 1
        %s1924 = scalar_select %p1923, %s20, 1
        %s1925 = smul.addr %s1924, 16
        %s1926 = smul.addr %s1922, 32
        %s1927 = sadd.s32 %s1925, %s1926
        %s1928 = smul.addr %s1927, 8
        %s1929 = scalar_lea.vmem %s2, %s1928
      $region40: #{conv_bn_relu.2} parent=35 // pred_fallthru
        _
    $region36: #{conv_bn_relu.2} parent=5 // pred_fallthru
      _
  $region6: #{conv_bn_relu.2} parent=0 // loop_footer
    %s12 = sadd.s32 1, %s8
  $region7: #{conv_bn_relu.2} parent=0 // loop_footer_branch
    %7 = sbr.rel target = $region3
  $region8: #{conv_bn_relu.2} parent=0 // loop_exit
    _

// kernel: conv_bn_relu.3
$region0: #{conv_bn_relu.3}
  #allocation0 [shape = 'u32[]', space=smem, size = 0x4, offset = 0x4, fixed_abs, tag = 'smem constant byte address 0x4 - core index']
  #allocation1 [shape = 'u32[144,128]{1,0:T(1,128)}', space=vmem, size = 0x12000, scoped, tag = 'internal scratch']
  %s0 = inlined_call_operand.vmem [shape: bf16[2,18,18,4], index: 0, kind: input, shape index: {}]
  %s1 = inlined_call_operand.vmem [shape: bf16[128,36], index: 1, kind: input, shape index: {}]
  %s2 = inlined_call_operand.vmem [shape: f32[128,1], index: 2, kind: input, shape index: {}]
  %s3 = inlined_call_operand.vmem [shape: f32[128,1], index: 3, kind: input, shape index: {}]
  %s4 = inlined_call_operand.vmem [shape: f32[2,8,256], index: 4, kind: output, shape index: {}]
  %s5 = sld [smem:[#allocation0]]
  $region49: #{conv_bn_relu.3} parent=0
    _
  %s7 = ssub.s32 1, %s5
  %s8 = scalar_select 0, %s7, %s5
  loop: start=0, step=1, limit=6
  $region2: #{conv_bn_relu.3} parent=0 // loop_pre_header
    _
  $region3: #{conv_bn_relu.3} parent=0 // loop_header
    %s10 = sphi 0, %s14
    %p11 = scmp.ge.s32.totalorder %s10, 6
    %s17 = sphi 0, %s29
    %s18 = sphi 0, %s25
    %s19 = sphi 0, %s17
    %s20 = sphi 0, %s18
    %s21 = sphi 0, %s19
    %s22 = sphi 0, %s20
    %s32 = sphi 0, %s34
    %s35 = sphi 0, %s32
    %s36 = sphi 0, %s35
    %s52 = sphi 0, %s36
    %s56 = sphi 0, %s56
    %s58 = sphi 0, %s56
    %s59 = sphi 0, %s58
    %s73 = sphi 0, %s59
    %s77 = sphi 0, %s77
    %s79 = sphi 0, %s77
    %s80 = sphi 0, %s79
    %s94 = sphi 0, %s80
    %s98 = sphi 0, %s98
    %s100 = sphi 0, %s98
    %s101 = sphi 0, %s100
    %s115 = sphi 0, %s101
    %s123 = sphi 0, %s125
    %s126 = sphi 0, %s123
    %s127 = sphi 0, %s126
    %s143 = sphi 0, %s127
  $region4: #{conv_bn_relu.3} parent=0 // loop_header_branch
    %13 = sbr.rel (%p11) target = $region8
  $region5: #{conv_bn_relu.3} parent=0 // loop_body
    %s15 = ssub.s32 %s10, 1
    %s16 = ssub.s32 %s10, 2
    %s23 = sadd.s32 1, %s18
    %p24 = scmp.ge.s32.totalorder %s23, 2
    %s25 = scalar_select %p24, 0, %s23
    %s26 = sadd.s32 1, %s17
    %s27 = scalar_select %p24, %s26, %s17
    %p28 = scmp.ge.s32.totalorder %s27, 2
    %s29 = scalar_select %p28, 0, %s27
    %s30 = ssub.s32 %s17, %s29
    %p31 = scmp.eq.s32.totalorder %s30, 0
    %s33 = sadd.s32 %s32, 1
    %s34 = scalar_select %p31, %s32, %s33
    %p37 = pneg %p31
    %p38 = scmp.eq.s32.totalorder %s10, 3
    %p39 = por %p37, %p38
    %p40 = scmp.ne.s32.totalorder %s32, %s35
    %p41 = scmp.eq.s32.totalorder %s10, 0
    %p42 = por %p40, %p41
    %p43 = scmp.ne.s32.totalorder %s32, %s35
    %p44 = scmp.eq.s32.totalorder %s15, 3
    %p45 = por %p43, %p44
    %p46 = scmp.ne.s32.totalorder %s35, %s36
    %p47 = scmp.eq.s32.totalorder %s15, 0
    %p48 = por %p46, %p47
    %p49 = scmp.ne.s32.totalorder %s35, %s36
    %p50 = scmp.eq.s32.totalorder %s16, 3
    %p51 = por %p49, %p50
    %p53 = scmp.ne.s32.totalorder %s36, %s52
    %p54 = scmp.eq.s32.totalorder %s16, 0
    %p55 = por %p53, %p54
    %s57 = sadd.s32 %s56, 1
    %p60 = scmp.eq.s32.totalorder %s10, 3
    %p61 = scmp.ne.s32.totalorder %s56, %s58
    %p62 = scmp.eq.s32.totalorder %s10, 0
    %p63 = por %p61, %p62
    %p64 = scmp.ne.s32.totalorder %s56, %s58
    %p65 = scmp.eq.s32.totalorder %s15, 3
    %p66 = por %p64, %p65
    %p67 = scmp.ne.s32.totalorder %s58, %s59
    %p68 = scmp.eq.s32.totalorder %s15, 0
    %p69 = por %p67, %p68
    %p70 = scmp.ne.s32.totalorder %s58, %s59
    %p71 = scmp.eq.s32.totalorder %s16, 3
    %p72 = por %p70, %p71
    %p74 = scmp.ne.s32.totalorder %s59, %s73
    %p75 = scmp.eq.s32.totalorder %s16, 0
    %p76 = por %p74, %p75
    %s78 = sadd.s32 %s77, 1
    %p81 = scmp.eq.s32.totalorder %s10, 3
    %p82 = scmp.ne.s32.totalorder %s77, %s79
    %p83 = scmp.eq.s32.totalorder %s10, 0
    %p84 = por %p82, %p83
    %p85 = scmp.ne.s32.totalorder %s77, %s79
    %p86 = scmp.eq.s32.totalorder %s15, 3
    %p87 = por %p85, %p86
    %p88 = scmp.ne.s32.totalorder %s79, %s80
    %p89 = scmp.eq.s32.totalorder %s15, 0
    %p90 = por %p88, %p89
    %p91 = scmp.ne.s32.totalorder %s79, %s80
    %p92 = scmp.eq.s32.totalorder %s16, 3
    %p93 = por %p91, %p92
    %p95 = scmp.ne.s32.totalorder %s80, %s94
    %p96 = scmp.eq.s32.totalorder %s16, 0
    %p97 = por %p95, %p96
    %s99 = sadd.s32 %s98, 1
    %p102 = scmp.eq.s32.totalorder %s10, 3
    %p103 = scmp.ne.s32.totalorder %s98, %s100
    %p104 = scmp.eq.s32.totalorder %s10, 0
    %p105 = por %p103, %p104
    %p106 = scmp.ne.s32.totalorder %s98, %s100
    %p107 = scmp.eq.s32.totalorder %s15, 3
    %p108 = por %p106, %p107
    %p109 = scmp.ne.s32.totalorder %s100, %s101
    %p110 = scmp.eq.s32.totalorder %s15, 0
    %p111 = por %p109, %p110
    %p112 = scmp.ne.s32.totalorder %s100, %s101
    %p113 = scmp.eq.s32.totalorder %s16, 3
    %p114 = por %p112, %p113
    %p116 = scmp.ne.s32.totalorder %s101, %s115
    %p117 = scmp.eq.s32.totalorder %s16, 0
    %p118 = por %p116, %p117
    %s119 = ssub.s32 %s17, %s29
    %s120 = ssub.s32 %s18, %s25
    %s121 = sor.u32 %s119, %s120
    %p122 = scmp.eq.s32.totalorder %s121, 0
    %s124 = sadd.s32 %s123, 1
    %s125 = scalar_select %p122, %s123, %s124
    %p128 = pneg %p122
    %p129 = scmp.eq.s32.totalorder %s10, 3
    %p130 = por %p128, %p129
    %p131 = scmp.ne.s32.totalorder %s123, %s126
    %p132 = scmp.eq.s32.totalorder %s10, 0
    %p133 = por %p131, %p132
    %p134 = scmp.ne.s32.totalorder %s123, %s126
    %p135 = scmp.eq.s32.totalorder %s15, 3
    %p136 = por %p134, %p135
    %p137 = scmp.ne.s32.totalorder %s126, %s127
    %p138 = scmp.eq.s32.totalorder %s15, 0
    %p139 = por %p137, %p138
    %p140 = scmp.ne.s32.totalorder %s126, %s127
    %p141 = scmp.eq.s32.totalorder %s16, 3
    %p142 = por %p140, %p141
    %p144 = scmp.ne.s32.totalorder %s127, %s143
    %p145 = scmp.eq.s32.totalorder %s16, 0
    %p146 = por %p144, %p145
    %p147 = scmp.le.s32.totalorder 1, %s10
    %p148 = scmp.lt.s32.totalorder %s10, 5
    %p149 = pnand %p147, %p148
    %p150 = pneg %p149
    // Predicated region
    $region9: #{conv_bn_relu.3} parent=5 // pred_check
      _
    $region10: #{conv_bn_relu.3} parent=5 // pred_check_branch
      %152 = sbr.rel (%p149) target = $region12
    $region11: #{conv_bn_relu.3} parent=5 // pred_region
      %s153 = ssub.s32 %s10, 1
      // Predicated region
      $region13: #{conv_bn_relu.3} parent=11 // pred_check
        %p154 = pneg %p69
      $region14: #{conv_bn_relu.3} parent=11 // pred_check_branch
        %156 = sbr.rel (%p154) target = $region16
      $region15: #{conv_bn_relu.3} parent=11 // pred_region
        _
      $region16: #{conv_bn_relu.3} parent=11 // pred_fallthru
        _
      // Predicated region
      $region17: #{conv_bn_relu.3} parent=11 // pred_check
        %p157 = pneg %p90
      $region18: #{conv_bn_relu.3} parent=11 // pred_check_branch
        %159 = sbr.rel (%p157) target = $region20
      $region19: #{conv_bn_relu.3} parent=11 // pred_region
        _
      $region20: #{conv_bn_relu.3} parent=11 // pred_fallthru
        _
      // Predicated region
      $region21: #{conv_bn_relu.3} parent=11 // pred_check
        %p160 = pneg %p111
      $region22: #{conv_bn_relu.3} parent=11 // pred_check_branch
        %162 = sbr.rel (%p160) target = $region24
      $region23: #{conv_bn_relu.3} parent=11 // pred_region
        _
      $region24: #{conv_bn_relu.3} parent=11 // pred_fallthru
        _
    $region12: #{conv_bn_relu.3} parent=5 // pred_fallthru
      _
    %p163 = scmp.lt.s32.totalorder %s10, 4
    // Predicated region
    $region25: #{conv_bn_relu.3} parent=5 // pred_check
      %p164 = pneg %p163
    $region26: #{conv_bn_relu.3} parent=5 // pred_check_branch
      %166 = sbr.rel (%p164) target = $region28
    $region27: #{conv_bn_relu.3} parent=5 // pred_region
      // Predicated region
      $region29: #{conv_bn_relu.3} parent=27 // pred_check
        %p167 = pneg %p42
      $region30: #{conv_bn_relu.3} parent=27 // pred_check_branch
        %169 = sbr.rel (%p167) target = $region32
      $region31: #{conv_bn_relu.3} parent=27 // pred_region
        %p170 = scmp.lt.s32.totalorder %s17, 1
        %s171 = scalar_select %p170, %s17, 1
        %s172 = smul.addr %s171, 54
        %s173 = smul.addr %s172, 4
        %s174 = scalar_lea.vmem %s0, %s173
      $region32: #{conv_bn_relu.3} parent=27 // pred_fallthru
        _
    $region28: #{conv_bn_relu.3} parent=5 // pred_fallthru
      _
    %p175 = scmp.le.s32.totalorder 1, %s10
    %p176 = scmp.lt.s32.totalorder %s10, 5
    %p177 = pnand %p175, %p176
    %p178 = pneg %p177
    // Predicated region
    $region33: #{conv_bn_relu.3} parent=5 // pred_check
      _
    $region34: #{conv_bn_relu.3} parent=5 // pred_check_branch
      %180 = sbr.rel (%p177) target = $region36
    $region35: #{conv_bn_relu.3} parent=5 // pred_region
      %s181 = ssub.s32 %s10, 1
      %p182 = scmp.lt.s32.totalorder %s19, 1
      %s183 = scalar_select %p182, %s19, 1
      %s184 = smul.addr %s183, 54
      %s185 = smul.addr %s184, 4
      %s186 = scalar_lea.vmem %s0, %s185
      %p187 = pneg %p48
      %p188 = pneg %p45
      %p189 = pneg %p69
      %p190 = pneg %p66
      %p191 = pneg %p90
      %p192 = pneg %p87
      %p193 = pneg %p111
      %p194 = pneg %p108
      %p195 = pneg %p139
      %p196 = pneg %p136
      %p197 = scmp.lt.s32.totalorder %s19, 1
      %s198 = scalar_select %p197, %s19, 1
      %p199 = scmp.lt.s32.totalorder %s20, 1
      %s200 = scalar_select %p199, %s20, 1
      %s201 = smul.addr %s198, 2
      %s202 = sadd.s32 %s200, %s201
      %s203 = smul.addr %s202, 8
      %s204 = scalar_lea.vmem %s4, %s203
      %p205 = scmp.lt.s32.totalorder %s19, 1
      %s206 = scalar_select %p205, %s19, 1
      %s207 = smul.addr %s206, 54
      %s208 = smul.addr %s207, 4
      %s209 = scalar_lea.vmem %s0, %s208
      %p210 = scmp.lt.s32.totalorder %s19, 1
      %s211 = scalar_select %p210, %s19, 1
      %p212 = scmp.lt.s32.totalorder %s20, 1
      %s213 = scalar_select %p212, %s20, 1
      %s214 = smul.addr %s211, 2
      %s215 = sadd.s32 %s213, %s214
      %s216 = smul.addr %s215, 8
      %s217 = scalar_lea.vmem %s4, %s216
      %s219 = smul.u32 %s20, 8
      %s220 = smul.u32 %s219, 3
      %s221 = smul.addr %s220, 4
      %s222 = scalar_lea.vmem %s209, %s221
      %v223 = vld [vmem:[%s222] sm:$0xf]
      %v224 = vld [vmem:[%s222 + $0x4] sm:$0xf]
      %v225 = vld [vmem:[%s222 + $0x8] sm:$0x1]
      %v226 = vld [vmem:[%s222 + $0xc] sm:$0xf]
      %v227 = vld [vmem:[%s222 + $0x10] sm:$0xf]
      %v228 = vld [vmem:[%s222 + $0x14] sm:$0x1]
      %v229 = vld [vmem:[%s222 + $0x18] sm:$0xf]
      %v230 = vld [vmem:[%s222 + $0x1c] sm:$0xf]
      %v231 = vld [vmem:[%s222 + $0x20] sm:$0x1]
      %v232 = vld [vmem:[%s222 + $0x24] sm:$0xf]
      %v233 = vld [vmem:[%s222 + $0x28] sm:$0xf]
      %v234 = vld [vmem:[%s222 + $0x2c] sm:$0x1]
      %v235 = vld [vmem:[%s222 + $0x30] sm:$0xf]
      %v236 = vld [vmem:[%s222 + $0x34] sm:$0xf]
      %v237 = vld [vmem:[%s222 + $0x38] sm:$0x1]
      %v238 = vld [vmem:[%s222 + $0x3c] sm:$0xf]
      %v239 = vld [vmem:[%s222 + $0x40] sm:$0xf]
      %v240 = vld [vmem:[%s222 + $0x44] sm:$0x1]
      %v241 = vld [vmem:[%s222 + $0x48] sm:$0xf]
      %v242 = vld [vmem:[%s222 + $0x4c] sm:$0xf]
      %v243 = vld [vmem:[%s222 + $0x50] sm:$0x1]
      %v244 = vld [vmem:[%s222 + $0x54] sm:$0xf]
      %v245 = vld [vmem:[%s222 + $0x58] sm:$0xf]
      %v246 = vld [vmem:[%s222 + $0x5c] sm:$0x1]
      %vm247 = vsmask.f32 3328
      %vm248 = vsmask.f32 7440
      %vm249 = vmor %vm247, %vm248
      %v251 = vshrl.u32 %v223, 16
      %v253 = vrot.slane %v251, 4
      %v254 = vshll.u32 %v223, 16
      %v256 = vrot.slane %v254, 5
      %v257 = vor.u32 %v253, %v256
      %v258 = vrot.slane %v257, 4
      %v260 = vshll.u32 %v224, 16
      %v262 = vrot.slane %v260, 5
      %v263 = vsel %vm249, %v258, %v262
      %v264 = vshrl.u32 %v224, 16
      %v266 = vrot.slane %v264, 4
      %v267 = vor.u32 %v266, %v262
      %v268 = vrot.slane %v267, 4
      %v270 = vshll.u32 %v225, 16
      %v272 = vrot.slane %v270, 5
      %v273 = vsel %vm249, %v268, %v272
      %v275 = vshrl.u32 %v226, 16
      %v277 = vrot.slane %v275, 4
      %v278 = vshll.u32 %v226, 16
      %v280 = vrot.slane %v278, 5
      %v281 = vor.u32 %v277, %v280
      %v282 = vrot.slane %v281, 4
      %v284 = vshll.u32 %v227, 16
      %v286 = vrot.slane %v284, 5
      %v287 = vsel %vm249, %v282, %v286
      %v288 = vshrl.u32 %v227, 16
      %v290 = vrot.slane %v288, 4
      %v291 = vor.u32 %v290, %v286
      %v292 = vrot.slane %v291, 4
      %v294 = vshll.u32 %v228, 16
      %v296 = vrot.slane %v294, 5
      %v297 = vsel %vm249, %v292, %v296
      %v299 = vshrl.u32 %v229, 16
      %v301 = vrot.slane %v299, 4
      %v302 = vshll.u32 %v229, 16
      %v304 = vrot.slane %v302, 5
      %v305 = vor.u32 %v301, %v304
      %v306 = vrot.slane %v305, 4
      %v308 = vshll.u32 %v230, 16
      %v310 = vrot.slane %v308, 5
      %v311 = vsel %vm249, %v306, %v310
      %v312 = vshrl.u32 %v230, 16
      %v314 = vrot.slane %v312, 4
      %v315 = vor.u32 %v314, %v310
      %v316 = vrot.slane %v315, 4
      %v318 = vshll.u32 %v231, 16
      %v320 = vrot.slane %v318, 5
      %v321 = vsel %vm249, %v316, %v320
      %v323 = vshrl.u32 %v232, 16
      %v325 = vrot.slane %v323, 4
      %v326 = vshll.u32 %v232, 16
      %v328 = vrot.slane %v326, 5
      %v329 = vor.u32 %v325, %v328
      %v330 = vrot.slane %v329, 4
      %v332 = vshll.u32 %v233, 16
      %v334 = vrot.slane %v332, 5
      %v335 = vsel %vm249, %v330, %v334
      %v336 = vshrl.u32 %v233, 16
      %v338 = vrot.slane %v336, 4
      %v339 = vor.u32 %v338, %v334
      %v340 = vrot.slane %v339, 4
      %v342 = vshll.u32 %v234, 16
      %v344 = vrot.slane %v342, 5
      %v345 = vsel %vm249, %v340, %v344
      %v347 = vshrl.u32 %v235, 16
      %v349 = vrot.slane %v347, 4
      %v350 = vshll.u32 %v235, 16
      %v352 = vrot.slane %v350, 5
      %v353 = vor.u32 %v349, %v352
      %v354 = vrot.slane %v353, 4
      %v356 = vshll.u32 %v236, 16
      %v358 = vrot.slane %v356, 5
      %v359 = vsel %vm249, %v354, %v358
      %v360 = vshrl.u32 %v236, 16
      %v362 = vrot.slane %v360, 4
      %v363 = vor.u32 %v362, %v358
      %v364 = vrot.slane %v363, 4
      %v366 = vshll.u32 %v237, 16
      %v368 = vrot.slane %v366, 5
      %v369 = vsel %vm249, %v364, %v368
      %v371 = vshrl.u32 %v238, 16
      %v373 = vrot.slane %v371, 4
      %v374 = vshll.u32 %v238, 16
      %v376 = vrot.slane %v374, 5
      %v377 = vor.u32 %v373, %v376
      %v378 = vrot.slane %v377, 4
      %v380 = vshll.u32 %v239, 16
      %v382 = vrot.slane %v380, 5
      %v383 = vsel %vm249, %v378, %v382
      %v384 = vshrl.u32 %v239, 16
      %v386 = vrot.slane %v384, 4
      %v387 = vor.u32 %v386, %v382
      %v388 = vrot.slane %v387, 4
      %v390 = vshll.u32 %v240, 16
      %v392 = vrot.slane %v390, 5
      %v393 = vsel %vm249, %v388, %v392
      %v395 = vshrl.u32 %v241, 16
      %v397 = vrot.slane %v395, 4
      %v398 = vshll.u32 %v241, 16
      %v400 = vrot.slane %v398, 5
      %v401 = vor.u32 %v397, %v400
      %v402 = vrot.slane %v401, 4
      %v404 = vshll.u32 %v242, 16
      %v406 = vrot.slane %v404, 5
      %v407 = vsel %vm249, %v402, %v406
      %v408 = vshrl.u32 %v242, 16
      %v410 = vrot.slane %v408, 4
      %v411 = vor.u32 %v410, %v406
      %v412 = vrot.slane %v411, 4
      %v414 = vshll.u32 %v243, 16
      %v416 = vrot.slane %v414, 5
      %v417 = vsel %vm249, %v412, %v416
      %v419 = vshrl.u32 %v244, 16
      %v421 = vrot.slane %v419, 4
      %v422 = vshll.u32 %v244, 16
      %v424 = vrot.slane %v422, 5
      %v425 = vor.u32 %v421, %v424
      %v426 = vrot.slane %v425, 4
      %v428 = vshll.u32 %v245, 16
      %v430 = vrot.slane %v428, 5
      %v431 = vsel %vm249, %v426, %v430
      %v432 = vshrl.u32 %v245, 16
      %v434 = vrot.slane %v432, 4
      %v435 = vor.u32 %v434, %v430
      %v436 = vrot.slane %v435, 4
      %v438 = vshll.u32 %v246, 16
      %v440 = vrot.slane %v438, 5
      %v441 = vsel %vm249, %v436, %v440
      %vm466 = vcmask 1042432
      %vm467 = vcmask 1046532
      %vm468 = vmor %vm466, %vm467
      %v469 = vrot.slane %v223, 5
      %v470 = vrot.slane %v469, 4
      %v471 = vrot.slane %v224, 5
      %v472 = vsel %vm468, %v470, %v471
      %v473 = vrot.slane %v471, 4
      %v474 = vrot.slane %v225, 5
      %v475 = vsel %vm468, %v473, %v474
      %v476 = vrot.slane %v226, 5
      %v477 = vrot.slane %v476, 4
      %v478 = vrot.slane %v227, 5
      %v479 = vsel %vm468, %v477, %v478
      %v480 = vrot.slane %v478, 4
      %v481 = vrot.slane %v228, 5
      %v482 = vsel %vm468, %v480, %v481
      %v483 = vrot.slane %v229, 5
      %v484 = vrot.slane %v483, 4
      %v485 = vrot.slane %v230, 5
      %v486 = vsel %vm468, %v484, %v485
      %v487 = vrot.slane %v485, 4
      %v488 = vrot.slane %v231, 5
      %v489 = vsel %vm468, %v487, %v488
      %v490 = vrot.slane %v232, 5
      %v491 = vrot.slane %v490, 4
      %v492 = vrot.slane %v233, 5
      %v493 = vsel %vm468, %v491, %v492
      %v494 = vrot.slane %v492, 4
      %v495 = vrot.slane %v234, 5
      %v496 = vsel %vm468, %v494, %v495
      %v497 = vrot.slane %v235, 5
      %v498 = vrot.slane %v497, 4
      %v499 = vrot.slane %v236, 5
      %v500 = vsel %vm468, %v498, %v499
      %v501 = vrot.slane %v499, 4
      %v502 = vrot.slane %v237, 5
      %v503 = vsel %vm468, %v501, %v502
      %v504 = vrot.slane %v238, 5
      %v505 = vrot.slane %v504, 4
      %v506 = vrot.slane %v239, 5
      %v507 = vsel %vm468, %v505, %v506
      %v508 = vrot.slane %v506, 4
      %v509 = vrot.slane %v240, 5
      %v510 = vsel %vm468, %v508, %v509
      %v511 = vrot.slane %v241, 5
      %v512 = vrot.slane %v511, 4
      %v513 = vrot.slane %v242, 5
      %v514 = vsel %vm468, %v512, %v513
      %v515 = vrot.slane %v513, 4
      %v516 = vrot.slane %v243, 5
      %v517 = vsel %vm468, %v515, %v516
      %v518 = vrot.slane %v244, 5
      %v519 = vrot.slane %v518, 4
      %v520 = vrot.slane %v245, 5
      %v521 = vsel %vm468, %v519, %v520
      %v522 = vrot.slane %v520, 4
      %v523 = vrot.slane %v246, 5
      %v524 = vsel %vm468, %v522, %v523
      %s525 = sadd.s32 %s219, 1
      %s526 = smul.u32 %s525, 3
      %s527 = smul.addr %s526, 4
      %s528 = scalar_lea.vmem %s209, %s527
      %v529 = vld [vmem:[%s528] sm:$0xf]
      %v530 = vld [vmem:[%s528 + $0x4] sm:$0xf]
      %v531 = vld [vmem:[%s528 + $0x8] sm:$0x1]
      %v532 = vld [vmem:[%s528 + $0xc] sm:$0xf]
      %v533 = vld [vmem:[%s528 + $0x10] sm:$0xf]
      %v534 = vld [vmem:[%s528 + $0x14] sm:$0x1]
      %v535 = vld [vmem:[%s528 + $0x18] sm:$0xf]
      %v536 = vld [vmem:[%s528 + $0x1c] sm:$0xf]
      %v537 = vld [vmem:[%s528 + $0x20] sm:$0x1]
      %v538 = vld [vmem:[%s528 + $0x24] sm:$0xf]
      %v539 = vld [vmem:[%s528 + $0x28] sm:$0xf]
      %v540 = vld [vmem:[%s528 + $0x2c] sm:$0x1]
      %v541 = vld [vmem:[%s528 + $0x30] sm:$0xf]
      %v542 = vld [vmem:[%s528 + $0x34] sm:$0xf]
      %v543 = vld [vmem:[%s528 + $0x38] sm:$0x1]
      %v544 = vld [vmem:[%s528 + $0x3c] sm:$0xf]
      %v545 = vld [vmem:[%s528 + $0x40] sm:$0xf]
      %v546 = vld [vmem:[%s528 + $0x44] sm:$0x1]
      %v547 = vld [vmem:[%s528 + $0x48] sm:$0xf]
      %v548 = vld [vmem:[%s528 + $0x4c] sm:$0xf]
      %v549 = vld [vmem:[%s528 + $0x50] sm:$0x1]
      %v550 = vld [vmem:[%s528 + $0x54] sm:$0xf]
      %v551 = vld [vmem:[%s528 + $0x58] sm:$0xf]
      %v552 = vld [vmem:[%s528 + $0x5c] sm:$0x1]
      %v554 = vshrl.u32 %v529, 16
      %v556 = vrot.slane %v554, 4
      %v557 = vshll.u32 %v529, 16
      %v559 = vrot.slane %v557, 5
      %v560 = vor.u32 %v556, %v559
      %v561 = vrot.slane %v560, 4
      %v563 = vshll.u32 %v530, 16
      %v565 = vrot.slane %v563, 5
      %v566 = vsel %vm249, %v561, %v565
      %v567 = vshrl.u32 %v530, 16
      %v569 = vrot.slane %v567, 4
      %v570 = vor.u32 %v569, %v565
      %v571 = vrot.slane %v570, 4
      %v573 = vshll.u32 %v531, 16
      %v575 = vrot.slane %v573, 5
      %v576 = vsel %vm249, %v571, %v575
      %v578 = vshrl.u32 %v532, 16
      %v580 = vrot.slane %v578, 4
      %v581 = vshll.u32 %v532, 16
      %v583 = vrot.slane %v581, 5
      %v584 = vor.u32 %v580, %v583
      %v585 = vrot.slane %v584, 4
      %v587 = vshll.u32 %v533, 16
      %v589 = vrot.slane %v587, 5
      %v590 = vsel %vm249, %v585, %v589
      %v591 = vshrl.u32 %v533, 16
      %v593 = vrot.slane %v591, 4
      %v594 = vor.u32 %v593, %v589
      %v595 = vrot.slane %v594, 4
      %v597 = vshll.u32 %v534, 16
      %v599 = vrot.slane %v597, 5
      %v600 = vsel %vm249, %v595, %v599
      %v602 = vshrl.u32 %v535, 16
      %v604 = vrot.slane %v602, 4
      %v605 = vshll.u32 %v535, 16
      %v607 = vrot.slane %v605, 5
      %v608 = vor.u32 %v604, %v607
      %v609 = vrot.slane %v608, 4
      %v611 = vshll.u32 %v536, 16
      %v613 = vrot.slane %v611, 5
      %v614 = vsel %vm249, %v609, %v613
      %v615 = vshrl.u32 %v536, 16
      %v617 = vrot.slane %v615, 4
      %v618 = vor.u32 %v617, %v613
      %v619 = vrot.slane %v618, 4
      %v621 = vshll.u32 %v537, 16
      %v623 = vrot.slane %v621, 5
      %v624 = vsel %vm249, %v619, %v623
      %v626 = vshrl.u32 %v538, 16
      %v628 = vrot.slane %v626, 4
      %v629 = vshll.u32 %v538, 16
      %v631 = vrot.slane %v629, 5
      %v632 = vor.u32 %v628, %v631
      %v633 = vrot.slane %v632, 4
      %v635 = vshll.u32 %v539, 16
      %v637 = vrot.slane %v635, 5
      %v638 = vsel %vm249, %v633, %v637
      %v639 = vshrl.u32 %v539, 16
      %v641 = vrot.slane %v639, 4
      %v642 = vor.u32 %v641, %v637
      %v643 = vrot.slane %v642, 4
      %v645 = vshll.u32 %v540, 16
      %v647 = vrot.slane %v645, 5
      %v648 = vsel %vm249, %v643, %v647
      %v650 = vshrl.u32 %v541, 16
      %v652 = vrot.slane %v650, 4
      %v653 = vshll.u32 %v541, 16
      %v655 = vrot.slane %v653, 5
      %v656 = vor.u32 %v652, %v655
      %v657 = vrot.slane %v656, 4
      %v659 = vshll.u32 %v542, 16
      %v661 = vrot.slane %v659, 5
      %v662 = vsel %vm249, %v657, %v661
      %v663 = vshrl.u32 %v542, 16
      %v665 = vrot.slane %v663, 4
      %v666 = vor.u32 %v665, %v661
      %v667 = vrot.slane %v666, 4
      %v669 = vshll.u32 %v543, 16
      %v671 = vrot.slane %v669, 5
      %v672 = vsel %vm249, %v667, %v671
      %v674 = vshrl.u32 %v544, 16
      %v676 = vrot.slane %v674, 4
      %v677 = vshll.u32 %v544, 16
      %v679 = vrot.slane %v677, 5
      %v680 = vor.u32 %v676, %v679
      %v681 = vrot.slane %v680, 4
      %v683 = vshll.u32 %v545, 16
      %v685 = vrot.slane %v683, 5
      %v686 = vsel %vm249, %v681, %v685
      %v687 = vshrl.u32 %v545, 16
      %v689 = vrot.slane %v687, 4
      %v690 = vor.u32 %v689, %v685
      %v691 = vrot.slane %v690, 4
      %v693 = vshll.u32 %v546, 16
      %v695 = vrot.slane %v693, 5
      %v696 = vsel %vm249, %v691, %v695
      %v698 = vshrl.u32 %v547, 16
      %v700 = vrot.slane %v698, 4
      %v701 = vshll.u32 %v547, 16
      %v703 = vrot.slane %v701, 5
      %v704 = vor.u32 %v700, %v703
      %v705 = vrot.slane %v704, 4
      %v707 = vshll.u32 %v548, 16
      %v709 = vrot.slane %v707, 5
      %v710 = vsel %vm249, %v705, %v709
      %v711 = vshrl.u32 %v548, 16
      %v713 = vrot.slane %v711, 4
      %v714 = vor.u32 %v713, %v709
      %v715 = vrot.slane %v714, 4
      %v717 = vshll.u32 %v549, 16
      %v719 = vrot.slane %v717, 5
      %v720 = vsel %vm249, %v715, %v719
      %v722 = vshrl.u32 %v550, 16
      %v724 = vrot.slane %v722, 4
      %v725 = vshll.u32 %v550, 16
      %v727 = vrot.slane %v725, 5
      %v728 = vor.u32 %v724, %v727
      %v729 = vrot.slane %v728, 4
      %v731 = vshll.u32 %v551, 16
      %v733 = vrot.slane %v731, 5
      %v734 = vsel %vm249, %v729, %v733
      %v735 = vshrl.u32 %v551, 16
      %v737 = vrot.slane %v735, 4
      %v738 = vor.u32 %v737, %v733
      %v739 = vrot.slane %v738, 4
      %v741 = vshll.u32 %v552, 16
      %v743 = vrot.slane %v741, 5
      %v744 = vsel %vm249, %v739, %v743
      %v769 = vrot.slane %v529, 5
      %v770 = vrot.slane %v769, 4
      %v771 = vrot.slane %v530, 5
      %v772 = vsel %vm468, %v770, %v771
      %v773 = vrot.slane %v771, 4
      %v774 = vrot.slane %v531, 5
      %v775 = vsel %vm468, %v773, %v774
      %v776 = vrot.slane %v532, 5
      %v777 = vrot.slane %v776, 4
      %v778 = vrot.slane %v533, 5
      %v779 = vsel %vm468, %v777, %v778
      %v780 = vrot.slane %v778, 4
      %v781 = vrot.slane %v534, 5
      %v782 = vsel %vm468, %v780, %v781
      %v783 = vrot.slane %v535, 5
      %v784 = vrot.slane %v783, 4
      %v785 = vrot.slane %v536, 5
      %v786 = vsel %vm468, %v784, %v785
      %v787 = vrot.slane %v785, 4
      %v788 = vrot.slane %v537, 5
      %v789 = vsel %vm468, %v787, %v788
      %v790 = vrot.slane %v538, 5
      %v791 = vrot.slane %v790, 4
      %v792 = vrot.slane %v539, 5
      %v793 = vsel %vm468, %v791, %v792
      %v794 = vrot.slane %v792, 4
      %v795 = vrot.slane %v540, 5
      %v796 = vsel %vm468, %v794, %v795
      %v797 = vrot.slane %v541, 5
      %v798 = vrot.slane %v797, 4
      %v799 = vrot.slane %v542, 5
      %v800 = vsel %vm468, %v798, %v799
      %v801 = vrot.slane %v799, 4
      %v802 = vrot.slane %v543, 5
      %v803 = vsel %vm468, %v801, %v802
      %v804 = vrot.slane %v544, 5
      %v805 = vrot.slane %v804, 4
      %v806 = vrot.slane %v545, 5
      %v807 = vsel %vm468, %v805, %v806
      %v808 = vrot.slane %v806, 4
      %v809 = vrot.slane %v546, 5
      %v810 = vsel %vm468, %v808, %v809
      %v811 = vrot.slane %v547, 5
      %v812 = vrot.slane %v811, 4
      %v813 = vrot.slane %v548, 5
      %v814 = vsel %vm468, %v812, %v813
      %v815 = vrot.slane %v813, 4
      %v816 = vrot.slane %v549, 5
      %v817 = vsel %vm468, %v815, %v816
      %v818 = vrot.slane %v550, 5
      %v819 = vrot.slane %v818, 4
      %v820 = vrot.slane %v551, 5
      %v821 = vsel %vm468, %v819, %v820
      %v822 = vrot.slane %v820, 4
      %v823 = vrot.slane %v552, 5
      %v824 = vsel %vm468, %v822, %v823
      %s825 = sadd.s32 %s219, 2
      %s826 = smul.u32 %s825, 3
      %s827 = smul.addr %s826, 4
      %s828 = scalar_lea.vmem %s209, %s827
      %v829 = vld [vmem:[%s828] sm:$0xf]
      %v830 = vld [vmem:[%s828 + $0x4] sm:$0xf]
      %v831 = vld [vmem:[%s828 + $0x8] sm:$0x1]
      %v832 = vld [vmem:[%s828 + $0xc] sm:$0xf]
      %v833 = vld [vmem:[%s828 + $0x10] sm:$0xf]
      %v834 = vld [vmem:[%s828 + $0x14] sm:$0x1]
      %v835 = vld [vmem:[%s828 + $0x18] sm:$0xf]
      %v836 = vld [vmem:[%s828 + $0x1c] sm:$0xf]
      %v837 = vld [vmem:[%s828 + $0x20] sm:$0x1]
      %v838 = vld [vmem:[%s828 + $0x24] sm:$0xf]
      %v839 = vld [vmem:[%s828 + $0x28] sm:$0xf]
      %v840 = vld [vmem:[%s828 + $0x2c] sm:$0x1]
      %v841 = vld [vmem:[%s828 + $0x30] sm:$0xf]
      %v842 = vld [vmem:[%s828 + $0x34] sm:$0xf]
      %v843 = vld [vmem:[%s828 + $0x38] sm:$0x1]
      %v844 = vld [vmem:[%s828 + $0x3c] sm:$0xf]
      %v845 = vld [vmem:[%s828 + $0x40] sm:$0xf]
      %v846 = vld [vmem:[%s828 + $0x44] sm:$0x1]
      %v847 = vld [vmem:[%s828 + $0x48] sm:$0xf]
      %v848 = vld [vmem:[%s828 + $0x4c] sm:$0xf]
      %v849 = vld [vmem:[%s828 + $0x50] sm:$0x1]
      %v850 = vld [vmem:[%s828 + $0x54] sm:$0xf]
      %v851 = vld [vmem:[%s828 + $0x58] sm:$0xf]
      %v852 = vld [vmem:[%s828 + $0x5c] sm:$0x1]
      %v854 = vshrl.u32 %v829, 16
      %v856 = vrot.slane %v854, 4
      %v857 = vshll.u32 %v829, 16
      %v859 = vrot.slane %v857, 5
      %v860 = vor.u32 %v856, %v859
      %v861 = vrot.slane %v860, 4
      %v863 = vshll.u32 %v830, 16
      %v865 = vrot.slane %v863, 5
      %v866 = vsel %vm249, %v861, %v865
      %v867 = vshrl.u32 %v830, 16
      %v869 = vrot.slane %v867, 4
      %v870 = vor.u32 %v869, %v865
      %v871 = vrot.slane %v870, 4
      %v873 = vshll.u32 %v831, 16
      %v875 = vrot.slane %v873, 5
      %v876 = vsel %vm249, %v871, %v875
      %v878 = vshrl.u32 %v832, 16
      %v880 = vrot.slane %v878, 4
      %v881 = vshll.u32 %v832, 16
      %v883 = vrot.slane %v881, 5
      %v884 = vor.u32 %v880, %v883
      %v885 = vrot.slane %v884, 4
      %v887 = vshll.u32 %v833, 16
      %v889 = vrot.slane %v887, 5
      %v890 = vsel %vm249, %v885, %v889
      %v891 = vshrl.u32 %v833, 16
      %v893 = vrot.slane %v891, 4
      %v894 = vor.u32 %v893, %v889
      %v895 = vrot.slane %v894, 4
      %v897 = vshll.u32 %v834, 16
      %v899 = vrot.slane %v897, 5
      %v900 = vsel %vm249, %v895, %v899
      %v902 = vshrl.u32 %v835, 16
      %v904 = vrot.slane %v902, 4
      %v905 = vshll.u32 %v835, 16
      %v907 = vrot.slane %v905, 5
      %v908 = vor.u32 %v904, %v907
      %v909 = vrot.slane %v908, 4
      %v911 = vshll.u32 %v836, 16
      %v913 = vrot.slane %v911, 5
      %v914 = vsel %vm249, %v909, %v913
      %v915 = vshrl.u32 %v836, 16
      %v917 = vrot.slane %v915, 4
      %v918 = vor.u32 %v917, %v913
      %v919 = vrot.slane %v918, 4
      %v921 = vshll.u32 %v837, 16
      %v923 = vrot.slane %v921, 5
      %v924 = vsel %vm249, %v919, %v923
      %v926 = vshrl.u32 %v838, 16
      %v928 = vrot.slane %v926, 4
      %v929 = vshll.u32 %v838, 16
      %v931 = vrot.slane %v929, 5
      %v932 = vor.u32 %v928, %v931
      %v933 = vrot.slane %v932, 4
      %v935 = vshll.u32 %v839, 16
      %v937 = vrot.slane %v935, 5
      %v938 = vsel %vm249, %v933, %v937
      %v939 = vshrl.u32 %v839, 16
      %v941 = vrot.slane %v939, 4
      %v942 = vor.u32 %v941, %v937
      %v943 = vrot.slane %v942, 4
      %v945 = vshll.u32 %v840, 16
      %v947 = vrot.slane %v945, 5
      %v948 = vsel %vm249, %v943, %v947
      %v950 = vshrl.u32 %v841, 16
      %v952 = vrot.slane %v950, 4
      %v953 = vshll.u32 %v841, 16
      %v955 = vrot.slane %v953, 5
      %v956 = vor.u32 %v952, %v955
      %v957 = vrot.slane %v956, 4
      %v959 = vshll.u32 %v842, 16
      %v961 = vrot.slane %v959, 5
      %v962 = vsel %vm249, %v957, %v961
      %v963 = vshrl.u32 %v842, 16
      %v965 = vrot.slane %v963, 4
      %v966 = vor.u32 %v965, %v961
      %v967 = vrot.slane %v966, 4
      %v969 = vshll.u32 %v843, 16
      %v971 = vrot.slane %v969, 5
      %v972 = vsel %vm249, %v967, %v971
      %v974 = vshrl.u32 %v844, 16
      %v976 = vrot.slane %v974, 4
      %v977 = vshll.u32 %v844, 16
      %v979 = vrot.slane %v977, 5
      %v980 = vor.u32 %v976, %v979
      %v981 = vrot.slane %v980, 4
      %v983 = vshll.u32 %v845, 16
      %v985 = vrot.slane %v983, 5
      %v986 = vsel %vm249, %v981, %v985
      %v987 = vshrl.u32 %v845, 16
      %v989 = vrot.slane %v987, 4
      %v990 = vor.u32 %v989, %v985
      %v991 = vrot.slane %v990, 4
      %v993 = vshll.u32 %v846, 16
      %v995 = vrot.slane %v993, 5
      %v996 = vsel %vm249, %v991, %v995
      %v998 = vshrl.u32 %v847, 16
      %v1000 = vrot.slane %v998, 4
      %v1001 = vshll.u32 %v847, 16
      %v1003 = vrot.slane %v1001, 5
      %v1004 = vor.u32 %v1000, %v1003
      %v1005 = vrot.slane %v1004, 4
      %v1007 = vshll.u32 %v848, 16
      %v1009 = vrot.slane %v1007, 5
      %v1010 = vsel %vm249, %v1005, %v1009
      %v1011 = vshrl.u32 %v848, 16
      %v1013 = vrot.slane %v1011, 4
      %v1014 = vor.u32 %v1013, %v1009
      %v1015 = vrot.slane %v1014, 4
      %v1017 = vshll.u32 %v849, 16
      %v1019 = vrot.slane %v1017, 5
      %v1020 = vsel %vm249, %v1015, %v1019
      %v1022 = vshrl.u32 %v850, 16
      %v1024 = vrot.slane %v1022, 4
      %v1025 = vshll.u32 %v850, 16
      %v1027 = vrot.slane %v1025, 5
      %v1028 = vor.u32 %v1024, %v1027
      %v1029 = vrot.slane %v1028, 4
      %v1031 = vshll.u32 %v851, 16
      %v1033 = vrot.slane %v1031, 5
      %v1034 = vsel %vm249, %v1029, %v1033
      %v1035 = vshrl.u32 %v851, 16
      %v1037 = vrot.slane %v1035, 4
      %v1038 = vor.u32 %v1037, %v1033
      %v1039 = vrot.slane %v1038, 4
      %v1041 = vshll.u32 %v852, 16
      %v1043 = vrot.slane %v1041, 5
      %v1044 = vsel %vm249, %v1039, %v1043
      %v1069 = vrot.slane %v829, 5
      %v1070 = vrot.slane %v1069, 4
      %v1071 = vrot.slane %v830, 5
      %v1072 = vsel %vm468, %v1070, %v1071
      %v1073 = vrot.slane %v1071, 4
      %v1074 = vrot.slane %v831, 5
      %v1075 = vsel %vm468, %v1073, %v1074
      %v1076 = vrot.slane %v832, 5
      %v1077 = vrot.slane %v1076, 4
      %v1078 = vrot.slane %v833, 5
      %v1079 = vsel %vm468, %v1077, %v1078
      %v1080 = vrot.slane %v1078, 4
      %v1081 = vrot.slane %v834, 5
      %v1082 = vsel %vm468, %v1080, %v1081
      %v1083 = vrot.slane %v835, 5
      %v1084 = vrot.slane %v1083, 4
      %v1085 = vrot.slane %v836, 5
      %v1086 = vsel %vm468, %v1084, %v1085
      %v1087 = vrot.slane %v1085, 4
      %v1088 = vrot.slane %v837, 5
      %v1089 = vsel %vm468, %v1087, %v1088
      %v1090 = vrot.slane %v838, 5
      %v1091 = vrot.slane %v1090, 4
      %v1092 = vrot.slane %v839, 5
      %v1093 = vsel %vm468, %v1091, %v1092
      %v1094 = vrot.slane %v1092, 4
      %v1095 = vrot.slane %v840, 5
      %v1096 = vsel %vm468, %v1094, %v1095
      %v1097 = vrot.slane %v841, 5
      %v1098 = vrot.slane %v1097, 4
      %v1099 = vrot.slane %v842, 5
      %v1100 = vsel %vm468, %v1098, %v1099
      %v1101 = vrot.slane %v1099, 4
      %v1102 = vrot.slane %v843, 5
      %v1103 = vsel %vm468, %v1101, %v1102
      %v1104 = vrot.slane %v844, 5
      %v1105 = vrot.slane %v1104, 4
      %v1106 = vrot.slane %v845, 5
      %v1107 = vsel %vm468, %v1105, %v1106
      %v1108 = vrot.slane %v1106, 4
      %v1109 = vrot.slane %v846, 5
      %v1110 = vsel %vm468, %v1108, %v1109
      %v1111 = vrot.slane %v847, 5
      %v1112 = vrot.slane %v1111, 4
      %v1113 = vrot.slane %v848, 5
      %v1114 = vsel %vm468, %v1112, %v1113
      %v1115 = vrot.slane %v1113, 4
      %v1116 = vrot.slane %v849, 5
      %v1117 = vsel %vm468, %v1115, %v1116
      %v1118 = vrot.slane %v850, 5
      %v1119 = vrot.slane %v1118, 4
      %v1120 = vrot.slane %v851, 5
      %v1121 = vsel %vm468, %v1119, %v1120
      %v1122 = vrot.slane %v1120, 4
      %v1123 = vrot.slane %v852, 5
      %v1124 = vsel %vm468, %v1122, %v1123
      %v1125 = vunpack.c.l.b16 %v223
      %v1126 = vunpack.c.l.b16 %v224
      %v1127 = vunpack.c.l.b16 %v226
      %v1128 = vunpack.c.l.b16 %v227
      %v1129 = vunpack.c.l.b16 %v229
      %v1130 = vunpack.c.l.b16 %v230
      %v1131 = vunpack.c.l.b16 %v232
      %v1132 = vunpack.c.l.b16 %v233
      %v1133 = vunpack.c.l.b16 %v235
      %v1134 = vunpack.c.l.b16 %v236
      %v1135 = vunpack.c.l.b16 %v238
      %v1136 = vunpack.c.l.b16 %v239
      %v1137 = vunpack.c.l.b16 %v241
      %v1138 = vunpack.c.l.b16 %v242
      %v1139 = vunpack.c.l.b16 %v244
      %v1140 = vunpack.c.l.b16 %v245
      %v1141 = vpack.c.b16 %v1126, %v1125
      %v1142 = vpack.c.b16 %v1128, %v1127
      %v1143 = vpack.c.b16 %v1130, %v1129
      %v1144 = vpack.c.b16 %v1132, %v1131
      %v1145 = vpack.c.b16 %v1134, %v1133
      %v1146 = vpack.c.b16 %v1136, %v1135
      %v1147 = vpack.c.b16 %v1138, %v1137
      %v1148 = vpack.c.b16 %v1140, %v1139
      %v1149 = vunpack.c.l.b16 %v263
      %v1150 = vunpack.c.l.b16 %v273
      %v1151 = vunpack.c.l.b16 %v287
      %v1152 = vunpack.c.l.b16 %v297
      %v1153 = vunpack.c.l.b16 %v311
      %v1154 = vunpack.c.l.b16 %v321
      %v1155 = vunpack.c.l.b16 %v335
      %v1156 = vunpack.c.l.b16 %v345
      %v1157 = vunpack.c.l.b16 %v359
      %v1158 = vunpack.c.l.b16 %v369
      %v1159 = vunpack.c.l.b16 %v383
      %v1160 = vunpack.c.l.b16 %v393
      %v1161 = vunpack.c.l.b16 %v407
      %v1162 = vunpack.c.l.b16 %v417
      %v1163 = vunpack.c.l.b16 %v431
      %v1164 = vunpack.c.l.b16 %v441
      %v1165 = vpack.c.b16 %v1150, %v1149
      %v1166 = vpack.c.b16 %v1152, %v1151
      %v1167 = vpack.c.b16 %v1154, %v1153
      %v1168 = vpack.c.b16 %v1156, %v1155
      %v1169 = vpack.c.b16 %v1158, %v1157
      %v1170 = vpack.c.b16 %v1160, %v1159
      %v1171 = vpack.c.b16 %v1162, %v1161
      %v1172 = vpack.c.b16 %v1164, %v1163
      %1173 = vrot.lane.b32.xlu0 %v1165, 4
      %v1174 = vpop.permute.xlu0 %1173
      %1175 = vrot.lane.b32.xlu0 %v1166, 4
      %v1176 = vpop.permute.xlu0 %1175
      %1177 = vrot.lane.b32.xlu0 %v1167, 4
      %v1178 = vpop.permute.xlu0 %1177
      %1179 = vrot.lane.b32.xlu0 %v1168, 4
      %v1180 = vpop.permute.xlu0 %1179
      %1181 = vrot.lane.b32.xlu0 %v1169, 4
      %v1182 = vpop.permute.xlu0 %1181
      %1183 = vrot.lane.b32.xlu0 %v1170, 4
      %v1184 = vpop.permute.xlu0 %1183
      %1185 = vrot.lane.b32.xlu0 %v1171, 4
      %v1186 = vpop.permute.xlu0 %1185
      %1187 = vrot.lane.b32.xlu0 %v1172, 4
      %v1188 = vpop.permute.xlu0 %1187
      %v1189 = vunpack.c.l.b16 %v472
      %v1190 = vunpack.c.l.b16 %v475
      %v1191 = vunpack.c.l.b16 %v479
      %v1192 = vunpack.c.l.b16 %v482
      %v1193 = vunpack.c.l.b16 %v486
      %v1194 = vunpack.c.l.b16 %v489
      %v1195 = vunpack.c.l.b16 %v493
      %v1196 = vunpack.c.l.b16 %v496
      %v1197 = vunpack.c.l.b16 %v500
      %v1198 = vunpack.c.l.b16 %v503
      %v1199 = vunpack.c.l.b16 %v507
      %v1200 = vunpack.c.l.b16 %v510
      %v1201 = vunpack.c.l.b16 %v514
      %v1202 = vunpack.c.l.b16 %v517
      %v1203 = vunpack.c.l.b16 %v521
      %v1204 = vunpack.c.l.b16 %v524
      %v1205 = vpack.c.b16 %v1190, %v1189
      %v1206 = vpack.c.b16 %v1192, %v1191
      %v1207 = vpack.c.b16 %v1194, %v1193
      %v1208 = vpack.c.b16 %v1196, %v1195
      %v1209 = vpack.c.b16 %v1198, %v1197
      %v1210 = vpack.c.b16 %v1200, %v1199
      %v1211 = vpack.c.b16 %v1202, %v1201
      %v1212 = vpack.c.b16 %v1204, %v1203
      %1213 = vrot.lane.b32.xlu0 %v1205, 8
      %v1214 = vpop.permute.xlu0 %1213
      %1215 = vrot.lane.b32.xlu0 %v1206, 8
      %v1216 = vpop.permute.xlu0 %1215
      %1217 = vrot.lane.b32.xlu0 %v1207, 8
      %v1218 = vpop.permute.xlu0 %1217
      %1219 = vrot.lane.b32.xlu0 %v1208, 8
      %v1220 = vpop.permute.xlu0 %1219
      %1221 = vrot.lane.b32.xlu0 %v1209, 8
      %v1222 = vpop.permute.xlu0 %1221
      %1223 = vrot.lane.b32.xlu0 %v1210, 8
      %v1224 = vpop.permute.xlu0 %1223
      %1225 = vrot.lane.b32.xlu0 %v1211, 8
      %v1226 = vpop.permute.xlu0 %1225
      %1227 = vrot.lane.b32.xlu0 %v1212, 8
      %v1228 = vpop.permute.xlu0 %1227
      %v1229 = vunpack.c.l.b16 %v529
      %v1230 = vunpack.c.l.b16 %v530
      %v1231 = vunpack.c.l.b16 %v532
      %v1232 = vunpack.c.l.b16 %v533
      %v1233 = vunpack.c.l.b16 %v535
      %v1234 = vunpack.c.l.b16 %v536
      %v1235 = vunpack.c.l.b16 %v538
      %v1236 = vunpack.c.l.b16 %v539
      %v1237 = vunpack.c.l.b16 %v541
      %v1238 = vunpack.c.l.b16 %v542
      %v1239 = vunpack.c.l.b16 %v544
      %v1240 = vunpack.c.l.b16 %v545
      %v1241 = vunpack.c.l.b16 %v547
      %v1242 = vunpack.c.l.b16 %v548
      %v1243 = vunpack.c.l.b16 %v550
      %v1244 = vunpack.c.l.b16 %v551
      %v1245 = vpack.c.b16 %v1230, %v1229
      %v1246 = vpack.c.b16 %v1232, %v1231
      %v1247 = vpack.c.b16 %v1234, %v1233
      %v1248 = vpack.c.b16 %v1236, %v1235
      %v1249 = vpack.c.b16 %v1238, %v1237
      %v1250 = vpack.c.b16 %v1240, %v1239
      %v1251 = vpack.c.b16 %v1242, %v1241
      %v1252 = vpack.c.b16 %v1244, %v1243
      %1253 = vrot.lane.b32.xlu0 %v1245, 12
      %v1254 = vpop.permute.xlu0 %1253
      %1255 = vrot.lane.b32.xlu0 %v1246, 12
      %v1256 = vpop.permute.xlu0 %1255
      %1257 = vrot.lane.b32.xlu0 %v1247, 12
      %v1258 = vpop.permute.xlu0 %1257
      %1259 = vrot.lane.b32.xlu0 %v1248, 12
      %v1260 = vpop.permute.xlu0 %1259
      %1261 = vrot.lane.b32.xlu0 %v1249, 12
      %v1262 = vpop.permute.xlu0 %1261
      %1263 = vrot.lane.b32.xlu0 %v1250, 12
      %v1264 = vpop.permute.xlu0 %1263
      %1265 = vrot.lane.b32.xlu0 %v1251, 12
      %v1266 = vpop.permute.xlu0 %1265
      %1267 = vrot.lane.b32.xlu0 %v1252, 12
      %v1268 = vpop.permute.xlu0 %1267
      %v1269 = vunpack.c.l.b16 %v566
      %v1270 = vunpack.c.l.b16 %v576
      %v1271 = vunpack.c.l.b16 %v590
      %v1272 = vunpack.c.l.b16 %v600
      %v1273 = vunpack.c.l.b16 %v614
      %v1274 = vunpack.c.l.b16 %v624
      %v1275 = vunpack.c.l.b16 %v638
      %v1276 = vunpack.c.l.b16 %v648
      %v1277 = vunpack.c.l.b16 %v662
      %v1278 = vunpack.c.l.b16 %v672
      %v1279 = vunpack.c.l.b16 %v686
      %v1280 = vunpack.c.l.b16 %v696
      %v1281 = vunpack.c.l.b16 %v710
      %v1282 = vunpack.c.l.b16 %v720
      %v1283 = vunpack.c.l.b16 %v734
      %v1284 = vunpack.c.l.b16 %v744
      %v1285 = vpack.c.b16 %v1270, %v1269
      %v1286 = vpack.c.b16 %v1272, %v1271
      %v1287 = vpack.c.b16 %v1274, %v1273
      %v1288 = vpack.c.b16 %v1276, %v1275
      %v1289 = vpack.c.b16 %v1278, %v1277
      %v1290 = vpack.c.b16 %v1280, %v1279
      %v1291 = vpack.c.b16 %v1282, %v1281
      %v1292 = vpack.c.b16 %v1284, %v1283
      %1293 = vrot.lane.b32.xlu0 %v1285, 16
      %v1294 = vpop.permute.xlu0 %1293
      %1295 = vrot.lane.b32.xlu0 %v1286, 16
      %v1296 = vpop.permute.xlu0 %1295
      %1297 = vrot.lane.b32.xlu0 %v1287, 16
      %v1298 = vpop.permute.xlu0 %1297
      %1299 = vrot.lane.b32.xlu0 %v1288, 16
      %v1300 = vpop.permute.xlu0 %1299
      %1301 = vrot.lane.b32.xlu0 %v1289, 16
      %v1302 = vpop.permute.xlu0 %1301
      %1303 = vrot.lane.b32.xlu0 %v1290, 16
      %v1304 = vpop.permute.xlu0 %1303
      %1305 = vrot.lane.b32.xlu0 %v1291, 16
      %v1306 = vpop.permute.xlu0 %1305
      %1307 = vrot.lane.b32.xlu0 %v1292, 16
      %v1308 = vpop.permute.xlu0 %1307
      %v1309 = vunpack.c.l.b16 %v772
      %v1310 = vunpack.c.l.b16 %v775
      %v1311 = vunpack.c.l.b16 %v779
      %v1312 = vunpack.c.l.b16 %v782
      %v1313 = vunpack.c.l.b16 %v786
      %v1314 = vunpack.c.l.b16 %v789
      %v1315 = vunpack.c.l.b16 %v793
      %v1316 = vunpack.c.l.b16 %v796
      %v1317 = vunpack.c.l.b16 %v800
      %v1318 = vunpack.c.l.b16 %v803
      %v1319 = vunpack.c.l.b16 %v807
      %v1320 = vunpack.c.l.b16 %v810
      %v1321 = vunpack.c.l.b16 %v814
      %v1322 = vunpack.c.l.b16 %v817
      %v1323 = vunpack.c.l.b16 %v821
      %v1324 = vunpack.c.l.b16 %v824
      %v1325 = vpack.c.b16 %v1310, %v1309
      %v1326 = vpack.c.b16 %v1312, %v1311
      %v1327 = vpack.c.b16 %v1314, %v1313
      %v1328 = vpack.c.b16 %v1316, %v1315
      %v1329 = vpack.c.b16 %v1318, %v1317
      %v1330 = vpack.c.b16 %v1320, %v1319
      %v1331 = vpack.c.b16 %v1322, %v1321
      %v1332 = vpack.c.b16 %v1324, %v1323
      %1333 = vrot.lane.b32.xlu0 %v1325, 20
      %v1334 = vpop.permute.xlu0 %1333
      %1335 = vrot.lane.b32.xlu0 %v1326, 20
      %v1336 = vpop.permute.xlu0 %1335
      %1337 = vrot.lane.b32.xlu0 %v1327, 20
      %v1338 = vpop.permute.xlu0 %1337
      %1339 = vrot.lane.b32.xlu0 %v1328, 20
      %v1340 = vpop.permute.xlu0 %1339
      %1341 = vrot.lane.b32.xlu0 %v1329, 20
      %v1342 = vpop.permute.xlu0 %1341
      %1343 = vrot.lane.b32.xlu0 %v1330, 20
      %v1344 = vpop.permute.xlu0 %1343
      %1345 = vrot.lane.b32.xlu0 %v1331, 20
      %v1346 = vpop.permute.xlu0 %1345
      %1347 = vrot.lane.b32.xlu0 %v1332, 20
      %v1348 = vpop.permute.xlu0 %1347
      %v1349 = vunpack.c.l.b16 %v829
      %v1350 = vunpack.c.l.b16 %v830
      %v1351 = vunpack.c.l.b16 %v832
      %v1352 = vunpack.c.l.b16 %v833
      %v1353 = vunpack.c.l.b16 %v835
      %v1354 = vunpack.c.l.b16 %v836
      %v1355 = vunpack.c.l.b16 %v838
      %v1356 = vunpack.c.l.b16 %v839
      %v1357 = vunpack.c.l.b16 %v841
      %v1358 = vunpack.c.l.b16 %v842
      %v1359 = vunpack.c.l.b16 %v844
      %v1360 = vunpack.c.l.b16 %v845
      %v1361 = vunpack.c.l.b16 %v847
      %v1362 = vunpack.c.l.b16 %v848
      %v1363 = vunpack.c.l.b16 %v850
      %v1364 = vunpack.c.l.b16 %v851
      %v1365 = vpack.c.b16 %v1350, %v1349
      %v1366 = vpack.c.b16 %v1352, %v1351
      %v1367 = vpack.c.b16 %v1354, %v1353
      %v1368 = vpack.c.b16 %v1356, %v1355
      %v1369 = vpack.c.b16 %v1358, %v1357
      %v1370 = vpack.c.b16 %v1360, %v1359
      %v1371 = vpack.c.b16 %v1362, %v1361
      %v1372 = vpack.c.b16 %v1364, %v1363
      %1373 = vrot.lane.b32.xlu0 %v1365, 24
      %v1374 = vpop.permute.xlu0 %1373
      %1375 = vrot.lane.b32.xlu0 %v1366, 24
      %v1376 = vpop.permute.xlu0 %1375
      %1377 = vrot.lane.b32.xlu0 %v1367, 24
      %v1378 = vpop.permute.xlu0 %1377
      %1379 = vrot.lane.b32.xlu0 %v1368, 24
      %v1380 = vpop.permute.xlu0 %1379
      %1381 = vrot.lane.b32.xlu0 %v1369, 24
      %v1382 = vpop.permute.xlu0 %1381
      %1383 = vrot.lane.b32.xlu0 %v1370, 24
      %v1384 = vpop.permute.xlu0 %1383
      %1385 = vrot.lane.b32.xlu0 %v1371, 24
      %v1386 = vpop.permute.xlu0 %1385
      %1387 = vrot.lane.b32.xlu0 %v1372, 24
      %v1388 = vpop.permute.xlu0 %1387
      %v1389 = vunpack.c.l.b16 %v866
      %v1390 = vunpack.c.l.b16 %v876
      %v1391 = vunpack.c.l.b16 %v890
      %v1392 = vunpack.c.l.b16 %v900
      %v1393 = vunpack.c.l.b16 %v914
      %v1394 = vunpack.c.l.b16 %v924
      %v1395 = vunpack.c.l.b16 %v938
      %v1396 = vunpack.c.l.b16 %v948
      %v1397 = vunpack.c.l.b16 %v962
      %v1398 = vunpack.c.l.b16 %v972
      %v1399 = vunpack.c.l.b16 %v986
      %v1400 = vunpack.c.l.b16 %v996
      %v1401 = vunpack.c.l.b16 %v1010
      %v1402 = vunpack.c.l.b16 %v1020
      %v1403 = vunpack.c.l.b16 %v1034
      %v1404 = vunpack.c.l.b16 %v1044
      %v1405 = vpack.c.b16 %v1390, %v1389
      %v1406 = vpack.c.b16 %v1392, %v1391
      %v1407 = vpack.c.b16 %v1394, %v1393
      %v1408 = vpack.c.b16 %v1396, %v1395
      %v1409 = vpack.c.b16 %v1398, %v1397
      %v1410 = vpack.c.b16 %v1400, %v1399
      %v1411 = vpack.c.b16 %v1402, %v1401
      %v1412 = vpack.c.b16 %v1404, %v1403
      %1413 = vrot.lane.b32.xlu0 %v1405, 28
      %v1414 = vpop.permute.xlu0 %1413
      %1415 = vrot.lane.b32.xlu0 %v1406, 28
      %v1416 = vpop.permute.xlu0 %1415
      %1417 = vrot.lane.b32.xlu0 %v1407, 28
      %v1418 = vpop.permute.xlu0 %1417
      %1419 = vrot.lane.b32.xlu0 %v1408, 28
      %v1420 = vpop.permute.xlu0 %1419
      %1421 = vrot.lane.b32.xlu0 %v1409, 28
      %v1422 = vpop.permute.xlu0 %1421
      %1423 = vrot.lane.b32.xlu0 %v1410, 28
      %v1424 = vpop.permute.xlu0 %1423
      %1425 = vrot.lane.b32.xlu0 %v1411, 28
      %v1426 = vpop.permute.xlu0 %1425
      %1427 = vrot.lane.b32.xlu0 %v1412, 28
      %v1428 = vpop.permute.xlu0 %1427
      %v1429 = vunpack.c.l.b16 %v1072
      %v1430 = vunpack.c.l.b16 %v1075
      %v1431 = vunpack.c.l.b16 %v1079
      %v1432 = vunpack.c.l.b16 %v1082
      %v1433 = vunpack.c.l.b16 %v1086
      %v1434 = vunpack.c.l.b16 %v1089
      %v1435 = vunpack.c.l.b16 %v1093
      %v1436 = vunpack.c.l.b16 %v1096
      %v1437 = vunpack.c.l.b16 %v1100
      %v1438 = vunpack.c.l.b16 %v1103
      %v1439 = vunpack.c.l.b16 %v1107
      %v1440 = vunpack.c.l.b16 %v1110
      %v1441 = vunpack.c.l.b16 %v1114
      %v1442 = vunpack.c.l.b16 %v1117
      %v1443 = vunpack.c.l.b16 %v1121
      %v1444 = vunpack.c.l.b16 %v1124
      %v1445 = vpack.c.b16 %v1430, %v1429
      %v1446 = vpack.c.b16 %v1432, %v1431
      %v1447 = vpack.c.b16 %v1434, %v1433
      %v1448 = vpack.c.b16 %v1436, %v1435
      %v1449 = vpack.c.b16 %v1438, %v1437
      %v1450 = vpack.c.b16 %v1440, %v1439
      %v1451 = vpack.c.b16 %v1442, %v1441
      %v1452 = vpack.c.b16 %v1444, %v1443
      %1453 = vrot.lane.b32.xlu0 %v1445, 32
      %v1454 = vpop.permute.xlu0 %1453
      %1455 = vrot.lane.b32.xlu0 %v1446, 32
      %v1456 = vpop.permute.xlu0 %1455
      %1457 = vrot.lane.b32.xlu0 %v1447, 32
      %v1458 = vpop.permute.xlu0 %1457
      %1459 = vrot.lane.b32.xlu0 %v1448, 32
      %v1460 = vpop.permute.xlu0 %1459
      %1461 = vrot.lane.b32.xlu0 %v1449, 32
      %v1462 = vpop.permute.xlu0 %1461
      %1463 = vrot.lane.b32.xlu0 %v1450, 32
      %v1464 = vpop.permute.xlu0 %1463
      %1465 = vrot.lane.b32.xlu0 %v1451, 32
      %v1466 = vpop.permute.xlu0 %1465
      %1467 = vrot.lane.b32.xlu0 %v1452, 32
      %v1468 = vpop.permute.xlu0 %1467
      %vm1469 = vcmask 31744
      %v1472 = vsel %vm1469, %v1141, %v1174
      %v1475 = vsel %vm1469, %v1142, %v1176
      %v1478 = vsel %vm1469, %v1143, %v1178
      %v1481 = vsel %vm1469, %v1144, %v1180
      %v1484 = vsel %vm1469, %v1145, %v1182
      %v1487 = vsel %vm1469, %v1146, %v1184
      %v1490 = vsel %vm1469, %v1147, %v1186
      %v1493 = vsel %vm1469, %v1148, %v1188
      %vm1494 = vcmask 64512
      %v1496 = vsel %vm1494, %v1472, %v1214
      %v1498 = vsel %vm1494, %v1475, %v1216
      %v1500 = vsel %vm1494, %v1478, %v1218
      %v1502 = vsel %vm1494, %v1481, %v1220
      %v1504 = vsel %vm1494, %v1484, %v1222
      %v1506 = vsel %vm1494, %v1487, %v1224
      %v1508 = vsel %vm1494, %v1490, %v1226
      %v1510 = vsel %vm1494, %v1493, %v1228
      %vm1511 = vcmask 97280
      %v1513 = vsel %vm1511, %v1496, %v1254
      %v1515 = vsel %vm1511, %v1498, %v1256
      %v1517 = vsel %vm1511, %v1500, %v1258
      %v1519 = vsel %vm1511, %v1502, %v1260
      %v1521 = vsel %vm1511, %v1504, %v1262
      %v1523 = vsel %vm1511, %v1506, %v1264
      %v1525 = vsel %vm1511, %v1508, %v1266
      %v1527 = vsel %vm1511, %v1510, %v1268
      %vm1528 = vcmask 130048
      %v1530 = vsel %vm1528, %v1513, %v1294
      %v1532 = vsel %vm1528, %v1515, %v1296
      %v1534 = vsel %vm1528, %v1517, %v1298
      %v1536 = vsel %vm1528, %v1519, %v1300
      %v1538 = vsel %vm1528, %v1521, %v1302
      %v1540 = vsel %vm1528, %v1523, %v1304
      %v1542 = vsel %vm1528, %v1525, %v1306
      %v1544 = vsel %vm1528, %v1527, %v1308
      %vm1545 = vcmask 162816
      %v1547 = vsel %vm1545, %v1530, %v1334
      %v1549 = vsel %vm1545, %v1532, %v1336
      %v1551 = vsel %vm1545, %v1534, %v1338
      %v1553 = vsel %vm1545, %v1536, %v1340
      %v1555 = vsel %vm1545, %v1538, %v1342
      %v1557 = vsel %vm1545, %v1540, %v1344
      %v1559 = vsel %vm1545, %v1542, %v1346
      %v1561 = vsel %vm1545, %v1544, %v1348
      %vm1562 = vcmask 195584
      %v1564 = vsel %vm1562, %v1547, %v1374
      %v1566 = vsel %vm1562, %v1549, %v1376
      %v1568 = vsel %vm1562, %v1551, %v1378
      %v1570 = vsel %vm1562, %v1553, %v1380
      %v1572 = vsel %vm1562, %v1555, %v1382
      %v1574 = vsel %vm1562, %v1557, %v1384
      %v1576 = vsel %vm1562, %v1559, %v1386
      %v1578 = vsel %vm1562, %v1561, %v1388
      %vm1579 = vcmask 228352
      %v1581 = vsel %vm1579, %v1564, %v1414
      %v1583 = vsel %vm1579, %v1566, %v1416
      %v1585 = vsel %vm1579, %v1568, %v1418
      %v1587 = vsel %vm1579, %v1570, %v1420
      %v1589 = vsel %vm1579, %v1572, %v1422
      %v1591 = vsel %vm1579, %v1574, %v1424
      %v1593 = vsel %vm1579, %v1576, %v1426
      %v1595 = vsel %vm1579, %v1578, %v1428
      %vm1596 = vcmask 261120
      %v1598 = vsel %vm1596, %v1581, %v1454
      %v1600 = vsel %vm1596, %v1583, %v1456
      %v1602 = vsel %vm1596, %v1585, %v1458
      %v1604 = vsel %vm1596, %v1587, %v1460
      %v1606 = vsel %vm1596, %v1589, %v1462
      %v1608 = vsel %vm1596, %v1591, %v1464
      %v1610 = vsel %vm1596, %v1593, %v1466
      %v1612 = vsel %vm1596, %v1595, %v1468
      %v1613 = vld [vmem:[%s1] sm:$0xf]
      %v1614 = vld [vmem:[%s1 + $0x4] sm:$0xf]
      %v1615 = vld [vmem:[%s1 + $0x8] sm:$0xf]
      %v1616 = vld [vmem:[%s1 + $0xc] sm:$0xf]
      %v1617 = vld [vmem:[%s1 + $0x10] sm:$0xf]
      %v1618 = vld [vmem:[%s1 + $0x14] sm:$0xf]
      %v1619 = vld [vmem:[%s1 + $0x18] sm:$0xf]
      %v1620 = vld [vmem:[%s1 + $0x1c] sm:$0xf]
      %v1621 = vld [vmem:[%s1 + $0x20] sm:$0xf]
      %v1622 = vld [vmem:[%s1 + $0x24] sm:$0xf]
      %v1623 = vld [vmem:[%s1 + $0x28] sm:$0xf]
      %v1624 = vld [vmem:[%s1 + $0x2c] sm:$0xf]
      %v1625 = vld [vmem:[%s1 + $0x30] sm:$0xf]
      %v1626 = vld [vmem:[%s1 + $0x34] sm:$0xf]
      %v1627 = vld [vmem:[%s1 + $0x38] sm:$0xf]
      %v1628 = vld [vmem:[%s1 + $0x3c] sm:$0xf]
      %v1645 = vunpack.c.l.b16 %v1613
      %v1646 = vunpack.c.l.b16 %v1614
      %v1647 = vunpack.c.l.b16 %v1615
      %v1648 = vunpack.c.l.b16 %v1616
      %v1649 = vunpack.c.l.b16 %v1617
      %v1650 = vunpack.c.l.b16 %v1618
      %v1651 = vunpack.c.l.b16 %v1619
      %v1652 = vunpack.c.l.b16 %v1620
      %v1653 = vunpack.c.l.b16 %v1621
      %v1654 = vunpack.c.l.b16 %v1622
      %v1655 = vunpack.c.l.b16 %v1623
      %v1656 = vunpack.c.l.b16 %v1624
      %v1657 = vunpack.c.l.b16 %v1625
      %v1658 = vunpack.c.l.b16 %v1626
      %v1659 = vunpack.c.l.b16 %v1627
      %v1660 = vunpack.c.l.b16 %v1628
      %v1661 = vpack.c.b16 %v1646, %v1645
      %v1662 = vpack.c.b16 %v1648, %v1647
      %v1663 = vpack.c.b16 %v1650, %v1649
      %v1664 = vpack.c.b16 %v1652, %v1651
      %v1665 = vpack.c.b16 %v1654, %v1653
      %v1666 = vpack.c.b16 %v1656, %v1655
      %v1667 = vpack.c.b16 %v1658, %v1657
      %v1668 = vpack.c.b16 %v1660, %v1659
      %vm1669 = vcmask 293888
      %v1671 = vsel %vm1669, %v1661, 0
      %v1674 = vsel %vm1669, %v1662, 0
      %v1677 = vsel %vm1669, %v1663, 0
      %v1680 = vsel %vm1669, %v1664, 0
      %v1683 = vsel %vm1669, %v1665, 0
      %v1686 = vsel %vm1669, %v1666, 0
      %v1689 = vsel %vm1669, %v1667, 0
      %v1692 = vsel %vm1669, %v1668, 0
      %v1694 = vsel %vm1669, %v1598, 0
      %v1696 = vsel %vm1669, %v1600, 0
      %v1698 = vsel %vm1669, %v1602, 0
      %v1700 = vsel %vm1669, %v1604, 0
      %v1702 = vsel %vm1669, %v1606, 0
      %v1704 = vsel %vm1669, %v1608, 0
      %v1706 = vsel %vm1669, %v1610, 0
      %v1708 = vsel %vm1669, %v1612, 0
      %1710 = vmatprep.subr.bf16.mxu0 0
      %1711 = vmatpush1.bf16.xpose.msra.mxu0 %v1708
      %1712 = vmatprep.subr.bf16.mxu0 0
      %1713 = vmatpush1.bf16.xpose.msra.mxu0 %v1706
      %1714 = vmatprep.subr.bf16.mxu0 0
      %1715 = vmatpush1.bf16.xpose.msra.mxu0 %v1704
      %1716 = vmatprep.subr.bf16.mxu0 0
      %1717 = vmatpush1.bf16.xpose.msra.mxu0 %v1702
      %1718 = vmatprep.subr.bf16.mxu0 0
      %1719 = vmatpush1.bf16.xpose.msra.mxu0 %v1700
      %1720 = vmatprep.subr.bf16.mxu0 0
      %1721 = vmatpush1.bf16.xpose.msra.mxu0 %v1698
      %1722 = vmatprep.subr.bf16.mxu0 0
      %1723 = vmatpush1.bf16.xpose.msra.mxu0 %v1696
      %1724 = vmatprep.subr.bf16.mxu0 0
      %1725 = vmatpush1.bf16.xpose.msra.mxu0 %v1694
      %1726 = vmatprep.subr.bf16.mxu0 0
      %1727 = vmatpush2.bf16.xpose.msra.mxu0 0
      %1728 = vmatprep.subr.bf16.mxu0 0
      %1729 = vmatpush2.bf16.xpose.msra.mxu0 0
      %1730 = vmatprep.subr.bf16.mxu0 0
      %1731 = vmatpush2.bf16.xpose.msra.mxu0 0
      %1732 = vmatprep.subr.bf16.mxu0 0
      %1733 = vmatpush2.bf16.xpose.msra.mxu0 0
      %1734 = vmatprep.subr.bf16.mxu0 0
      %1735 = vmatpush2.bf16.xpose.msra.mxu0 0
      %1736 = vmatprep.subr.bf16.mxu0 0
      %1737 = vmatpush2.bf16.xpose.msra.mxu0 0
      %1738 = vmatprep.subr.bf16.mxu0 0
      %1739 = vmatpush2.bf16.xpose.msra.mxu0 0
      %1740 = vmatprep.subr.bf16.mxu0 0
      %1741 = vmatpush2.bf16.xpose.msra.mxu0 0
      %1742 = vmatprep.mubr.bf16.mxu0 0
      %1743 = vmatmul.mubr.bf16.gmra.mxu0 %v1671
      %v1744 = vpop.f32.mrf.mxu0
      %v1745 = vadd.f32 0.0, %v1744
      %v1746 = vpop.f32.mrf.mxu0
      %v1747 = vpop.f32.mrf.mxu0
      %v1748 = vpop.f32.mrf.mxu0
      %1749 = vmatprep.mubr.bf16.mxu0 0
      %1750 = vmatmul.mubr.bf16.gmra.mxu0 %v1674
      %v1751 = vpop.f32.mrf.mxu0
      %v1752 = vpop.f32.mrf.mxu0
      %v1753 = vpop.f32.mrf.mxu0
      %v1754 = vpop.f32.mrf.mxu0
      %1755 = vmatprep.mubr.bf16.mxu0 0
      %1756 = vmatmul.mubr.bf16.gmra.mxu0 %v1677
      %v1757 = vpop.f32.mrf.mxu0
      %v1758 = vpop.f32.mrf.mxu0
      %v1759 = vpop.f32.mrf.mxu0
      %v1760 = vpop.f32.mrf.mxu0
      %1761 = vmatprep.mubr.bf16.mxu0 0
      %1762 = vmatmul.mubr.bf16.gmra.mxu0 %v1680
      %v1763 = vpop.f32.mrf.mxu0
      %v1764 = vpop.f32.mrf.mxu0
      %v1765 = vpop.f32.mrf.mxu0
      %v1766 = vpop.f32.mrf.mxu0
      %1767 = vmatprep.mubr.bf16.mxu0 0
      %1768 = vmatmul.mubr.bf16.gmra.mxu0 %v1683
      %v1769 = vpop.f32.mrf.mxu0
      %v1770 = vpop.f32.mrf.mxu0
      %v1771 = vpop.f32.mrf.mxu0
      %v1772 = vpop.f32.mrf.mxu0
      %1773 = vmatprep.mubr.bf16.mxu0 0
      %1774 = vmatmul.mubr.bf16.gmra.mxu0 %v1686
      %v1775 = vpop.f32.mrf.mxu0
      %v1776 = vpop.f32.mrf.mxu0
      %v1777 = vpop.f32.mrf.mxu0
      %v1778 = vpop.f32.mrf.mxu0
      %1779 = vmatprep.mubr.bf16.mxu0 0
      %1780 = vmatmul.mubr.bf16.gmra.mxu0 %v1689
      %v1781 = vpop.f32.mrf.mxu0
      %v1782 = vpop.f32.mrf.mxu0
      %v1783 = vpop.f32.mrf.mxu0
      %v1784 = vpop.f32.mrf.mxu0
      %1785 = vmatprep.mubr.bf16.mxu0 0
      %1786 = vmatmul.mubr.bf16.gmra.mxu0 %v1692
      %v1787 = vpop.f32.mrf.mxu0
      %v1788 = vpop.f32.mrf.mxu0
      %v1789 = vpop.f32.mrf.mxu0
      %v1790 = vpop.f32.mrf.mxu0
      %1791 = vdwg.mxu0
      %v1792 = vld [vmem:[%s2] sm:$0xff]
      %1794 = vset.pattern.permute.xlu0 0
      %1795 = vperm.xlu0 %1794, %v1792
      %v1796 = vpop.permute.xlu0 %1795
      %v1798 = vmul.f32 %v1745, %v1796
      %v1799 = vld [vmem:[%s3] sm:$0xff]
      %1801 = vset.pattern.permute.xlu0 0
      %1802 = vperm.xlu0 %1801, %v1799
      %v1803 = vpop.permute.xlu0 %1802
      %v1805 = vadd.f32 %v1798, %v1803
      %vm1806 = vcmp.ge.f32.partialorder %v1805, 0.0
      %v1807 = vmul.f32 %v1805, 0.01
      %v1808 = vsel %vm1806, %v1805, %v1807
      %1809 = vst [vmem:[%s217] sm:$0xff] %v1808
      %p1810 = scmp.lt.s32.totalorder %s19, 1
      %s1811 = scalar_select %p1810, %s19, 1
      %p1812 = scmp.lt.s32.totalorder %s20, 1
      %s1813 = scalar_select %p1812, %s20, 1
      %s1814 = smul.addr %s1811, 2
      %s1815 = sadd.s32 %s1813, %s1814
      %s1816 = smul.addr %s1815, 8
      %s1817 = scalar_lea.vmem %s4, %s1816
      // Predicated region
      $region37: #{conv_bn_relu.3} parent=35 // pred_check
        %p1818 = pneg %p136
      $region38: #{conv_bn_relu.3} parent=35 // pred_check_branch
        %1820 = sbr.rel (%p1818) target = $region40
      $region39: #{conv_bn_relu.3} parent=35 // pred_region
        _
      $region40: #{conv_bn_relu.3} parent=35 // pred_fallthru
        _
    $region36: #{conv_bn_relu.3} parent=5 // pred_fallthru
      _
    %p1821 = scmp.le.s32.totalorder 2, %s10
    // Predicated region
    $region41: #{conv_bn_relu.3} parent=5 // pred_check
      %p1822 = pneg %p1821
    $region42: #{conv_bn_relu.3} parent=5 // pred_check_branch
      %1824 = sbr.rel (%p1822) target = $region44
    $region43: #{conv_bn_relu.3} parent=5 // pred_region
      %s1825 = ssub.s32 %s10, 2
      // Predicated region
      $region45: #{conv_bn_relu.3} parent=43 // pred_check
        %p1826 = pneg %p142
      $region46: #{conv_bn_relu.3} parent=43 // pred_check_branch
        %1828 = sbr.rel (%p1826) target = $region48
      $region47: #{conv_bn_relu.3} parent=43 // pred_region
        %p1829 = scmp.lt.s32.totalorder %s21, 1
        %s1830 = scalar_select %p1829, %s21, 1
        %p1831 = scmp.lt.s32.totalorder %s22, 1
        %s1832 = scalar_select %p1831, %s22, 1
        %s1833 = smul.addr %s1830, 2
        %s1834 = sadd.s32 %s1832, %s1833
        %s1835 = smul.addr %s1834, 8
        %s1836 = scalar_lea.vmem %s4, %s1835
      $region48: #{conv_bn_relu.3} parent=43 // pred_fallthru
        _
    $region44: #{conv_bn_relu.3} parent=5 // pred_fallthru
      _
  $region6: #{conv_bn_relu.3} parent=0 // loop_footer
    %s14 = sadd.s32 1, %s10
  $region7: #{conv_bn_relu.3} parent=0 // loop_footer_branch
    %9 = sbr.rel target = $region3
  $region8: #{conv_bn_relu.3} parent=0 // loop_exit
    _

</llo_original>
